<compile_context>
chip_gen: v7x
topology: tpu7x:2x2x1
jax: 0.10.0
libtpu: 0.0.40
codegen_flags: <defaults>
</compile_context>

<pallas_src>
import jax
import jax.numpy as jnp
from jax import lax
from jax.experimental import pallas as pl
from jax.experimental.pallas import tpu as pltpu


def _bilstm_maxpool_kernel(idx_f_ref, idx_b_ref, negf_ref, negb_ref,
                           table_ref, whh_ref, out_ref,
                           h_ref, c_ref, gx_ref, pen_ref):
    """One time-block of the merged fwd/bwd LSTM recurrence + masked max-pool.

       idx_f_ref: [Tblk*Bp, 1]  token index, time-major, forward stream
       idx_b_ref: [Tblk*Bp, 1]  token index, backward stream (offset by char_size)
       negf_ref:  [Tblk, Bp, 1] mask penalty for the forward half at step t
       negb_ref:  [Tblk, Bp, 1] mask penalty for the backward half at step t
       table_ref: [C2p, 8H]     precomputed per-token input gates (+bias), fwd|bwd rows,
                                zero-padded to a multiple of 128 rows
       whh_ref:   [2H, 8H]      block-diagonal recurrent weights, gate layout [i|f|o|g]
       out_ref:   [Bp, 2H]      resident masked running max, [fwd | bwd]
       h_ref/c_ref: [Bp, 2H]    recurrent state carried across time blocks (scratch)
       gx_ref:    [Tblk,Bp,8H]  staged per-step input gates (scratch)
       pen_ref:   [Tblk,Bp,2H]  staged per-step mask penalty (scratch)"""
    Tblk, Bp, H8 = gx_ref.shape
    H2 = out_ref.shape[1]                 # 2H
    H = H2 // 2
    TB = Tblk * Bp
    C2p = table_ref.shape[0]

    @pl.when(pl.program_id(0) == 0)
    def _init():
        h_ref[...] = jnp.zeros(h_ref.shape, jnp.float32)
        c_ref[...] = jnp.zeros(c_ref.shape, jnp.float32)
        out_ref[...] = jnp.full(out_ref.shape, -1e30, jnp.float32)

    # ---- prologue (off the serial chain): gather fused input gates for BOTH
    # directions with ONE lane-dense one-hot matmul, and build the penalty slab ----
    cols = lax.broadcasted_iota(jnp.int32, (TB, C2p), 1)
    onehot = jnp.logical_or(cols == idx_f_ref[...], cols == idx_b_ref[...])
    gx = jnp.dot(onehot.astype(jnp.float32), table_ref[...],
                 precision=lax.Precision.HIGHEST,
                 preferred_element_type=jnp.float32)          # [Tblk*Bp, 8H]
    gx_ref[...] = gx.reshape(Tblk, Bp, H8)

    pen_ref[...] = jnp.concatenate(
        [jnp.broadcast_to(negf_ref[...], (Tblk, Bp, H)),
         jnp.broadcast_to(negb_ref[...], (Tblk, Bp, H))], axis=-1)

    whh = whh_ref[...]                                        # [2H, 8H]

    # Fused gate column layout (width 8H): [i_f i_b | f_f f_b | o_f o_b | g_f g_b]
    def step(t, carry):
        h = h_ref[...]
        c = c_ref[...]
        gates = gx_ref[t] + jnp.dot(h, whh,
                                    precision=lax.Precision.HIGHEST,
                                    preferred_element_type=jnp.float32)  # [Bp, 8H]
        sg = jax.nn.sigmoid(gates[:, : 3 * H2])               # i|f|o in one EUP pass
        gg = jnp.tanh(gates[:, 3 * H2:])                      # g
        i = sg[:, 0 * H2:1 * H2]
        f = sg[:, 1 * H2:2 * H2]
        o = sg[:, 2 * H2:3 * H2]
        c = f * c + i * gg
        h = o * jnp.tanh(c)
        h_ref[...] = h
        c_ref[...] = c
        out_ref[...] = jnp.maximum(out_ref[...], h - pen_ref[t])   # masked running max
        return carry

    unroll = True if Tblk <= 32 else 8
    lax.fori_loop(0, Tblk, step, 0, unroll=unroll)


def text_embedding_forward(user_text_idx, masks, params, *, time_block=64):
    """Wrapper: weight reshuffling / table precompute is cheap one-time glue; the
    recurrence + masked max-pool hot path runs in the Pallas kernel."""
    emb = params["char_emb"].astype(jnp.float32)              # [C, D]
    C, _ = emb.shape
    H = params["w_hh_f"].shape[1]                             # w_hh_f: [4H, H]
    H2, H8 = 2 * H, 8 * H
    B, T = user_text_idx.shape

    def gate_split(w):                                        # [4H, X] -> [4, H, X]
        return w.astype(jnp.float32).reshape(4, H, -1)

    wih_f, wih_b = gate_split(params["w_ih_f"]), gate_split(params["w_ih_b"])
    whh_f, whh_b = gate_split(params["w_hh_f"]), gate_split(params["w_hh_b"])
    b_f = (params["b_ih_f"] + params["b_hh_f"]).astype(jnp.float32).reshape(4, H)
    b_b = (params["b_ih_b"] + params["b_hh_b"]).astype(jnp.float32).reshape(4, H)

    # Gate order [i, f, o, g]: sigmoid gates contiguous, tanh gate last.
    GATE_ORDER = (0, 1, 3, 2)

    # Precomputed per-token input-gate tables (embedding ∘ Linear folded).
    ZCH = jnp.zeros((C, H), jnp.float32)
    tf_cols, tb_cols = [], []
    for g in GATE_ORDER:
        tf_cols += [emb @ wih_f[g].T + b_f[g], ZCH]
        tb_cols += [ZCH, emb @ wih_b[g].T + b_b[g]]
    table = jnp.concatenate(
        [jnp.concatenate(tf_cols, axis=1), jnp.concatenate(tb_cols, axis=1)], axis=0)  # [2C, 8H]
    C2 = 2 * C
    C2p = -(-C2 // 128) * 128                                  # pad contraction dim to lanes
    if C2p != C2:
        table = jnp.concatenate(
            [table, jnp.zeros((C2p - C2, H8), jnp.float32)], axis=0)

    # Block-diagonal recurrent weights mapping h = [h_f | h_b] ([B,2H]) to fused gates.
    ZHH = jnp.zeros((H, H), jnp.float32)
    whh_cols = []
    for g in GATE_ORDER:
        whh_cols += [jnp.concatenate([whh_f[g].T, ZHH], axis=0),
                     jnp.concatenate([ZHH, whh_b[g].T], axis=0)]
    whh_bd = jnp.concatenate(whh_cols, axis=1)                # [2H, 8H]

    # Pad batch to a multiple of 8 sublanes.
    Bp = max(8, -(-B // 8) * 8)
    idx = user_text_idx.astype(jnp.int32)
    m = masks.astype(jnp.float32)
    if Bp != B:
        idx = jnp.concatenate([idx, jnp.zeros((Bp - B, T), jnp.int32)], axis=0)
        m = jnp.concatenate([m, jnp.zeros((Bp - B, T), jnp.float32)], axis=0)

    # Time blocking: pad T to a multiple of Tblk. Forward stream pads at the end;
    # backward stream is the REAL sequence reversed, then padded at the end (so the
    # backward recurrence still starts at real position T-1 with zero state).
    Tblk = min(T, time_block)
    Tp = -(-T // Tblk) * Tblk
    nblk = Tp // Tblk

    idx_fwd, idx_bwd = idx, idx[:, ::-1]
    m_fwd, m_bwd = m, m[:, ::-1]
    if Tp != T:
        pad_i = jnp.zeros((Bp, Tp - T), jnp.int32)
        pad_m = jnp.zeros((Bp, Tp - T), jnp.float32)
        idx_fwd = jnp.concatenate([idx_fwd, pad_i], axis=1)
        idx_bwd = jnp.concatenate([idx_bwd, pad_i], axis=1)
        m_fwd = jnp.concatenate([m_fwd, pad_m], axis=1)
        m_bwd = jnp.concatenate([m_bwd, pad_m], axis=1)

    # Time-major flattened index streams (row t*Bp + b); backward offset by C to hit
    # the backward half of the table.  Mask penalties shipped compact ([Tp,Bp,1]).
    idx_f = idx_fwd.T.reshape(Tp * Bp, 1)
    idx_b = idx_bwd.T.reshape(Tp * Bp, 1) + C
    neg_f = ((1.0 - m_fwd) * 1e8).T.reshape(Tp, Bp, 1)
    neg_b = ((1.0 - m_bwd) * 1e8).T.reshape(Tp, Bp, 1)

    grid_spec = pltpu.PrefetchScalarGridSpec(
        num_scalar_prefetch=0,
        grid=(nblk,),
        in_specs=[
            pl.BlockSpec((Tblk * Bp, 1), lambda t: (t, 0)),
            pl.BlockSpec((Tblk * Bp, 1), lambda t: (t, 0)),
            pl.BlockSpec((Tblk, Bp, 1), lambda t: (t, 0, 0)),
            pl.BlockSpec((Tblk, Bp, 1), lambda t: (t, 0, 0)),
            pl.BlockSpec((C2p, H8), lambda t: (0, 0)),
            pl.BlockSpec((H2, H8), lambda t: (0, 0)),
        ],
        out_specs=pl.BlockSpec((Bp, H2), lambda t: (0, 0)),
        scratch_shapes=[
            pltpu.VMEM((Bp, H2), jnp.float32),        # h carry
            pltpu.VMEM((Bp, H2), jnp.float32),        # c carry
            pltpu.VMEM((Tblk, Bp, H8), jnp.float32),  # staged input gates
            pltpu.VMEM((Tblk, Bp, H2), jnp.float32),  # staged mask penalty
        ],
    )

    out = pl.pallas_call(
        _bilstm_maxpool_kernel,
        out_shape=jax.ShapeDtypeStruct((Bp, H2), jnp.float32),
        grid_spec=grid_spec,
        compiler_params=pltpu.CompilerParams(
            dimension_semantics=("arbitrary",)),      # carried h/c/out across time blocks
    )(idx_f, idx_b, neg_f, neg_b, table, whh_bd)
    return out[:B]


def _reference_forward(user_text_idx, masks, params):
    """Pure-JAX f32 reference of the PyTorch forward (no packing, zero init states)."""
    P = lax.Precision.HIGHEST
    emb = params["char_emb"].astype(jnp.float32)[user_text_idx]      # [B, T, D]
    B, T, _ = emb.shape
    H = params["w_hh_f"].shape[1]

    def run(w_ih, w_hh, b_ih, b_hh, xs):
        w_ih, w_hh = w_ih.astype(jnp.float32), w_hh.astype(jnp.float32)
        b = (b_ih + b_hh).astype(jnp.float32)

        def step(carry, x):
            h, c = carry
            g = jnp.dot(x, w_ih.T, precision=P) + jnp.dot(h, w_hh.T, precision=P) + b
            i, f, gg, o = jnp.split(g, 4, axis=-1)
            c = jax.nn.sigmoid(f) * c + jax.nn.sigmoid(i) * jnp.tanh(gg)
            h = jax.nn.sigmoid(o) * jnp.tanh(c)
            return (h, c), h

        init = (jnp.zeros((B, H), jnp.float32), jnp.zeros((B, H), jnp.float32))
        _, hs = lax.scan(step, init, jnp.swapaxes(xs, 0, 1))
        return jnp.swapaxes(hs, 0, 1)                                # [B, T, H]

    h_f = run(params["w_ih_f"], params["w_hh_f"], params["b_ih_f"], params["b_hh_f"], emb)
    h_b = run(params["w_ih_b"], params["w_hh_b"], params["b_ih_b"], params["b_hh_b"],
              emb[:, ::-1])[:, ::-1]
    out = jnp.concatenate([h_f, h_b], axis=-1)
    out = out - (1.0 - masks.astype(jnp.float32)[:, :, None]) * 1e8
    return out.max(axis=1)


def init_params(key, char_size, char_dim, hidden_dim):
    """Synthetic init mirroring the module's __init__: uniform embedding,
    orthogonal LSTM weight matrices, uniform(-1/sqrt(H), 1/sqrt(H)) biases."""
    H = hidden_dim // 2
    ks = jax.random.split(key, 10)
    ortho = jax.nn.initializers.orthogonal()
    scale = jnp.sqrt(3.0 / char_dim)
    binv = 1.0 / jnp.sqrt(H)
    return {
        "char_emb": jax.random.uniform(ks[0], (char_size, char_dim), jnp.float32, -scale, scale),
        "w_ih_f": ortho(ks[1], (4 * H, char_dim), jnp.float32),
        "w_hh_f": ortho(ks[2], (4 * H, H), jnp.float32),
        "w_ih_b": ortho(ks[3], (4 * H, char_dim), jnp.float32),
        "w_hh_b": ortho(ks[4], (4 * H, H), jnp.float32),
        "b_ih_f": jax.random.uniform(ks[5], (4 * H,), jnp.float32, -binv, binv),
        "b_hh_f": jax.random.uniform(ks[6], (4 * H,), jnp.float32, -binv, binv),
        "b_ih_b": jax.random.uniform(ks[7], (4 * H,), jnp.float32, -binv, binv),
        "b_hh_b": jax.random.uniform(ks[8], (4 * H,), jnp.float32, -binv, binv),
    }


if __name__ == "__main__":
    # batch=2, seq=8, char_size=50, char_dim=32, hidden_dim=32, lstm_layer=1
    B, T = 2, 8
    char_size, char_dim, hidden_dim = 50, 32, 32

    key = jax.random.PRNGKey(0)
    k_idx, k_params = jax.random.split(key)

    user_text_idx = jax.random.randint(k_idx, (B, T), 0, char_size, jnp.int32)
    # masks: first sequence fully valid, second padded after 5 tokens
    masks = jnp.array([[1] * T, [1] * 5 + [0] * (T - 5)], dtype=jnp.float32)

    params = init_params(k_params, char_size, char_dim, hidden_dim)

    out = text_embedding_forward(user_text_idx, masks, params)
    out = jax.block_until_ready(out)
    assert out.shape == (B, hidden_dim), out.shape

    ref = _reference_forward(user_text_idx, masks, params)
    err = float(jnp.max(jnp.abs(out - ref)))
    assert err < 2e-4, f"mismatch vs reference: {err}"

    print("KERNEL_OK")
</pallas_src>

<mosaic_0001>
module attributes {stable_mosaic.version = 11 : i64} {
  func.func @_bilstm_maxpool_kernel(%arg0: i32, %arg1: memref<64x1xi32, #tpu.memory_space<vmem>>, %arg2: memref<64x1xi32, #tpu.memory_space<vmem>>, %arg3: memref<8x8x1xf32, #tpu.memory_space<vmem>>, %arg4: memref<8x8x1xf32, #tpu.memory_space<vmem>>, %arg5: memref<128x128xf32, #tpu.memory_space<vmem>>, %arg6: memref<32x128xf32, #tpu.memory_space<vmem>>, %arg7: memref<8x32xf32, #tpu.memory_space<vmem>>, %arg8: memref<8x32xf32, #tpu.memory_space<vmem>>, %arg9: memref<8x32xf32, #tpu.memory_space<vmem>>, %arg10: memref<8x8x128xf32, #tpu.memory_space<vmem>>, %arg11: memref<8x8x32xf32, #tpu.memory_space<vmem>>) attributes {dimension_semantics = [#tpu.dimension_semantics<arbitrary>], iteration_bounds = array<i64: 1>, scalar_prefetch = 0 : i64, scratch_operands = 4 : i64, tpu.core_type = #tpu.core_type<tc>, window_params = [{transform_indices = @transform_0, window_bounds = array<i64: 64, 1>}, {transform_indices = @transform_1, window_bounds = array<i64: 64, 1>}, {transform_indices = @transform_2, window_bounds = array<i64: 8, 8, 1>}, {transform_indices = @transform_3, window_bounds = array<i64: 8, 8, 1>}, {pipeline_mode = #tpu.pipeline_mode<synchronous>, transform_indices = @transform_4, window_bounds = array<i64: 128, 128>}, {pipeline_mode = #tpu.pipeline_mode<synchronous>, transform_indices = @transform_5, window_bounds = array<i64: 32, 128>}, {pipeline_mode = #tpu.pipeline_mode<synchronous>, transform_indices = @transform_6, window_bounds = array<i64: 8, 32>}]} {
    %c0_i32 = arith.constant 0 : i32
    %0 = arith.cmpi eq, %arg0, %c0_i32 : i32
    %1 = arith.extui %0 : i1 to i32
    %c0_i32_0 = arith.constant 0 : i32
    %2 = arith.cmpi ne, %1, %c0_i32_0 : i32
    scf.if %2 {
      %cst_165 = arith.constant 0.000000e+00 : f32
      %282 = vector.broadcast %cst_165 : f32 to vector<8x32xf32>
      %c0_166 = arith.constant 0 : index
      %c0_167 = arith.constant 0 : index
      %283 = vector.load %arg8[%c0_166, %c0_167] : memref<8x32xf32, #tpu.memory_space<vmem>>, vector<8x32xf32>
      tpu.vector_store %arg8[%c0_166, %c0_167], %282 {strides = array<i32>} : memref<8x32xf32, #tpu.memory_space<vmem>>, vector<8x32xf32>,
      %cst_168 = arith.constant 0.000000e+00 : f32
      %284 = vector.broadcast %cst_168 : f32 to vector<8x32xf32>
      %c0_169 = arith.constant 0 : index
      %c0_170 = arith.constant 0 : index
      %285 = vector.load %arg9[%c0_169, %c0_170] : memref<8x32xf32, #tpu.memory_space<vmem>>, vector<8x32xf32>
      tpu.vector_store %arg9[%c0_169, %c0_170], %284 {strides = array<i32>} : memref<8x32xf32, #tpu.memory_space<vmem>>, vector<8x32xf32>,
      %cst_171 = arith.constant -1.000000e+30 : f32
      %286 = vector.broadcast %cst_171 : f32 to vector<8x32xf32>
      %c0_172 = arith.constant 0 : index
      %c0_173 = arith.constant 0 : index
      %287 = vector.load %arg7[%c0_172, %c0_173] : memref<8x32xf32, #tpu.memory_space<vmem>>, vector<8x32xf32>
      tpu.vector_store %arg7[%c0_172, %c0_173], %286 {strides = array<i32>} : memref<8x32xf32, #tpu.memory_space<vmem>>, vector<8x32xf32>,
    } else {
    }
    %3 = tpu.iota {dimensions = array<i32: 1>} : vector<64x128xi32>
    %c0 = arith.constant 0 : index
    %c0_1 = arith.constant 0 : index
    %4 = vector.load %arg1[%c0, %c0_1] : memref<64x1xi32, #tpu.memory_space<vmem>>, vector<64x1xi32>
    %5 = vector.broadcast %4 : vector<64x1xi32> to vector<64x128xi32>
    %6 = arith.cmpi eq, %3, %5 : vector<64x128xi32>
    %c0_2 = arith.constant 0 : index
    %c0_3 = arith.constant 0 : index
    %7 = vector.load %arg2[%c0_2, %c0_3] : memref<64x1xi32, #tpu.memory_space<vmem>>, vector<64x1xi32>
    %8 = vector.broadcast %7 : vector<64x1xi32> to vector<64x128xi32>
    %9 = arith.cmpi eq, %3, %8 : vector<64x128xi32>
    %10 = arith.ori %6, %9 : vector<64x128xi1>
    %11 = arith.extui %10 : vector<64x128xi1> to vector<64x128xi32>
    %12 = arith.sitofp %11 : vector<64x128xi32> to vector<64x128xf32>
    %c0_4 = arith.constant 0 : index
    %c0_5 = arith.constant 0 : index
    %13 = vector.load %arg5[%c0_4, %c0_5] : memref<128x128xf32, #tpu.memory_space<vmem>>, vector<128x128xf32>
    %cst = arith.constant dense<0.000000e+00> : vector<64x128xf32>
    %14 = tpu.matmul %12, %13, %cst {dimension_numbers = #tpu.dot_dimension_numbers<[1], [0], [0], [1], [0, 0, 1, 1], [], []>, precision = #tpu.contract_precision<fp32>} : vector<64x128xf32>, vector<128x128xf32>, vector<64x128xf32> -> vector<64x128xf32>
    %15 = vector.shape_cast %14 : vector<64x128xf32> to vector<8x8x128xf32>
    %c0_6 = arith.constant 0 : index
    %c0_7 = arith.constant 0 : index
    %c0_8 = arith.constant 0 : index
    %16 = vector.load %arg10[%c0_6, %c0_7, %c0_8] : memref<8x8x128xf32, #tpu.memory_space<vmem>>, vector<8x8x128xf32>
    tpu.vector_store %arg10[%c0_6, %c0_7, %c0_8], %15 {strides = array<i32>} : memref<8x8x128xf32, #tpu.memory_space<vmem>>, vector<8x8x128xf32>,
    %c0_9 = arith.constant 0 : index
    %c0_10 = arith.constant 0 : index
    %c0_11 = arith.constant 0 : index
    %17 = vector.load %arg3[%c0_9, %c0_10, %c0_11] : memref<8x8x1xf32, #tpu.memory_space<vmem>>, vector<8x8x1xf32>
    %18 = vector.shape_cast %17 : vector<8x8x1xf32> to vector<8x8x1xf32>
    %19 = vector.broadcast %18 : vector<8x8x1xf32> to vector<8x8x16xf32>
    %c0_12 = arith.constant 0 : index
    %c0_13 = arith.constant 0 : index
    %c0_14 = arith.constant 0 : index
    %20 = vector.load %arg4[%c0_12, %c0_13, %c0_14] : memref<8x8x1xf32, #tpu.memory_space<vmem>>, vector<8x8x1xf32>
    %21 = vector.shape_cast %20 : vector<8x8x1xf32> to vector<8x8x1xf32>
    %22 = vector.broadcast %21 : vector<8x8x1xf32> to vector<8x8x16xf32>
    %23 = tpu.concatenate %19, %22 in 2 : vector<8x8x16xf32>, vector<8x8x16xf32> -> vector<8x8x32xf32>
    %c0_15 = arith.constant 0 : index
    %c0_16 = arith.constant 0 : index
    %c0_17 = arith.constant 0 : index
    %24 = vector.load %arg11[%c0_15, %c0_16, %c0_17] : memref<8x8x32xf32, #tpu.memory_space<vmem>>, vector<8x8x32xf32>
    tpu.vector_store %arg11[%c0_15, %c0_16, %c0_17], %23 {strides = array<i32>} : memref<8x8x32xf32, #tpu.memory_space<vmem>>, vector<8x8x32xf32>,
    %c0_18 = arith.constant 0 : index
    %c0_19 = arith.constant 0 : index
    %25 = vector.load %arg6[%c0_18, %c0_19] : memref<32x128xf32, #tpu.memory_space<vmem>>, vector<32x128xf32>
    %c0_i32_20 = arith.constant 0 : i32
    %c0_21 = arith.constant 0 : index
    %c0_22 = arith.constant 0 : index
    %26 = vector.load %arg8[%c0_21, %c0_22] : memref<8x32xf32, #tpu.memory_space<vmem>>, vector<8x32xf32>
    %c0_23 = arith.constant 0 : index
    %c0_24 = arith.constant 0 : index
    %27 = vector.load %arg9[%c0_23, %c0_24] : memref<8x32xf32, #tpu.memory_space<vmem>>, vector<8x32xf32>
    %28 = arith.index_cast %c0_i32_20 : i32 to index
    %c0_25 = arith.constant 0 : index
    %c0_26 = arith.constant 0 : index
    %29 = vector.load %arg10[%28, %c0_25, %c0_26] : memref<8x8x128xf32, #tpu.memory_space<vmem>>, vector<1x8x128xf32>
    %30 = vector.shape_cast %29 : vector<1x8x128xf32> to vector<8x128xf32>
    %cst_27 = arith.constant dense<0.000000e+00> : vector<8x128xf32>
    %31 = tpu.matmul %26, %25, %cst_27 {dimension_numbers = #tpu.dot_dimension_numbers<[1], [0], [0], [1], [0, 0, 1, 1], [], []>, precision = #tpu.contract_precision<fp32>} : vector<8x32xf32>, vector<32x128xf32>, vector<8x128xf32> -> vector<8x128xf32>
    %32 = arith.addf %30, %31 : vector<8x128xf32>
    %33 = vector.extract_strided_slice %32 {offsets = [0, 0], sizes = [8, 96], strides = [1, 1]} : vector<8x128xf32> to vector<8x96xf32>
    %34 = arith.negf %33 : vector<8x96xf32>
    %35 = math.exp %34 : vector<8x96xf32>
    %cst_28 = arith.constant 1.000000e+00 : f32
    %36 = vector.broadcast %cst_28 : f32 to vector<8x96xf32>
    %37 = arith.addf %36, %35 : vector<8x96xf32>
    %38 = arith.divf %36, %37 : vector<8x96xf32>
    %39 = vector.extract_strided_slice %32 {offsets = [0, 96], sizes = [8, 32], strides = [1, 1]} : vector<8x128xf32> to vector<8x32xf32>
    %40 = math.tanh %39 : vector<8x32xf32>
    %41 = vector.extract_strided_slice %38 {offsets = [0, 0], sizes = [8, 32], strides = [1, 1]} : vector<8x96xf32> to vector<8x32xf32>
    %42 = vector.extract_strided_slice %38 {offsets = [0, 32], sizes = [8, 32], strides = [1, 1]} : vector<8x96xf32> to vector<8x32xf32>
    %43 = vector.extract_strided_slice %38 {offsets = [0, 64], sizes = [8, 32], strides = [1, 1]} : vector<8x96xf32> to vector<8x32xf32>
    %44 = arith.mulf %42, %27 : vector<8x32xf32>
    %45 = arith.mulf %41, %40 : vector<8x32xf32>
    %46 = arith.addf %44, %45 : vector<8x32xf32>
    %47 = math.tanh %46 : vector<8x32xf32>
    %48 = arith.mulf %43, %47 : vector<8x32xf32>
    %c0_29 = arith.constant 0 : index
    %c0_30 = arith.constant 0 : index
    %49 = vector.load %arg8[%c0_29, %c0_30] : memref<8x32xf32, #tpu.memory_space<vmem>>, vector<8x32xf32>
    tpu.vector_store %arg8[%c0_29, %c0_30], %48 {strides = array<i32>} : memref<8x32xf32, #tpu.memory_space<vmem>>, vector<8x32xf32>,
    %c0_31 = arith.constant 0 : index
    %c0_32 = arith.constant 0 : index
    %50 = vector.load %arg9[%c0_31, %c0_32] : memref<8x32xf32, #tpu.memory_space<vmem>>, vector<8x32xf32>
    tpu.vector_store %arg9[%c0_31, %c0_32], %46 {strides = array<i32>} : memref<8x32xf32, #tpu.memory_space<vmem>>, vector<8x32xf32>,
    %c0_33 = arith.constant 0 : index
    %c0_34 = arith.constant 0 : index
    %51 = vector.load %arg7[%c0_33, %c0_34] : memref<8x32xf32, #tpu.memory_space<vmem>>, vector<8x32xf32>
    %52 = arith.index_cast %c0_i32_20 : i32 to index
    %c0_35 = arith.constant 0 : index
    %c0_36 = arith.constant 0 : index
    %53 = vector.load %arg11[%52, %c0_35, %c0_36] : memref<8x8x32xf32, #tpu.memory_space<vmem>>, vector<1x8x32xf32>
    %54 = vector.shape_cast %53 : vector<1x8x32xf32> to vector<8x32xf32>
    %55 = arith.subf %48, %54 : vector<8x32xf32>
    %56 = arith.maximumf %51, %55 : vector<8x32xf32>
    %c0_37 = arith.constant 0 : index
    %c0_38 = arith.constant 0 : index
    %57 = vector.load %arg7[%c0_37, %c0_38] : memref<8x32xf32, #tpu.memory_space<vmem>>, vector<8x32xf32>
    tpu.vector_store %arg7[%c0_37, %c0_38], %56 {strides = array<i32>} : memref<8x32xf32, #tpu.memory_space<vmem>>, vector<8x32xf32>,
    %c1_i32 = arith.constant 1 : i32
    %c0_39 = arith.constant 0 : index
    %c0_40 = arith.constant 0 : index
    %58 = vector.load %arg8[%c0_39, %c0_40] : memref<8x32xf32, #tpu.memory_space<vmem>>, vector<8x32xf32>
    %c0_41 = arith.constant 0 : index
    %c0_42 = arith.constant 0 : index
    %59 = vector.load %arg9[%c0_41, %c0_42] : memref<8x32xf32, #tpu.memory_space<vmem>>, vector<8x32xf32>
    %60 = arith.index_cast %c1_i32 : i32 to index
    %c0_43 = arith.constant 0 : index
    %c0_44 = arith.constant 0 : index
    %61 = vector.load %arg10[%60, %c0_43, %c0_44] : memref<8x8x128xf32, #tpu.memory_space<vmem>>, vector<1x8x128xf32>
    %62 = vector.shape_cast %61 : vector<1x8x128xf32> to vector<8x128xf32>
    %cst_45 = arith.constant dense<0.000000e+00> : vector<8x128xf32>
    %63 = tpu.matmul %58, %25, %cst_45 {dimension_numbers = #tpu.dot_dimension_numbers<[1], [0], [0], [1], [0, 0, 1, 1], [], []>, precision = #tpu.contract_precision<fp32>} : vector<8x32xf32>, vector<32x128xf32>, vector<8x128xf32> -> vector<8x128xf32>
    %64 = arith.addf %62, %63 : vector<8x128xf32>
    %65 = vector.extract_strided_slice %64 {offsets = [0, 0], sizes = [8, 96], strides = [1, 1]} : vector<8x128xf32> to vector<8x96xf32>
    %66 = arith.negf %65 : vector<8x96xf32>
    %67 = math.exp %66 : vector<8x96xf32>
    %cst_46 = arith.constant 1.000000e+00 : f32
    %68 = vector.broadcast %cst_46 : f32 to vector<8x96xf32>
    %69 = arith.addf %68, %67 : vector<8x96xf32>
    %70 = arith.divf %68, %69 : vector<8x96xf32>
    %71 = vector.extract_strided_slice %64 {offsets = [0, 96], sizes = [8, 32], strides = [1, 1]} : vector<8x128xf32> to vector<8x32xf32>
    %72 = math.tanh %71 : vector<8x32xf32>
    %73 = vector.extract_strided_slice %70 {offsets = [0, 0], sizes = [8, 32], strides = [1, 1]} : vector<8x96xf32> to vector<8x32xf32>
    %74 = vector.extract_strided_slice %70 {offsets = [0, 32], sizes = [8, 32], strides = [1, 1]} : vector<8x96xf32> to vector<8x32xf32>
    %75 = vector.extract_strided_slice %70 {offsets = [0, 64], sizes = [8, 32], strides = [1, 1]} : vector<8x96xf32> to vector<8x32xf32>
    %76 = arith.mulf %74, %59 : vector<8x32xf32>
    %77 = arith.mulf %73, %72 : vector<8x32xf32>
    %78 = arith.addf %76, %77 : vector<8x32xf32>
    %79 = math.tanh %78 : vector<8x32xf32>
    %80 = arith.mulf %75, %79 : vector<8x32xf32>
    %c0_47 = arith.constant 0 : index
    %c0_48 = arith.constant 0 : index
    %81 = vector.load %arg8[%c0_47, %c0_48] : memref<8x32xf32, #tpu.memory_space<vmem>>, vector<8x32xf32>
    tpu.vector_store %arg8[%c0_47, %c0_48], %80 {strides = array<i32>} : memref<8x32xf32, #tpu.memory_space<vmem>>, vector<8x32xf32>,
    %c0_49 = arith.constant 0 : index
    %c0_50 = arith.constant 0 : index
    %82 = vector.load %arg9[%c0_49, %c0_50] : memref<8x32xf32, #tpu.memory_space<vmem>>, vector<8x32xf32>
    tpu.vector_store %arg9[%c0_49, %c0_50], %78 {strides = array<i32>} : memref<8x32xf32, #tpu.memory_space<vmem>>, vector<8x32xf32>,
    %c0_51 = arith.constant 0 : index
    %c0_52 = arith.constant 0 : index
    %83 = vector.load %arg7[%c0_51, %c0_52] : memref<8x32xf32, #tpu.memory_space<vmem>>, vector<8x32xf32>
    %84 = arith.index_cast %c1_i32 : i32 to index
    %c0_53 = arith.constant 0 : index
    %c0_54 = arith.constant 0 : index
    %85 = vector.load %arg11[%84, %c0_53, %c0_54] : memref<8x8x32xf32, #tpu.memory_space<vmem>>, vector<1x8x32xf32>
    %86 = vector.shape_cast %85 : vector<1x8x32xf32> to vector<8x32xf32>
    %87 = arith.subf %80, %86 : vector<8x32xf32>
    %88 = arith.maximumf %83, %87 : vector<8x32xf32>
    %c0_55 = arith.constant 0 : index
    %c0_56 = arith.constant 0 : index
    %89 = vector.load %arg7[%c0_55, %c0_56] : memref<8x32xf32, #tpu.memory_space<vmem>>, vector<8x32xf32>
    tpu.vector_store %arg7[%c0_55, %c0_56], %88 {strides = array<i32>} : memref<8x32xf32, #tpu.memory_space<vmem>>, vector<8x32xf32>,
    %c2_i32 = arith.constant 2 : i32
    %c0_57 = arith.constant 0 : index
    %c0_58 = arith.constant 0 : index
    %90 = vector.load %arg8[%c0_57, %c0_58] : memref<8x32xf32, #tpu.memory_space<vmem>>, vector<8x32xf32>
    %c0_59 = arith.constant 0 : index
    %c0_60 = arith.constant 0 : index
    %91 = vector.load %arg9[%c0_59, %c0_60] : memref<8x32xf32, #tpu.memory_space<vmem>>, vector<8x32xf32>
    %92 = arith.index_cast %c2_i32 : i32 to index
    %c0_61 = arith.constant 0 : index
    %c0_62 = arith.constant 0 : index
    %93 = vector.load %arg10[%92, %c0_61, %c0_62] : memref<8x8x128xf32, #tpu.memory_space<vmem>>, vector<1x8x128xf32>
    %94 = vector.shape_cast %93 : vector<1x8x128xf32> to vector<8x128xf32>
    %cst_63 = arith.constant dense<0.000000e+00> : vector<8x128xf32>
    %95 = tpu.matmul %90, %25, %cst_63 {dimension_numbers = #tpu.dot_dimension_numbers<[1], [0], [0], [1], [0, 0, 1, 1], [], []>, precision = #tpu.contract_precision<fp32>} : vector<8x32xf32>, vector<32x128xf32>, vector<8x128xf32> -> vector<8x128xf32>
    %96 = arith.addf %94, %95 : vector<8x128xf32>
    %97 = vector.extract_strided_slice %96 {offsets = [0, 0], sizes = [8, 96], strides = [1, 1]} : vector<8x128xf32> to vector<8x96xf32>
    %98 = arith.negf %97 : vector<8x96xf32>
    %99 = math.exp %98 : vector<8x96xf32>
    %cst_64 = arith.constant 1.000000e+00 : f32
    %100 = vector.broadcast %cst_64 : f32 to vector<8x96xf32>
    %101 = arith.addf %100, %99 : vector<8x96xf32>
    %102 = arith.divf %100, %101 : vector<8x96xf32>
    %103 = vector.extract_strided_slice %96 {offsets = [0, 96], sizes = [8, 32], strides = [1, 1]} : vector<8x128xf32> to vector<8x32xf32>
    %104 = math.tanh %103 : vector<8x32xf32>
    %105 = vector.extract_strided_slice %102 {offsets = [0, 0], sizes = [8, 32], strides = [1, 1]} : vector<8x96xf32> to vector<8x32xf32>
    %106 = vector.extract_strided_slice %102 {offsets = [0, 32], sizes = [8, 32], strides = [1, 1]} : vector<8x96xf32> to vector<8x32xf32>
    %107 = vector.extract_strided_slice %102 {offsets = [0, 64], sizes = [8, 32], strides = [1, 1]} : vector<8x96xf32> to vector<8x32xf32>
    %108 = arith.mulf %106, %91 : vector<8x32xf32>
    %109 = arith.mulf %105, %104 : vector<8x32xf32>
    %110 = arith.addf %108, %109 : vector<8x32xf32>
    %111 = math.tanh %110 : vector<8x32xf32>
    %112 = arith.mulf %107, %111 : vector<8x32xf32>
    %c0_65 = arith.constant 0 : index
    %c0_66 = arith.constant 0 : index
    %113 = vector.load %arg8[%c0_65, %c0_66] : memref<8x32xf32, #tpu.memory_space<vmem>>, vector<8x32xf32>
    tpu.vector_store %arg8[%c0_65, %c0_66], %112 {strides = array<i32>} : memref<8x32xf32, #tpu.memory_space<vmem>>, vector<8x32xf32>,
    %c0_67 = arith.constant 0 : index
    %c0_68 = arith.constant 0 : index
    %114 = vector.load %arg9[%c0_67, %c0_68] : memref<8x32xf32, #tpu.memory_space<vmem>>, vector<8x32xf32>
    tpu.vector_store %arg9[%c0_67, %c0_68], %110 {strides = array<i32>} : memref<8x32xf32, #tpu.memory_space<vmem>>, vector<8x32xf32>,
    %c0_69 = arith.constant 0 : index
    %c0_70 = arith.constant 0 : index
    %115 = vector.load %arg7[%c0_69, %c0_70] : memref<8x32xf32, #tpu.memory_space<vmem>>, vector<8x32xf32>
    %116 = arith.index_cast %c2_i32 : i32 to index
    %c0_71 = arith.constant 0 : index
    %c0_72 = arith.constant 0 : index
    %117 = vector.load %arg11[%116, %c0_71, %c0_72] : memref<8x8x32xf32, #tpu.memory_space<vmem>>, vector<1x8x32xf32>
    %118 = vector.shape_cast %117 : vector<1x8x32xf32> to vector<8x32xf32>
    %119 = arith.subf %112, %118 : vector<8x32xf32>
    %120 = arith.maximumf %115, %119 : vector<8x32xf32>
    %c0_73 = arith.constant 0 : index
    %c0_74 = arith.constant 0 : index
    %121 = vector.load %arg7[%c0_73, %c0_74] : memref<8x32xf32, #tpu.memory_space<vmem>>, vector<8x32xf32>
    tpu.vector_store %arg7[%c0_73, %c0_74], %120 {strides = array<i32>} : memref<8x32xf32, #tpu.memory_space<vmem>>, vector<8x32xf32>,
    %c3_i32 = arith.constant 3 : i32
    %c0_75 = arith.constant 0 : index
    %c0_76 = arith.constant 0 : index
    %122 = vector.load %arg8[%c0_75, %c0_76] : memref<8x32xf32, #tpu.memory_space<vmem>>, vector<8x32xf32>
    %c0_77 = arith.constant 0 : index
    %c0_78 = arith.constant 0 : index
    %123 = vector.load %arg9[%c0_77, %c0_78] : memref<8x32xf32, #tpu.memory_space<vmem>>, vector<8x32xf32>
    %124 = arith.index_cast %c3_i32 : i32 to index
    %c0_79 = arith.constant 0 : index
    %c0_80 = arith.constant 0 : index
    %125 = vector.load %arg10[%124, %c0_79, %c0_80] : memref<8x8x128xf32, #tpu.memory_space<vmem>>, vector<1x8x128xf32>
    %126 = vector.shape_cast %125 : vector<1x8x128xf32> to vector<8x128xf32>
    %cst_81 = arith.constant dense<0.000000e+00> : vector<8x128xf32>
    %127 = tpu.matmul %122, %25, %cst_81 {dimension_numbers = #tpu.dot_dimension_numbers<[1], [0], [0], [1], [0, 0, 1, 1], [], []>, precision = #tpu.contract_precision<fp32>} : vector<8x32xf32>, vector<32x128xf32>, vector<8x128xf32> -> vector<8x128xf32>
    %128 = arith.addf %126, %127 : vector<8x128xf32>
    %129 = vector.extract_strided_slice %128 {offsets = [0, 0], sizes = [8, 96], strides = [1, 1]} : vector<8x128xf32> to vector<8x96xf32>
    %130 = arith.negf %129 : vector<8x96xf32>
    %131 = math.exp %130 : vector<8x96xf32>
    %cst_82 = arith.constant 1.000000e+00 : f32
    %132 = vector.broadcast %cst_82 : f32 to vector<8x96xf32>
    %133 = arith.addf %132, %131 : vector<8x96xf32>
    %134 = arith.divf %132, %133 : vector<8x96xf32>
    %135 = vector.extract_strided_slice %128 {offsets = [0, 96], sizes = [8, 32], strides = [1, 1]} : vector<8x128xf32> to vector<8x32xf32>
    %136 = math.tanh %135 : vector<8x32xf32>
    %137 = vector.extract_strided_slice %134 {offsets = [0, 0], sizes = [8, 32], strides = [1, 1]} : vector<8x96xf32> to vector<8x32xf32>
    %138 = vector.extract_strided_slice %134 {offsets = [0, 32], sizes = [8, 32], strides = [1, 1]} : vector<8x96xf32> to vector<8x32xf32>
    %139 = vector.extract_strided_slice %134 {offsets = [0, 64], sizes = [8, 32], strides = [1, 1]} : vector<8x96xf32> to vector<8x32xf32>
    %140 = arith.mulf %138, %123 : vector<8x32xf32>
    %141 = arith.mulf %137, %136 : vector<8x32xf32>
    %142 = arith.addf %140, %141 : vector<8x32xf32>
    %143 = math.tanh %142 : vector<8x32xf32>
    %144 = arith.mulf %139, %143 : vector<8x32xf32>
    %c0_83 = arith.constant 0 : index
    %c0_84 = arith.constant 0 : index
    %145 = vector.load %arg8[%c0_83, %c0_84] : memref<8x32xf32, #tpu.memory_space<vmem>>, vector<8x32xf32>
    tpu.vector_store %arg8[%c0_83, %c0_84], %144 {strides = array<i32>} : memref<8x32xf32, #tpu.memory_space<vmem>>, vector<8x32xf32>,
    %c0_85 = arith.constant 0 : index
    %c0_86 = arith.constant 0 : index
    %146 = vector.load %arg9[%c0_85, %c0_86] : memref<8x32xf32, #tpu.memory_space<vmem>>, vector<8x32xf32>
    tpu.vector_store %arg9[%c0_85, %c0_86], %142 {strides = array<i32>} : memref<8x32xf32, #tpu.memory_space<vmem>>, vector<8x32xf32>,
    %c0_87 = arith.constant 0 : index
    %c0_88 = arith.constant 0 : index
    %147 = vector.load %arg7[%c0_87, %c0_88] : memref<8x32xf32, #tpu.memory_space<vmem>>, vector<8x32xf32>
    %148 = arith.index_cast %c3_i32 : i32 to index
    %c0_89 = arith.constant 0 : index
    %c0_90 = arith.constant 0 : index
    %149 = vector.load %arg11[%148, %c0_89, %c0_90] : memref<8x8x32xf32, #tpu.memory_space<vmem>>, vector<1x8x32xf32>
    %150 = vector.shape_cast %149 : vector<1x8x32xf32> to vector<8x32xf32>
    %151 = arith.subf %144, %150 : vector<8x32xf32>
    %152 = arith.maximumf %147, %151 : vector<8x32xf32>
    %c0_91 = arith.constant 0 : index
    %c0_92 = arith.constant 0 : index
    %153 = vector.load %arg7[%c0_91, %c0_92] : memref<8x32xf32, #tpu.memory_space<vmem>>, vector<8x32xf32>
    tpu.vector_store %arg7[%c0_91, %c0_92], %152 {strides = array<i32>} : memref<8x32xf32, #tpu.memory_space<vmem>>, vector<8x32xf32>,
    %c4_i32 = arith.constant 4 : i32
    %c0_93 = arith.constant 0 : index
    %c0_94 = arith.constant 0 : index
    %154 = vector.load %arg8[%c0_93, %c0_94] : memref<8x32xf32, #tpu.memory_space<vmem>>, vector<8x32xf32>
    %c0_95 = arith.constant 0 : index
    %c0_96 = arith.constant 0 : index
    %155 = vector.load %arg9[%c0_95, %c0_96] : memref<8x32xf32, #tpu.memory_space<vmem>>, vector<8x32xf32>
    %156 = arith.index_cast %c4_i32 : i32 to index
    %c0_97 = arith.constant 0 : index
    %c0_98 = arith.constant 0 : index
    %157 = vector.load %arg10[%156, %c0_97, %c0_98] : memref<8x8x128xf32, #tpu.memory_space<vmem>>, vector<1x8x128xf32>
    %158 = vector.shape_cast %157 : vector<1x8x128xf32> to vector<8x128xf32>
    %cst_99 = arith.constant dense<0.000000e+00> : vector<8x128xf32>
    %159 = tpu.matmul %154, %25, %cst_99 {dimension_numbers = #tpu.dot_dimension_numbers<[1], [0], [0], [1], [0, 0, 1, 1], [], []>, precision = #tpu.contract_precision<fp32>} : vector<8x32xf32>, vector<32x128xf32>, vector<8x128xf32> -> vector<8x128xf32>
    %160 = arith.addf %158, %159 : vector<8x128xf32>
    %161 = vector.extract_strided_slice %160 {offsets = [0, 0], sizes = [8, 96], strides = [1, 1]} : vector<8x128xf32> to vector<8x96xf32>
    %162 = arith.negf %161 : vector<8x96xf32>
    %163 = math.exp %162 : vector<8x96xf32>
    %cst_100 = arith.constant 1.000000e+00 : f32
    %164 = vector.broadcast %cst_100 : f32 to vector<8x96xf32>
    %165 = arith.addf %164, %163 : vector<8x96xf32>
    %166 = arith.divf %164, %165 : vector<8x96xf32>
    %167 = vector.extract_strided_slice %160 {offsets = [0, 96], sizes = [8, 32], strides = [1, 1]} : vector<8x128xf32> to vector<8x32xf32>
    %168 = math.tanh %167 : vector<8x32xf32>
    %169 = vector.extract_strided_slice %166 {offsets = [0, 0], sizes = [8, 32], strides = [1, 1]} : vector<8x96xf32> to vector<8x32xf32>
    %170 = vector.extract_strided_slice %166 {offsets = [0, 32], sizes = [8, 32], strides = [1, 1]} : vector<8x96xf32> to vector<8x32xf32>
    %171 = vector.extract_strided_slice %166 {offsets = [0, 64], sizes = [8, 32], strides = [1, 1]} : vector<8x96xf32> to vector<8x32xf32>
    %172 = arith.mulf %170, %155 : vector<8x32xf32>
    %173 = arith.mulf %169, %168 : vector<8x32xf32>
    %174 = arith.addf %172, %173 : vector<8x32xf32>
    %175 = math.tanh %174 : vector<8x32xf32>
    %176 = arith.mulf %171, %175 : vector<8x32xf32>
    %c0_101 = arith.constant 0 : index
    %c0_102 = arith.constant 0 : index
    %177 = vector.load %arg8[%c0_101, %c0_102] : memref<8x32xf32, #tpu.memory_space<vmem>>, vector<8x32xf32>
    tpu.vector_store %arg8[%c0_101, %c0_102], %176 {strides = array<i32>} : memref<8x32xf32, #tpu.memory_space<vmem>>, vector<8x32xf32>,
    %c0_103 = arith.constant 0 : index
    %c0_104 = arith.constant 0 : index
    %178 = vector.load %arg9[%c0_103, %c0_104] : memref<8x32xf32, #tpu.memory_space<vmem>>, vector<8x32xf32>
    tpu.vector_store %arg9[%c0_103, %c0_104], %174 {strides = array<i32>} : memref<8x32xf32, #tpu.memory_space<vmem>>, vector<8x32xf32>,
    %c0_105 = arith.constant 0 : index
    %c0_106 = arith.constant 0 : index
    %179 = vector.load %arg7[%c0_105, %c0_106] : memref<8x32xf32, #tpu.memory_space<vmem>>, vector<8x32xf32>
    %180 = arith.index_cast %c4_i32 : i32 to index
    %c0_107 = arith.constant 0 : index
    %c0_108 = arith.constant 0 : index
    %181 = vector.load %arg11[%180, %c0_107, %c0_108] : memref<8x8x32xf32, #tpu.memory_space<vmem>>, vector<1x8x32xf32>
    %182 = vector.shape_cast %181 : vector<1x8x32xf32> to vector<8x32xf32>
    %183 = arith.subf %176, %182 : vector<8x32xf32>
    %184 = arith.maximumf %179, %183 : vector<8x32xf32>
    %c0_109 = arith.constant 0 : index
    %c0_110 = arith.constant 0 : index
    %185 = vector.load %arg7[%c0_109, %c0_110] : memref<8x32xf32, #tpu.memory_space<vmem>>, vector<8x32xf32>
    tpu.vector_store %arg7[%c0_109, %c0_110], %184 {strides = array<i32>} : memref<8x32xf32, #tpu.memory_space<vmem>>, vector<8x32xf32>,
    %c5_i32 = arith.constant 5 : i32
    %c0_111 = arith.constant 0 : index
    %c0_112 = arith.constant 0 : index
    %186 = vector.load %arg8[%c0_111, %c0_112] : memref<8x32xf32, #tpu.memory_space<vmem>>, vector<8x32xf32>
    %c0_113 = arith.constant 0 : index
    %c0_114 = arith.constant 0 : index
    %187 = vector.load %arg9[%c0_113, %c0_114] : memref<8x32xf32, #tpu.memory_space<vmem>>, vector<8x32xf32>
    %188 = arith.index_cast %c5_i32 : i32 to index
    %c0_115 = arith.constant 0 : index
    %c0_116 = arith.constant 0 : index
    %189 = vector.load %arg10[%188, %c0_115, %c0_116] : memref<8x8x128xf32, #tpu.memory_space<vmem>>, vector<1x8x128xf32>
    %190 = vector.shape_cast %189 : vector<1x8x128xf32> to vector<8x128xf32>
    %cst_117 = arith.constant dense<0.000000e+00> : vector<8x128xf32>
    %191 = tpu.matmul %186, %25, %cst_117 {dimension_numbers = #tpu.dot_dimension_numbers<[1], [0], [0], [1], [0, 0, 1, 1], [], []>, precision = #tpu.contract_precision<fp32>} : vector<8x32xf32>, vector<32x128xf32>, vector<8x128xf32> -> vector<8x128xf32>
    %192 = arith.addf %190, %191 : vector<8x128xf32>
    %193 = vector.extract_strided_slice %192 {offsets = [0, 0], sizes = [8, 96], strides = [1, 1]} : vector<8x128xf32> to vector<8x96xf32>
    %194 = arith.negf %193 : vector<8x96xf32>
    %195 = math.exp %194 : vector<8x96xf32>
    %cst_118 = arith.constant 1.000000e+00 : f32
    %196 = vector.broadcast %cst_118 : f32 to vector<8x96xf32>
    %197 = arith.addf %196, %195 : vector<8x96xf32>
    %198 = arith.divf %196, %197 : vector<8x96xf32>
    %199 = vector.extract_strided_slice %192 {offsets = [0, 96], sizes = [8, 32], strides = [1, 1]} : vector<8x128xf32> to vector<8x32xf32>
    %200 = math.tanh %199 : vector<8x32xf32>
    %201 = vector.extract_strided_slice %198 {offsets = [0, 0], sizes = [8, 32], strides = [1, 1]} : vector<8x96xf32> to vector<8x32xf32>
    %202 = vector.extract_strided_slice %198 {offsets = [0, 32], sizes = [8, 32], strides = [1, 1]} : vector<8x96xf32> to vector<8x32xf32>
    %203 = vector.extract_strided_slice %198 {offsets = [0, 64], sizes = [8, 32], strides = [1, 1]} : vector<8x96xf32> to vector<8x32xf32>
    %204 = arith.mulf %202, %187 : vector<8x32xf32>
    %205 = arith.mulf %201, %200 : vector<8x32xf32>
    %206 = arith.addf %204, %205 : vector<8x32xf32>
    %207 = math.tanh %206 : vector<8x32xf32>
    %208 = arith.mulf %203, %207 : vector<8x32xf32>
    %c0_119 = arith.constant 0 : index
    %c0_120 = arith.constant 0 : index
    %209 = vector.load %arg8[%c0_119, %c0_120] : memref<8x32xf32, #tpu.memory_space<vmem>>, vector<8x32xf32>
    tpu.vector_store %arg8[%c0_119, %c0_120], %208 {strides = array<i32>} : memref<8x32xf32, #tpu.memory_space<vmem>>, vector<8x32xf32>,
    %c0_121 = arith.constant 0 : index
    %c0_122 = arith.constant 0 : index
    %210 = vector.load %arg9[%c0_121, %c0_122] : memref<8x32xf32, #tpu.memory_space<vmem>>, vector<8x32xf32>
    tpu.vector_store %arg9[%c0_121, %c0_122], %206 {strides = array<i32>} : memref<8x32xf32, #tpu.memory_space<vmem>>, vector<8x32xf32>,
    %c0_123 = arith.constant 0 : index
    %c0_124 = arith.constant 0 : index
    %211 = vector.load %arg7[%c0_123, %c0_124] : memref<8x32xf32, #tpu.memory_space<vmem>>, vector<8x32xf32>
    %212 = arith.index_cast %c5_i32 : i32 to index
    %c0_125 = arith.constant 0 : index
    %c0_126 = arith.constant 0 : index
    %213 = vector.load %arg11[%212, %c0_125, %c0_126] : memref<8x8x32xf32, #tpu.memory_space<vmem>>, vector<1x8x32xf32>
    %214 = vector.shape_cast %213 : vector<1x8x32xf32> to vector<8x32xf32>
    %215 = arith.subf %208, %214 : vector<8x32xf32>
    %216 = arith.maximumf %211, %215 : vector<8x32xf32>
    %c0_127 = arith.constant 0 : index
    %c0_128 = arith.constant 0 : index
    %217 = vector.load %arg7[%c0_127, %c0_128] : memref<8x32xf32, #tpu.memory_space<vmem>>, vector<8x32xf32>
    tpu.vector_store %arg7[%c0_127, %c0_128], %216 {strides = array<i32>} : memref<8x32xf32, #tpu.memory_space<vmem>>, vector<8x32xf32>,
    %c6_i32 = arith.constant 6 : i32
    %c0_129 = arith.constant 0 : index
    %c0_130 = arith.constant 0 : index
    %218 = vector.load %arg8[%c0_129, %c0_130] : memref<8x32xf32, #tpu.memory_space<vmem>>, vector<8x32xf32>
    %c0_131 = arith.constant 0 : index
    %c0_132 = arith.constant 0 : index
    %219 = vector.load %arg9[%c0_131, %c0_132] : memref<8x32xf32, #tpu.memory_space<vmem>>, vector<8x32xf32>
    %220 = arith.index_cast %c6_i32 : i32 to index
    %c0_133 = arith.constant 0 : index
    %c0_134 = arith.constant 0 : index
    %221 = vector.load %arg10[%220, %c0_133, %c0_134] : memref<8x8x128xf32, #tpu.memory_space<vmem>>, vector<1x8x128xf32>
    %222 = vector.shape_cast %221 : vector<1x8x128xf32> to vector<8x128xf32>
    %cst_135 = arith.constant dense<0.000000e+00> : vector<8x128xf32>
    %223 = tpu.matmul %218, %25, %cst_135 {dimension_numbers = #tpu.dot_dimension_numbers<[1], [0], [0], [1], [0, 0, 1, 1], [], []>, precision = #tpu.contract_precision<fp32>} : vector<8x32xf32>, vector<32x128xf32>, vector<8x128xf32> -> vector<8x128xf32>
    %224 = arith.addf %222, %223 : vector<8x128xf32>
    %225 = vector.extract_strided_slice %224 {offsets = [0, 0], sizes = [8, 96], strides = [1, 1]} : vector<8x128xf32> to vector<8x96xf32>
    %226 = arith.negf %225 : vector<8x96xf32>
    %227 = math.exp %226 : vector<8x96xf32>
    %cst_136 = arith.constant 1.000000e+00 : f32
    %228 = vector.broadcast %cst_136 : f32 to vector<8x96xf32>
    %229 = arith.addf %228, %227 : vector<8x96xf32>
    %230 = arith.divf %228, %229 : vector<8x96xf32>
    %231 = vector.extract_strided_slice %224 {offsets = [0, 96], sizes = [8, 32], strides = [1, 1]} : vector<8x128xf32> to vector<8x32xf32>
    %232 = math.tanh %231 : vector<8x32xf32>
    %233 = vector.extract_strided_slice %230 {offsets = [0, 0], sizes = [8, 32], strides = [1, 1]} : vector<8x96xf32> to vector<8x32xf32>
    %234 = vector.extract_strided_slice %230 {offsets = [0, 32], sizes = [8, 32], strides = [1, 1]} : vector<8x96xf32> to vector<8x32xf32>
    %235 = vector.extract_strided_slice %230 {offsets = [0, 64], sizes = [8, 32], strides = [1, 1]} : vector<8x96xf32> to vector<8x32xf32>
    %236 = arith.mulf %234, %219 : vector<8x32xf32>
    %237 = arith.mulf %233, %232 : vector<8x32xf32>
    %238 = arith.addf %236, %237 : vector<8x32xf32>
    %239 = math.tanh %238 : vector<8x32xf32>
    %240 = arith.mulf %235, %239 : vector<8x32xf32>
    %c0_137 = arith.constant 0 : index
    %c0_138 = arith.constant 0 : index
    %241 = vector.load %arg8[%c0_137, %c0_138] : memref<8x32xf32, #tpu.memory_space<vmem>>, vector<8x32xf32>
    tpu.vector_store %arg8[%c0_137, %c0_138], %240 {strides = array<i32>} : memref<8x32xf32, #tpu.memory_space<vmem>>, vector<8x32xf32>,
    %c0_139 = arith.constant 0 : index
    %c0_140 = arith.constant 0 : index
    %242 = vector.load %arg9[%c0_139, %c0_140] : memref<8x32xf32, #tpu.memory_space<vmem>>, vector<8x32xf32>
    tpu.vector_store %arg9[%c0_139, %c0_140], %238 {strides = array<i32>} : memref<8x32xf32, #tpu.memory_space<vmem>>, vector<8x32xf32>,
    %c0_141 = arith.constant 0 : index
    %c0_142 = arith.constant 0 : index
    %243 = vector.load %arg7[%c0_141, %c0_142] : memref<8x32xf32, #tpu.memory_space<vmem>>, vector<8x32xf32>
    %244 = arith.index_cast %c6_i32 : i32 to index
    %c0_143 = arith.constant 0 : index
    %c0_144 = arith.constant 0 : index
    %245 = vector.load %arg11[%244, %c0_143, %c0_144] : memref<8x8x32xf32, #tpu.memory_space<vmem>>, vector<1x8x32xf32>
    %246 = vector.shape_cast %245 : vector<1x8x32xf32> to vector<8x32xf32>
    %247 = arith.subf %240, %246 : vector<8x32xf32>
    %248 = arith.maximumf %243, %247 : vector<8x32xf32>
    %c0_145 = arith.constant 0 : index
    %c0_146 = arith.constant 0 : index
    %249 = vector.load %arg7[%c0_145, %c0_146] : memref<8x32xf32, #tpu.memory_space<vmem>>, vector<8x32xf32>
    tpu.vector_store %arg7[%c0_145, %c0_146], %248 {strides = array<i32>} : memref<8x32xf32, #tpu.memory_space<vmem>>, vector<8x32xf32>,
    %c7_i32 = arith.constant 7 : i32
    %c0_147 = arith.constant 0 : index
    %c0_148 = arith.constant 0 : index
    %250 = vector.load %arg8[%c0_147, %c0_148] : memref<8x32xf32, #tpu.memory_space<vmem>>, vector<8x32xf32>
    %c0_149 = arith.constant 0 : index
    %c0_150 = arith.constant 0 : index
    %251 = vector.load %arg9[%c0_149, %c0_150] : memref<8x32xf32, #tpu.memory_space<vmem>>, vector<8x32xf32>
    %252 = arith.index_cast %c7_i32 : i32 to index
    %c0_151 = arith.constant 0 : index
    %c0_152 = arith.constant 0 : index
    %253 = vector.load %arg10[%252, %c0_151, %c0_152] : memref<8x8x128xf32, #tpu.memory_space<vmem>>, vector<1x8x128xf32>
    %254 = vector.shape_cast %253 : vector<1x8x128xf32> to vector<8x128xf32>
    %cst_153 = arith.constant dense<0.000000e+00> : vector<8x128xf32>
    %255 = tpu.matmul %250, %25, %cst_153 {dimension_numbers = #tpu.dot_dimension_numbers<[1], [0], [0], [1], [0, 0, 1, 1], [], []>, precision = #tpu.contract_precision<fp32>} : vector<8x32xf32>, vector<32x128xf32>, vector<8x128xf32> -> vector<8x128xf32>
    %256 = arith.addf %254, %255 : vector<8x128xf32>
    %257 = vector.extract_strided_slice %256 {offsets = [0, 0], sizes = [8, 96], strides = [1, 1]} : vector<8x128xf32> to vector<8x96xf32>
    %258 = arith.negf %257 : vector<8x96xf32>
    %259 = math.exp %258 : vector<8x96xf32>
    %cst_154 = arith.constant 1.000000e+00 : f32
    %260 = vector.broadcast %cst_154 : f32 to vector<8x96xf32>
    %261 = arith.addf %260, %259 : vector<8x96xf32>
    %262 = arith.divf %260, %261 : vector<8x96xf32>
    %263 = vector.extract_strided_slice %256 {offsets = [0, 96], sizes = [8, 32], strides = [1, 1]} : vector<8x128xf32> to vector<8x32xf32>
    %264 = math.tanh %263 : vector<8x32xf32>
    %265 = vector.extract_strided_slice %262 {offsets = [0, 0], sizes = [8, 32], strides = [1, 1]} : vector<8x96xf32> to vector<8x32xf32>
    %266 = vector.extract_strided_slice %262 {offsets = [0, 32], sizes = [8, 32], strides = [1, 1]} : vector<8x96xf32> to vector<8x32xf32>
    %267 = vector.extract_strided_slice %262 {offsets = [0, 64], sizes = [8, 32], strides = [1, 1]} : vector<8x96xf32> to vector<8x32xf32>
    %268 = arith.mulf %266, %251 : vector<8x32xf32>
    %269 = arith.mulf %265, %264 : vector<8x32xf32>
    %270 = arith.addf %268, %269 : vector<8x32xf32>
    %271 = math.tanh %270 : vector<8x32xf32>
    %272 = arith.mulf %267, %271 : vector<8x32xf32>
    %c0_155 = arith.constant 0 : index
    %c0_156 = arith.constant 0 : index
    %273 = vector.load %arg8[%c0_155, %c0_156] : memref<8x32xf32, #tpu.memory_space<vmem>>, vector<8x32xf32>
    tpu.vector_store %arg8[%c0_155, %c0_156], %272 {strides = array<i32>} : memref<8x32xf32, #tpu.memory_space<vmem>>, vector<8x32xf32>,
    %c0_157 = arith.constant 0 : index
    %c0_158 = arith.constant 0 : index
    %274 = vector.load %arg9[%c0_157, %c0_158] : memref<8x32xf32, #tpu.memory_space<vmem>>, vector<8x32xf32>
    tpu.vector_store %arg9[%c0_157, %c0_158], %270 {strides = array<i32>} : memref<8x32xf32, #tpu.memory_space<vmem>>, vector<8x32xf32>,
    %c0_159 = arith.constant 0 : index
    %c0_160 = arith.constant 0 : index
    %275 = vector.load %arg7[%c0_159, %c0_160] : memref<8x32xf32, #tpu.memory_space<vmem>>, vector<8x32xf32>
    %276 = arith.index_cast %c7_i32 : i32 to index
    %c0_161 = arith.constant 0 : index
    %c0_162 = arith.constant 0 : index
    %277 = vector.load %arg11[%276, %c0_161, %c0_162] : memref<8x8x32xf32, #tpu.memory_space<vmem>>, vector<1x8x32xf32>
    %278 = vector.shape_cast %277 : vector<1x8x32xf32> to vector<8x32xf32>
    %279 = arith.subf %272, %278 : vector<8x32xf32>
    %280 = arith.maximumf %275, %279 : vector<8x32xf32>
    %c0_163 = arith.constant 0 : index
    %c0_164 = arith.constant 0 : index
    %281 = vector.load %arg7[%c0_163, %c0_164] : memref<8x32xf32, #tpu.memory_space<vmem>>, vector<8x32xf32>
    tpu.vector_store %arg7[%c0_163, %c0_164], %280 {strides = array<i32>} : memref<8x32xf32, #tpu.memory_space<vmem>>, vector<8x32xf32>,
    %c8_i32 = arith.constant 8 : i32
    return
  }
  func.func @transform_0(%arg0: i32) -> (i32, i32) {
    %c0_i32 = arith.constant 0 : i32
    %c0_i32_0 = arith.constant 0 : i32
    return %arg0, %c0_i32 : i32, i32
  }
  func.func @transform_1(%arg0: i32) -> (i32, i32) {
    %c0_i32 = arith.constant 0 : i32
    %c0_i32_0 = arith.constant 0 : i32
    return %arg0, %c0_i32 : i32, i32
  }
  func.func @transform_2(%arg0: i32) -> (i32, i32, i32) {
    %c0_i32 = arith.constant 0 : i32
    %c0_i32_0 = arith.constant 0 : i32
    %c0_i32_1 = arith.constant 0 : i32
    return %arg0, %c0_i32, %c0_i32_0 : i32, i32, i32
  }
  func.func @transform_3(%arg0: i32) -> (i32, i32, i32) {
    %c0_i32 = arith.constant 0 : i32
    %c0_i32_0 = arith.constant 0 : i32
    %c0_i32_1 = arith.constant 0 : i32
    return %arg0, %c0_i32, %c0_i32_0 : i32, i32, i32
  }
  func.func @transform_4(%arg0: i32) -> (i32, i32) {
    %c0_i32 = arith.constant 0 : i32
    %c0_i32_0 = arith.constant 0 : i32
    %c0_i32_1 = arith.constant 0 : i32
    return %c0_i32, %c0_i32_0 : i32, i32
  }
  func.func @transform_5(%arg0: i32) -> (i32, i32) {
    %c0_i32 = arith.constant 0 : i32
    %c0_i32_0 = arith.constant 0 : i32
    %c0_i32_1 = arith.constant 0 : i32
    return %c0_i32, %c0_i32_0 : i32, i32
  }
  func.func @transform_6(%arg0: i32) -> (i32, i32) {
    %c0_i32 = arith.constant 0 : i32
    %c0_i32_0 = arith.constant 0 : i32
    %c0_i32_1 = arith.constant 0 : i32
    return %c0_i32, %c0_i32_0 : i32, i32
  }
}

</mosaic_0001>

<llo_original>
// kernel: tpu_custom_call.1
$region0: #{tpu_custom_call.1}
  #allocation0 [shape = 'u32[]', space=smem, size = 0x4, offset = 0x4, fixed_abs, tag = 'smem constant byte address 0x4 - core index']
  #allocation1 [shape = 'u32[144,128]{1,0:T(1,128)}', space=vmem, size = 0x12000, scoped, tag = 'internal scratch']
  #allocation2 [shape = 'f32[8,32]{1,0:T(8,128)}', space=vmem, size = 0x1000, scoped, tag = 'scratch operand']
  #allocation3 [shape = 'f32[8,32]{1,0:T(8,128)}', space=vmem, size = 0x1000, scoped, tag = 'scratch operand']
  #allocation4 [shape = 'f32[8,8,128]{2,1,0:T(8,128)}', space=vmem, size = 0x8000, scoped, tag = 'scratch operand']
  #allocation5 [shape = 'f32[8,8,32]{2,1,0:T(8,128)}', space=vmem, size = 0x8000, scoped, tag = 'scratch operand']
  %s0 = inlined_call_operand.vmem [shape: s32[64,1], index: 0, kind: input, shape index: {}]
  %s1 = inlined_call_operand.vmem [shape: s32[64,1], index: 1, kind: input, shape index: {}]
  %s2 = inlined_call_operand.vmem [shape: f32[8,8,1], index: 2, kind: input, shape index: {}]
  %s3 = inlined_call_operand.vmem [shape: f32[8,8,1], index: 3, kind: input, shape index: {}]
  %s4 = inlined_call_operand.vmem [shape: f32[128,128], index: 4, kind: input, shape index: {}]
  %s5 = inlined_call_operand.vmem [shape: f32[32,128], index: 5, kind: input, shape index: {}]
  %s6 = inlined_call_operand.hbm [shape: f32[8,32], index: 6, kind: output, shape index: {}]
  %s7 = sld [smem:[#allocation0]]
  $region38: #{tpu_custom_call.1} parent=0
    _
  %s9 = ssub.s32 1, %s7
  %s10 = scalar_select 0, %s9, %s7
  $region1: #{tpu_custom_call.1} parent=0
    #allocation6 [shape = 'u8[4096]{0}', space=vmem, size = 0x1000, scoped, tag = 'output window, operand 0, single buffered']
    #allocation7 [shape = 's32[1]{0}', space=sflag, size = 0x4, scoped, tag = 'scoped memory for tpu_custom_call.1']
    %11 = vsyncpa [#allocation7], 0
    // Predicated region
    $region2: #{tpu_custom_call.1} parent=1 // pred_check
      _
    $region3: #{tpu_custom_call.1} parent=1 // pred_check_branch
      %13 = sbr.rel (0) target = $region5
    $region4: #{tpu_custom_call.1} parent=1 // pred_region
      _
    $region5: #{tpu_custom_call.1} parent=1 // pred_fallthru
      _
    // Predicated region
    $region6: #{tpu_custom_call.1} parent=1 // pred_check
      _
    $region7: #{tpu_custom_call.1} parent=1 // pred_check_branch
      %15 = sbr.rel (0) target = $region9
    $region8: #{tpu_custom_call.1} parent=1 // pred_region
      _
    $region9: #{tpu_custom_call.1} parent=1 // pred_fallthru
      _
    // Predicated region
    $region10: #{tpu_custom_call.1} parent=1 // pred_check
      _
    $region11: #{tpu_custom_call.1} parent=1 // pred_check_branch
      %17 = sbr.rel (0) target = $region13
    $region12: #{tpu_custom_call.1} parent=1 // pred_region
      _
    $region13: #{tpu_custom_call.1} parent=1 // pred_fallthru
      _
    // Predicated region
    $region14: #{tpu_custom_call.1} parent=1 // pred_check
      _
    $region15: #{tpu_custom_call.1} parent=1 // pred_check_branch
      %19 = sbr.rel (0) target = $region17
    $region16: #{tpu_custom_call.1} parent=1 // pred_region
      _
    $region17: #{tpu_custom_call.1} parent=1 // pred_fallthru
      _
    // Predicated region
    $region18: #{tpu_custom_call.1} parent=1 // pred_check
      _
    $region19: #{tpu_custom_call.1} parent=1 // pred_check_branch
      %21 = sbr.rel (0) target = $region21
    $region20: #{tpu_custom_call.1} parent=1 // pred_region
      _
    $region21: #{tpu_custom_call.1} parent=1 // pred_fallthru
      _
    // Predicated region
    $region22: #{tpu_custom_call.1} parent=1 // pred_check
      _
    $region23: #{tpu_custom_call.1} parent=1 // pred_check_branch
      %23 = sbr.rel (0) target = $region25
    $region24: #{tpu_custom_call.1} parent=1 // pred_region
      _
    $region25: #{tpu_custom_call.1} parent=1 // pred_fallthru
      _
    %p24 = scmp.eq.s32.totalorder 0, 0
    // Predicated region
    $region26: #{tpu_custom_call.1} parent=1 // pred_check
      %p25 = pneg %p24
    $region27: #{tpu_custom_call.1} parent=1 // pred_check_branch
      %27 = sbr.rel (%p25) target = $region29
    $region28: #{tpu_custom_call.1} parent=1 // pred_region
      %vm28 = vcmask 261120
      %29 = vst.msk [vmem:[#allocation2] sm:$0xff] %vm28, 0.0
      %30 = vst.msk [vmem:[#allocation3] sm:$0xff] %vm28, 0.0
      %31 = vst.msk [vmem:[#allocation6] sm:$0xff] %vm28, -1e+30
    $region29: #{tpu_custom_call.1} parent=1 // pred_fallthru
      _
    %v32 = vlaneseq
    %v33 = vand.u32 %v32, 127
    %v34 = vld [vmem:[%s0] sm:$0xff]
    %v35 = vld [vmem:[%s0 + $0x8] sm:$0xff]
    %v36 = vld [vmem:[%s0 + $0x10] sm:$0xff]
    %v37 = vld [vmem:[%s0 + $0x18] sm:$0xff]
    %v38 = vld [vmem:[%s0 + $0x20] sm:$0xff]
    %v39 = vld [vmem:[%s0 + $0x28] sm:$0xff]
    %v40 = vld [vmem:[%s0 + $0x30] sm:$0xff]
    %v41 = vld [vmem:[%s0 + $0x38] sm:$0xff]
    %42 = vset.pattern.permute.xlu0 0
    %43 = vperm.xlu0 %42, %v34
    %v44 = vpop.permute.xlu0 %43
    %45 = vset.pattern.permute.xlu0 0
    %46 = vperm.xlu0 %45, %v35
    %v47 = vpop.permute.xlu0 %46
    %48 = vset.pattern.permute.xlu0 0
    %49 = vperm.xlu0 %48, %v36
    %v50 = vpop.permute.xlu0 %49
    %51 = vset.pattern.permute.xlu0 0
    %52 = vperm.xlu0 %51, %v37
    %v53 = vpop.permute.xlu0 %52
    %54 = vset.pattern.permute.xlu0 0
    %55 = vperm.xlu0 %54, %v38
    %v56 = vpop.permute.xlu0 %55
    %57 = vset.pattern.permute.xlu0 0
    %58 = vperm.xlu0 %57, %v39
    %v59 = vpop.permute.xlu0 %58
    %60 = vset.pattern.permute.xlu0 0
    %61 = vperm.xlu0 %60, %v40
    %v62 = vpop.permute.xlu0 %61
    %63 = vset.pattern.permute.xlu0 0
    %64 = vperm.xlu0 %63, %v41
    %v65 = vpop.permute.xlu0 %64
    %vm66 = vcmp.eq.s32.totalorder %v33, %v44
    %vm67 = vcmp.eq.s32.totalorder %v33, %v47
    %vm68 = vcmp.eq.s32.totalorder %v33, %v50
    %vm69 = vcmp.eq.s32.totalorder %v33, %v53
    %vm70 = vcmp.eq.s32.totalorder %v33, %v56
    %vm71 = vcmp.eq.s32.totalorder %v33, %v59
    %vm72 = vcmp.eq.s32.totalorder %v33, %v62
    %vm73 = vcmp.eq.s32.totalorder %v33, %v65
    %v74 = vld [vmem:[%s1] sm:$0xff]
    %v75 = vld [vmem:[%s1 + $0x8] sm:$0xff]
    %v76 = vld [vmem:[%s1 + $0x10] sm:$0xff]
    %v77 = vld [vmem:[%s1 + $0x18] sm:$0xff]
    %v78 = vld [vmem:[%s1 + $0x20] sm:$0xff]
    %v79 = vld [vmem:[%s1 + $0x28] sm:$0xff]
    %v80 = vld [vmem:[%s1 + $0x30] sm:$0xff]
    %v81 = vld [vmem:[%s1 + $0x38] sm:$0xff]
    %82 = vset.pattern.permute.xlu0 0
    %83 = vperm.xlu0 %82, %v74
    %v84 = vpop.permute.xlu0 %83
    %85 = vset.pattern.permute.xlu0 0
    %86 = vperm.xlu0 %85, %v75
    %v87 = vpop.permute.xlu0 %86
    %88 = vset.pattern.permute.xlu0 0
    %89 = vperm.xlu0 %88, %v76
    %v90 = vpop.permute.xlu0 %89
    %91 = vset.pattern.permute.xlu0 0
    %92 = vperm.xlu0 %91, %v77
    %v93 = vpop.permute.xlu0 %92
    %94 = vset.pattern.permute.xlu0 0
    %95 = vperm.xlu0 %94, %v78
    %v96 = vpop.permute.xlu0 %95
    %97 = vset.pattern.permute.xlu0 0
    %98 = vperm.xlu0 %97, %v79
    %v99 = vpop.permute.xlu0 %98
    %100 = vset.pattern.permute.xlu0 0
    %101 = vperm.xlu0 %100, %v80
    %v102 = vpop.permute.xlu0 %101
    %103 = vset.pattern.permute.xlu0 0
    %104 = vperm.xlu0 %103, %v81
    %v105 = vpop.permute.xlu0 %104
    %vm106 = vcmp.eq.s32.totalorder %v33, %v84
    %vm107 = vcmp.eq.s32.totalorder %v33, %v87
    %vm108 = vcmp.eq.s32.totalorder %v33, %v90
    %vm109 = vcmp.eq.s32.totalorder %v33, %v93
    %vm110 = vcmp.eq.s32.totalorder %v33, %v96
    %vm111 = vcmp.eq.s32.totalorder %v33, %v99
    %vm112 = vcmp.eq.s32.totalorder %v33, %v102
    %vm113 = vcmp.eq.s32.totalorder %v33, %v105
    %vm114 = vmor %vm66, %vm106
    %vm115 = vmor %vm67, %vm107
    %vm116 = vmor %vm68, %vm108
    %vm117 = vmor %vm69, %vm109
    %vm118 = vmor %vm70, %vm110
    %vm119 = vmor %vm71, %vm111
    %vm120 = vmor %vm72, %vm112
    %vm121 = vmor %vm73, %vm113
    %v122 = vsel %vm114, 1, 0
    %v123 = vsel %vm115, 1, 0
    %v124 = vsel %vm116, 1, 0
    %v125 = vsel %vm117, 1, 0
    %v126 = vsel %vm118, 1, 0
    %v127 = vsel %vm119, 1, 0
    %v128 = vsel %vm120, 1, 0
    %v129 = vsel %vm121, 1, 0
    %v130 = vcvt.s32.f32 %v122
    %v131 = vcvt.s32.f32 %v123
    %v132 = vcvt.s32.f32 %v124
    %v133 = vcvt.s32.f32 %v125
    %v134 = vcvt.s32.f32 %v126
    %v135 = vcvt.s32.f32 %v127
    %v136 = vcvt.s32.f32 %v128
    %v137 = vcvt.s32.f32 %v129
    %v138 = vld [vmem:[%s4] sm:$0xff]
    %v139 = vld [vmem:[%s4 + $0x8] sm:$0xff]
    %v140 = vld [vmem:[%s4 + $0x10] sm:$0xff]
    %v141 = vld [vmem:[%s4 + $0x18] sm:$0xff]
    %v142 = vld [vmem:[%s4 + $0x20] sm:$0xff]
    %v143 = vld [vmem:[%s4 + $0x28] sm:$0xff]
    %v144 = vld [vmem:[%s4 + $0x30] sm:$0xff]
    %v145 = vld [vmem:[%s4 + $0x38] sm:$0xff]
    %v146 = vld [vmem:[%s4 + $0x40] sm:$0xff]
    %v147 = vld [vmem:[%s4 + $0x48] sm:$0xff]
    %v148 = vld [vmem:[%s4 + $0x50] sm:$0xff]
    %v149 = vld [vmem:[%s4 + $0x58] sm:$0xff]
    %v150 = vld [vmem:[%s4 + $0x60] sm:$0xff]
    %v151 = vld [vmem:[%s4 + $0x68] sm:$0xff]
    %v152 = vld [vmem:[%s4 + $0x70] sm:$0xff]
    %v153 = vld [vmem:[%s4 + $0x78] sm:$0xff]
    %154 = vmatprep.subr.mxu0 0.0
    %v155 = vand.u32 %v138, 4294901760
    %156 = vmatpush1.msra.mxu0 %v155
    %157 = vmatprep.subr.mxu0 0.0
    %v158 = vand.u32 %v139, 4294901760
    %159 = vmatpush1.msra.mxu0 %v158
    %160 = vmatprep.subr.mxu0 0.0
    %v161 = vand.u32 %v140, 4294901760
    %162 = vmatpush1.msra.mxu0 %v161
    %163 = vmatprep.subr.mxu0 0.0
    %v164 = vand.u32 %v141, 4294901760
    %165 = vmatpush1.msra.mxu0 %v164
    %166 = vmatprep.subr.mxu0 0.0
    %v167 = vand.u32 %v142, 4294901760
    %168 = vmatpush1.msra.mxu0 %v167
    %169 = vmatprep.subr.mxu0 0.0
    %v170 = vand.u32 %v143, 4294901760
    %171 = vmatpush1.msra.mxu0 %v170
    %172 = vmatprep.subr.mxu0 0.0
    %v173 = vand.u32 %v144, 4294901760
    %174 = vmatpush1.msra.mxu0 %v173
    %175 = vmatprep.subr.mxu0 0.0
    %v176 = vand.u32 %v145, 4294901760
    %177 = vmatpush1.msra.mxu0 %v176
    %178 = vmatprep.subr.mxu0 0.0
    %v179 = vand.u32 %v146, 4294901760
    %180 = vmatpush1.msra.mxu0 %v179
    %181 = vmatprep.subr.mxu0 0.0
    %v182 = vand.u32 %v147, 4294901760
    %183 = vmatpush1.msra.mxu0 %v182
    %184 = vmatprep.subr.mxu0 0.0
    %v185 = vand.u32 %v148, 4294901760
    %186 = vmatpush1.msra.mxu0 %v185
    %187 = vmatprep.subr.mxu0 0.0
    %v188 = vand.u32 %v149, 4294901760
    %189 = vmatpush1.msra.mxu0 %v188
    %190 = vmatprep.subr.mxu0 0.0
    %v191 = vand.u32 %v150, 4294901760
    %192 = vmatpush1.msra.mxu0 %v191
    %193 = vmatprep.subr.mxu0 0.0
    %v194 = vand.u32 %v151, 4294901760
    %195 = vmatpush1.msra.mxu0 %v194
    %196 = vmatprep.subr.mxu0 0.0
    %v197 = vand.u32 %v152, 4294901760
    %198 = vmatpush1.msra.mxu0 %v197
    %199 = vmatprep.subr.mxu0 0.0
    %v200 = vand.u32 %v153, 4294901760
    %201 = vmatpush1.msra.mxu0 %v200
    %202 = vmatprep.subr.mxu0 0.0
    %203 = vmatpush1.msra.mxu0 0.0
    %204 = vmatprep.subr.mxu0 0.0
    %205 = vmatpush1.msra.mxu0 0.0
    %206 = vmatprep.subr.mxu0 0.0
    %207 = vmatpush1.msra.mxu0 0.0
    %208 = vmatprep.subr.mxu0 0.0
    %209 = vmatpush1.msra.mxu0 0.0
    %210 = vmatprep.subr.mxu0 0.0
    %211 = vmatpush1.msra.mxu0 0.0
    %212 = vmatprep.subr.mxu0 0.0
    %213 = vmatpush1.msra.mxu0 0.0
    %214 = vmatprep.subr.mxu0 0.0
    %215 = vmatpush1.msra.mxu0 0.0
    %216 = vmatprep.subr.mxu0 0.0
    %217 = vmatpush1.msra.mxu0 0.0
    %218 = vmatprep.subr.mxu0 0.0
    %219 = vmatpush1.msra.mxu0 0.0
    %220 = vmatprep.subr.mxu0 0.0
    %221 = vmatpush1.msra.mxu0 0.0
    %222 = vmatprep.subr.mxu0 0.0
    %223 = vmatpush1.msra.mxu0 0.0
    %224 = vmatprep.subr.mxu0 0.0
    %225 = vmatpush1.msra.mxu0 0.0
    %226 = vmatprep.subr.mxu0 0.0
    %227 = vmatpush1.msra.mxu0 0.0
    %228 = vmatprep.subr.mxu0 0.0
    %229 = vmatpush1.msra.mxu0 0.0
    %230 = vmatprep.subr.mxu0 0.0
    %231 = vmatpush1.msra.mxu0 0.0
    %232 = vmatprep.subr.mxu0 0.0
    %233 = vmatpush1.msra.mxu0 0.0
    %234 = vmatprep.mubr.f32.mxu0 0.0
    %v235 = vand.u32 %v130, 4294901760
    %v236 = vsub.f32 %v130, %v235
    %v237 = vand.u32 %v236, 4294901760
    %v238 = vsub.f32 %v236, %v237
    %v239 = vand.u32 %v238, 4294901760
    %240 = vmatmul.mubr.f32.gmra.mrb[0].mxu0 %v239
    %v241 = vpop.f32.mrb[0].mxu0
    %v242 = vadd.f32 0.0, %v241
    %v243 = vpop.f32.mrb[0].mxu0
    %244 = vmatprep.mubr.f32.mxu0 0.0
    %v245 = vand.u32 %v131, 4294901760
    %v246 = vsub.f32 %v131, %v245
    %v247 = vand.u32 %v246, 4294901760
    %v248 = vsub.f32 %v246, %v247
    %v249 = vand.u32 %v248, 4294901760
    %250 = vmatmul.mubr.f32.gmra.mrb[0].mxu0 %v249
    %v251 = vpop.f32.mrb[0].mxu0
    %v252 = vadd.f32 0.0, %v251
    %v253 = vpop.f32.mrb[0].mxu0
    %254 = vmatprep.mubr.f32.mxu0 0.0
    %v255 = vand.u32 %v132, 4294901760
    %v256 = vsub.f32 %v132, %v255
    %v257 = vand.u32 %v256, 4294901760
    %v258 = vsub.f32 %v256, %v257
    %v259 = vand.u32 %v258, 4294901760
    %260 = vmatmul.mubr.f32.gmra.mrb[0].mxu0 %v259
    %v261 = vpop.f32.mrb[0].mxu0
    %v262 = vadd.f32 0.0, %v261
    %v263 = vpop.f32.mrb[0].mxu0
    %264 = vmatprep.mubr.f32.mxu0 0.0
    %v265 = vand.u32 %v133, 4294901760
    %v266 = vsub.f32 %v133, %v265
    %v267 = vand.u32 %v266, 4294901760
    %v268 = vsub.f32 %v266, %v267
    %v269 = vand.u32 %v268, 4294901760
    %270 = vmatmul.mubr.f32.gmra.mrb[0].mxu0 %v269
    %v271 = vpop.f32.mrb[0].mxu0
    %v272 = vadd.f32 0.0, %v271
    %v273 = vpop.f32.mrb[0].mxu0
    %274 = vmatprep.mubr.f32.mxu0 0.0
    %v275 = vand.u32 %v134, 4294901760
    %v276 = vsub.f32 %v134, %v275
    %v277 = vand.u32 %v276, 4294901760
    %v278 = vsub.f32 %v276, %v277
    %v279 = vand.u32 %v278, 4294901760
    %280 = vmatmul.mubr.f32.gmra.mrb[0].mxu0 %v279
    %v281 = vpop.f32.mrb[0].mxu0
    %v282 = vadd.f32 0.0, %v281
    %v283 = vpop.f32.mrb[0].mxu0
    %284 = vmatprep.mubr.f32.mxu0 0.0
    %v285 = vand.u32 %v135, 4294901760
    %v286 = vsub.f32 %v135, %v285
    %v287 = vand.u32 %v286, 4294901760
    %v288 = vsub.f32 %v286, %v287
    %v289 = vand.u32 %v288, 4294901760
    %290 = vmatmul.mubr.f32.gmra.mrb[0].mxu0 %v289
    %v291 = vpop.f32.mrb[0].mxu0
    %v292 = vadd.f32 0.0, %v291
    %v293 = vpop.f32.mrb[0].mxu0
    %294 = vmatprep.mubr.f32.mxu0 0.0
    %v295 = vand.u32 %v136, 4294901760
    %v296 = vsub.f32 %v136, %v295
    %v297 = vand.u32 %v296, 4294901760
    %v298 = vsub.f32 %v296, %v297
    %v299 = vand.u32 %v298, 4294901760
    %300 = vmatmul.mubr.f32.gmra.mrb[0].mxu0 %v299
    %v301 = vpop.f32.mrb[0].mxu0
    %v302 = vadd.f32 0.0, %v301
    %v303 = vpop.f32.mrb[0].mxu0
    %304 = vmatprep.mubr.f32.mxu0 0.0
    %v305 = vand.u32 %v137, 4294901760
    %v306 = vsub.f32 %v137, %v305
    %v307 = vand.u32 %v306, 4294901760
    %v308 = vsub.f32 %v306, %v307
    %v309 = vand.u32 %v308, 4294901760
    %310 = vmatmul.mubr.f32.gmra.mrb[0].mxu0 %v309
    %v311 = vpop.f32.mrb[0].mxu0
    %v312 = vadd.f32 0.0, %v311
    %v313 = vpop.f32.mrb[0].mxu0
    %314 = vdwg.mxu0
    %315 = vmatprep.subr.mxu0 0.0
    %v316 = vand.u32 %v138, 4294901760
    %v317 = vsub.f32 %v138, %v316
    %v318 = vand.u32 %v317, 4294901760
    %v319 = vsub.f32 %v317, %v318
    %v320 = vand.u32 %v319, 4294901760
    %321 = vmatpush1.msra.mxu0 %v320
    %322 = vmatprep.subr.mxu0 0.0
    %v323 = vand.u32 %v139, 4294901760
    %v324 = vsub.f32 %v139, %v323
    %v325 = vand.u32 %v324, 4294901760
    %v326 = vsub.f32 %v324, %v325
    %v327 = vand.u32 %v326, 4294901760
    %328 = vmatpush1.msra.mxu0 %v327
    %329 = vmatprep.subr.mxu0 0.0
    %v330 = vand.u32 %v140, 4294901760
    %v331 = vsub.f32 %v140, %v330
    %v332 = vand.u32 %v331, 4294901760
    %v333 = vsub.f32 %v331, %v332
    %v334 = vand.u32 %v333, 4294901760
    %335 = vmatpush1.msra.mxu0 %v334
    %336 = vmatprep.subr.mxu0 0.0
    %v337 = vand.u32 %v141, 4294901760
    %v338 = vsub.f32 %v141, %v337
    %v339 = vand.u32 %v338, 4294901760
    %v340 = vsub.f32 %v338, %v339
    %v341 = vand.u32 %v340, 4294901760
    %342 = vmatpush1.msra.mxu0 %v341
    %343 = vmatprep.subr.mxu0 0.0
    %v344 = vand.u32 %v142, 4294901760
    %v345 = vsub.f32 %v142, %v344
    %v346 = vand.u32 %v345, 4294901760
    %v347 = vsub.f32 %v345, %v346
    %v348 = vand.u32 %v347, 4294901760
    %349 = vmatpush1.msra.mxu0 %v348
    %350 = vmatprep.subr.mxu0 0.0
    %v351 = vand.u32 %v143, 4294901760
    %v352 = vsub.f32 %v143, %v351
    %v353 = vand.u32 %v352, 4294901760
    %v354 = vsub.f32 %v352, %v353
    %v355 = vand.u32 %v354, 4294901760
    %356 = vmatpush1.msra.mxu0 %v355
    %357 = vmatprep.subr.mxu0 0.0
    %v358 = vand.u32 %v144, 4294901760
    %v359 = vsub.f32 %v144, %v358
    %v360 = vand.u32 %v359, 4294901760
    %v361 = vsub.f32 %v359, %v360
    %v362 = vand.u32 %v361, 4294901760
    %363 = vmatpush1.msra.mxu0 %v362
    %364 = vmatprep.subr.mxu0 0.0
    %v365 = vand.u32 %v145, 4294901760
    %v366 = vsub.f32 %v145, %v365
    %v367 = vand.u32 %v366, 4294901760
    %v368 = vsub.f32 %v366, %v367
    %v369 = vand.u32 %v368, 4294901760
    %370 = vmatpush1.msra.mxu0 %v369
    %371 = vmatprep.subr.mxu0 0.0
    %v372 = vand.u32 %v146, 4294901760
    %v373 = vsub.f32 %v146, %v372
    %v374 = vand.u32 %v373, 4294901760
    %v375 = vsub.f32 %v373, %v374
    %v376 = vand.u32 %v375, 4294901760
    %377 = vmatpush1.msra.mxu0 %v376
    %378 = vmatprep.subr.mxu0 0.0
    %v379 = vand.u32 %v147, 4294901760
    %v380 = vsub.f32 %v147, %v379
    %v381 = vand.u32 %v380, 4294901760
    %v382 = vsub.f32 %v380, %v381
    %v383 = vand.u32 %v382, 4294901760
    %384 = vmatpush1.msra.mxu0 %v383
    %385 = vmatprep.subr.mxu0 0.0
    %v386 = vand.u32 %v148, 4294901760
    %v387 = vsub.f32 %v148, %v386
    %v388 = vand.u32 %v387, 4294901760
    %v389 = vsub.f32 %v387, %v388
    %v390 = vand.u32 %v389, 4294901760
    %391 = vmatpush1.msra.mxu0 %v390
    %392 = vmatprep.subr.mxu0 0.0
    %v393 = vand.u32 %v149, 4294901760
    %v394 = vsub.f32 %v149, %v393
    %v395 = vand.u32 %v394, 4294901760
    %v396 = vsub.f32 %v394, %v395
    %v397 = vand.u32 %v396, 4294901760
    %398 = vmatpush1.msra.mxu0 %v397
    %399 = vmatprep.subr.mxu0 0.0
    %v400 = vand.u32 %v150, 4294901760
    %v401 = vsub.f32 %v150, %v400
    %v402 = vand.u32 %v401, 4294901760
    %v403 = vsub.f32 %v401, %v402
    %v404 = vand.u32 %v403, 4294901760
    %405 = vmatpush1.msra.mxu0 %v404
    %406 = vmatprep.subr.mxu0 0.0
    %v407 = vand.u32 %v151, 4294901760
    %v408 = vsub.f32 %v151, %v407
    %v409 = vand.u32 %v408, 4294901760
    %v410 = vsub.f32 %v408, %v409
    %v411 = vand.u32 %v410, 4294901760
    %412 = vmatpush1.msra.mxu0 %v411
    %413 = vmatprep.subr.mxu0 0.0
    %v414 = vand.u32 %v152, 4294901760
    %v415 = vsub.f32 %v152, %v414
    %v416 = vand.u32 %v415, 4294901760
    %v417 = vsub.f32 %v415, %v416
    %v418 = vand.u32 %v417, 4294901760
    %419 = vmatpush1.msra.mxu0 %v418
    %420 = vmatprep.subr.mxu0 0.0
    %v421 = vand.u32 %v153, 4294901760
    %v422 = vsub.f32 %v153, %v421
    %v423 = vand.u32 %v422, 4294901760
    %v424 = vsub.f32 %v422, %v423
    %v425 = vand.u32 %v424, 4294901760
    %426 = vmatpush1.msra.mxu0 %v425
    %427 = vmatprep.subr.mxu0 0.0
    %428 = vmatpush1.msra.mxu0 0.0
    %429 = vmatprep.subr.mxu0 0.0
    %430 = vmatpush1.msra.mxu0 0.0
    %431 = vmatprep.subr.mxu0 0.0
    %432 = vmatpush1.msra.mxu0 0.0
    %433 = vmatprep.subr.mxu0 0.0
    %434 = vmatpush1.msra.mxu0 0.0
    %435 = vmatprep.subr.mxu0 0.0
    %436 = vmatpush1.msra.mxu0 0.0
    %437 = vmatprep.subr.mxu0 0.0
    %438 = vmatpush1.msra.mxu0 0.0
    %439 = vmatprep.subr.mxu0 0.0
    %440 = vmatpush1.msra.mxu0 0.0
    %441 = vmatprep.subr.mxu0 0.0
    %442 = vmatpush1.msra.mxu0 0.0
    %443 = vmatprep.subr.mxu0 0.0
    %444 = vmatpush1.msra.mxu0 0.0
    %445 = vmatprep.subr.mxu0 0.0
    %446 = vmatpush1.msra.mxu0 0.0
    %447 = vmatprep.subr.mxu0 0.0
    %448 = vmatpush1.msra.mxu0 0.0
    %449 = vmatprep.subr.mxu0 0.0
    %450 = vmatpush1.msra.mxu0 0.0
    %451 = vmatprep.subr.mxu0 0.0
    %452 = vmatpush1.msra.mxu0 0.0
    %453 = vmatprep.subr.mxu0 0.0
    %454 = vmatpush1.msra.mxu0 0.0
    %455 = vmatprep.subr.mxu0 0.0
    %456 = vmatpush1.msra.mxu0 0.0
    %457 = vmatprep.subr.mxu0 0.0
    %458 = vmatpush1.msra.mxu0 0.0
    %459 = vmatprep.mubr.f32.mxu0 0.0
    %v460 = vand.u32 %v130, 4294901760
    %461 = vmatmul.mubr.f32.gmra.mrb[0].mxu0 %v460
    %v462 = vpop.f32.mrb[0].mxu0
    %v463 = vadd.f32 %v242, %v462
    %v464 = vpop.f32.mrb[0].mxu0
    %465 = vmatprep.mubr.f32.mxu0 0.0
    %v466 = vand.u32 %v131, 4294901760
    %467 = vmatmul.mubr.f32.gmra.mrb[0].mxu0 %v466
    %v468 = vpop.f32.mrb[0].mxu0
    %v469 = vadd.f32 %v252, %v468
    %v470 = vpop.f32.mrb[0].mxu0
    %471 = vmatprep.mubr.f32.mxu0 0.0
    %v472 = vand.u32 %v132, 4294901760
    %473 = vmatmul.mubr.f32.gmra.mrb[0].mxu0 %v472
    %v474 = vpop.f32.mrb[0].mxu0
    %v475 = vadd.f32 %v262, %v474
    %v476 = vpop.f32.mrb[0].mxu0
    %477 = vmatprep.mubr.f32.mxu0 0.0
    %v478 = vand.u32 %v133, 4294901760
    %479 = vmatmul.mubr.f32.gmra.mrb[0].mxu0 %v478
    %v480 = vpop.f32.mrb[0].mxu0
    %v481 = vadd.f32 %v272, %v480
    %v482 = vpop.f32.mrb[0].mxu0
    %483 = vmatprep.mubr.f32.mxu0 0.0
    %v484 = vand.u32 %v134, 4294901760
    %485 = vmatmul.mubr.f32.gmra.mrb[0].mxu0 %v484
    %v486 = vpop.f32.mrb[0].mxu0
    %v487 = vadd.f32 %v282, %v486
    %v488 = vpop.f32.mrb[0].mxu0
    %489 = vmatprep.mubr.f32.mxu0 0.0
    %v490 = vand.u32 %v135, 4294901760
    %491 = vmatmul.mubr.f32.gmra.mrb[0].mxu0 %v490
    %v492 = vpop.f32.mrb[0].mxu0
    %v493 = vadd.f32 %v292, %v492
    %v494 = vpop.f32.mrb[0].mxu0
    %495 = vmatprep.mubr.f32.mxu0 0.0
    %v496 = vand.u32 %v136, 4294901760
    %497 = vmatmul.mubr.f32.gmra.mrb[0].mxu0 %v496
    %v498 = vpop.f32.mrb[0].mxu0
    %v499 = vadd.f32 %v302, %v498
    %v500 = vpop.f32.mrb[0].mxu0
    %501 = vmatprep.mubr.f32.mxu0 0.0
    %v502 = vand.u32 %v137, 4294901760
    %503 = vmatmul.mubr.f32.gmra.mrb[0].mxu0 %v502
    %v504 = vpop.f32.mrb[0].mxu0
    %v505 = vadd.f32 %v312, %v504
    %v506 = vpop.f32.mrb[0].mxu0
    %507 = vdwg.mxu0
    %508 = vmatprep.subr.mxu0 0.0
    %v509 = vand.u32 %v138, 4294901760
    %v510 = vsub.f32 %v138, %v509
    %511 = vmatpush1.msra.mxu0 %v510
    %512 = vmatprep.subr.mxu0 0.0
    %v513 = vand.u32 %v139, 4294901760
    %v514 = vsub.f32 %v139, %v513
    %515 = vmatpush1.msra.mxu0 %v514
    %516 = vmatprep.subr.mxu0 0.0
    %v517 = vand.u32 %v140, 4294901760
    %v518 = vsub.f32 %v140, %v517
    %519 = vmatpush1.msra.mxu0 %v518
    %520 = vmatprep.subr.mxu0 0.0
    %v521 = vand.u32 %v141, 4294901760
    %v522 = vsub.f32 %v141, %v521
    %523 = vmatpush1.msra.mxu0 %v522
    %524 = vmatprep.subr.mxu0 0.0
    %v525 = vand.u32 %v142, 4294901760
    %v526 = vsub.f32 %v142, %v525
    %527 = vmatpush1.msra.mxu0 %v526
    %528 = vmatprep.subr.mxu0 0.0
    %v529 = vand.u32 %v143, 4294901760
    %v530 = vsub.f32 %v143, %v529
    %531 = vmatpush1.msra.mxu0 %v530
    %532 = vmatprep.subr.mxu0 0.0
    %v533 = vand.u32 %v144, 4294901760
    %v534 = vsub.f32 %v144, %v533
    %535 = vmatpush1.msra.mxu0 %v534
    %536 = vmatprep.subr.mxu0 0.0
    %v537 = vand.u32 %v145, 4294901760
    %v538 = vsub.f32 %v145, %v537
    %539 = vmatpush1.msra.mxu0 %v538
    %540 = vmatprep.subr.mxu0 0.0
    %v541 = vand.u32 %v146, 4294901760
    %v542 = vsub.f32 %v146, %v541
    %543 = vmatpush1.msra.mxu0 %v542
    %544 = vmatprep.subr.mxu0 0.0
    %v545 = vand.u32 %v147, 4294901760
    %v546 = vsub.f32 %v147, %v545
    %547 = vmatpush1.msra.mxu0 %v546
    %548 = vmatprep.subr.mxu0 0.0
    %v549 = vand.u32 %v148, 4294901760
    %v550 = vsub.f32 %v148, %v549
    %551 = vmatpush1.msra.mxu0 %v550
    %552 = vmatprep.subr.mxu0 0.0
    %v553 = vand.u32 %v149, 4294901760
    %v554 = vsub.f32 %v149, %v553
    %555 = vmatpush1.msra.mxu0 %v554
    %556 = vmatprep.subr.mxu0 0.0
    %v557 = vand.u32 %v150, 4294901760
    %v558 = vsub.f32 %v150, %v557
    %559 = vmatpush1.msra.mxu0 %v558
    %560 = vmatprep.subr.mxu0 0.0
    %v561 = vand.u32 %v151, 4294901760
    %v562 = vsub.f32 %v151, %v561
    %563 = vmatpush1.msra.mxu0 %v562
    %564 = vmatprep.subr.mxu0 0.0
    %v565 = vand.u32 %v152, 4294901760
    %v566 = vsub.f32 %v152, %v565
    %567 = vmatpush1.msra.mxu0 %v566
    %568 = vmatprep.subr.mxu0 0.0
    %v569 = vand.u32 %v153, 4294901760
    %v570 = vsub.f32 %v153, %v569
    %571 = vmatpush1.msra.mxu0 %v570
    %572 = vmatprep.subr.mxu0 0.0
    %573 = vmatpush1.msra.mxu0 0.0
    %574 = vmatprep.subr.mxu0 0.0
    %575 = vmatpush1.msra.mxu0 0.0
    %576 = vmatprep.subr.mxu0 0.0
    %577 = vmatpush1.msra.mxu0 0.0
    %578 = vmatprep.subr.mxu0 0.0
    %579 = vmatpush1.msra.mxu0 0.0
    %580 = vmatprep.subr.mxu0 0.0
    %581 = vmatpush1.msra.mxu0 0.0
    %582 = vmatprep.subr.mxu0 0.0
    %583 = vmatpush1.msra.mxu0 0.0
    %584 = vmatprep.subr.mxu0 0.0
    %585 = vmatpush1.msra.mxu0 0.0
    %586 = vmatprep.subr.mxu0 0.0
    %587 = vmatpush1.msra.mxu0 0.0
    %588 = vmatprep.subr.mxu0 0.0
    %589 = vmatpush1.msra.mxu0 0.0
    %590 = vmatprep.subr.mxu0 0.0
    %591 = vmatpush1.msra.mxu0 0.0
    %592 = vmatprep.subr.mxu0 0.0
    %593 = vmatpush1.msra.mxu0 0.0
    %594 = vmatprep.subr.mxu0 0.0
    %595 = vmatpush1.msra.mxu0 0.0
    %596 = vmatprep.subr.mxu0 0.0
    %597 = vmatpush1.msra.mxu0 0.0
    %598 = vmatprep.subr.mxu0 0.0
    %599 = vmatpush1.msra.mxu0 0.0
    %600 = vmatprep.subr.mxu0 0.0
    %601 = vmatpush1.msra.mxu0 0.0
    %602 = vmatprep.subr.mxu0 0.0
    %603 = vmatpush1.msra.mxu0 0.0
    %604 = vmatprep.mubr.f32.mxu0 0.0
    %v605 = vand.u32 %v130, 4294901760
    %v606 = vsub.f32 %v130, %v605
    %607 = vmatmul.mubr.f32.gmra.mrb[0].mxu0 %v606
    %v608 = vpop.f32.mrb[0].mxu0
    %v609 = vadd.f32 %v463, %v608
    %v610 = vpop.f32.mrb[0].mxu0
    %611 = vmatprep.mubr.f32.mxu0 0.0
    %v612 = vand.u32 %v131, 4294901760
    %v613 = vsub.f32 %v131, %v612
    %614 = vmatmul.mubr.f32.gmra.mrb[0].mxu0 %v613
    %v615 = vpop.f32.mrb[0].mxu0
    %v616 = vadd.f32 %v469, %v615
    %v617 = vpop.f32.mrb[0].mxu0
    %618 = vmatprep.mubr.f32.mxu0 0.0
    %v619 = vand.u32 %v132, 4294901760
    %v620 = vsub.f32 %v132, %v619
    %621 = vmatmul.mubr.f32.gmra.mrb[0].mxu0 %v620
    %v622 = vpop.f32.mrb[0].mxu0
    %v623 = vadd.f32 %v475, %v622
    %v624 = vpop.f32.mrb[0].mxu0
    %625 = vmatprep.mubr.f32.mxu0 0.0
    %v626 = vand.u32 %v133, 4294901760
    %v627 = vsub.f32 %v133, %v626
    %628 = vmatmul.mubr.f32.gmra.mrb[0].mxu0 %v627
    %v629 = vpop.f32.mrb[0].mxu0
    %v630 = vadd.f32 %v481, %v629
    %v631 = vpop.f32.mrb[0].mxu0
    %632 = vmatprep.mubr.f32.mxu0 0.0
    %v633 = vand.u32 %v134, 4294901760
    %v634 = vsub.f32 %v134, %v633
    %635 = vmatmul.mubr.f32.gmra.mrb[0].mxu0 %v634
    %v636 = vpop.f32.mrb[0].mxu0
    %v637 = vadd.f32 %v487, %v636
    %v638 = vpop.f32.mrb[0].mxu0
    %639 = vmatprep.mubr.f32.mxu0 0.0
    %v640 = vand.u32 %v135, 4294901760
    %v641 = vsub.f32 %v135, %v640
    %642 = vmatmul.mubr.f32.gmra.mrb[0].mxu0 %v641
    %v643 = vpop.f32.mrb[0].mxu0
    %v644 = vadd.f32 %v493, %v643
    %v645 = vpop.f32.mrb[0].mxu0
    %646 = vmatprep.mubr.f32.mxu0 0.0
    %v647 = vand.u32 %v136, 4294901760
    %v648 = vsub.f32 %v136, %v647
    %649 = vmatmul.mubr.f32.gmra.mrb[0].mxu0 %v648
    %v650 = vpop.f32.mrb[0].mxu0
    %v651 = vadd.f32 %v499, %v650
    %v652 = vpop.f32.mrb[0].mxu0
    %653 = vmatprep.mubr.f32.mxu0 0.0
    %v654 = vand.u32 %v137, 4294901760
    %v655 = vsub.f32 %v137, %v654
    %656 = vmatmul.mubr.f32.gmra.mrb[0].mxu0 %v655
    %v657 = vpop.f32.mrb[0].mxu0
    %v658 = vadd.f32 %v505, %v657
    %v659 = vpop.f32.mrb[0].mxu0
    %660 = vdwg.mxu0
    %661 = vmatprep.subr.mxu0 0.0
    %v662 = vand.u32 %v138, 4294901760
    %663 = vmatpush1.msra.mxu0 %v662
    %664 = vmatprep.subr.mxu0 0.0
    %v665 = vand.u32 %v139, 4294901760
    %666 = vmatpush1.msra.mxu0 %v665
    %667 = vmatprep.subr.mxu0 0.0
    %v668 = vand.u32 %v140, 4294901760
    %669 = vmatpush1.msra.mxu0 %v668
    %670 = vmatprep.subr.mxu0 0.0
    %v671 = vand.u32 %v141, 4294901760
    %672 = vmatpush1.msra.mxu0 %v671
    %673 = vmatprep.subr.mxu0 0.0
    %v674 = vand.u32 %v142, 4294901760
    %675 = vmatpush1.msra.mxu0 %v674
    %676 = vmatprep.subr.mxu0 0.0
    %v677 = vand.u32 %v143, 4294901760
    %678 = vmatpush1.msra.mxu0 %v677
    %679 = vmatprep.subr.mxu0 0.0
    %v680 = vand.u32 %v144, 4294901760
    %681 = vmatpush1.msra.mxu0 %v680
    %682 = vmatprep.subr.mxu0 0.0
    %v683 = vand.u32 %v145, 4294901760
    %684 = vmatpush1.msra.mxu0 %v683
    %685 = vmatprep.subr.mxu0 0.0
    %v686 = vand.u32 %v146, 4294901760
    %687 = vmatpush1.msra.mxu0 %v686
    %688 = vmatprep.subr.mxu0 0.0
    %v689 = vand.u32 %v147, 4294901760
    %690 = vmatpush1.msra.mxu0 %v689
    %691 = vmatprep.subr.mxu0 0.0
    %v692 = vand.u32 %v148, 4294901760
    %693 = vmatpush1.msra.mxu0 %v692
    %694 = vmatprep.subr.mxu0 0.0
    %v695 = vand.u32 %v149, 4294901760
    %696 = vmatpush1.msra.mxu0 %v695
    %697 = vmatprep.subr.mxu0 0.0
    %v698 = vand.u32 %v150, 4294901760
    %699 = vmatpush1.msra.mxu0 %v698
    %700 = vmatprep.subr.mxu0 0.0
    %v701 = vand.u32 %v151, 4294901760
    %702 = vmatpush1.msra.mxu0 %v701
    %703 = vmatprep.subr.mxu0 0.0
    %v704 = vand.u32 %v152, 4294901760
    %705 = vmatpush1.msra.mxu0 %v704
    %706 = vmatprep.subr.mxu0 0.0
    %v707 = vand.u32 %v153, 4294901760
    %708 = vmatpush1.msra.mxu0 %v707
    %709 = vmatprep.subr.mxu0 0.0
    %710 = vmatpush1.msra.mxu0 0.0
    %711 = vmatprep.subr.mxu0 0.0
    %712 = vmatpush1.msra.mxu0 0.0
    %713 = vmatprep.subr.mxu0 0.0
    %714 = vmatpush1.msra.mxu0 0.0
    %715 = vmatprep.subr.mxu0 0.0
    %716 = vmatpush1.msra.mxu0 0.0
    %717 = vmatprep.subr.mxu0 0.0
    %718 = vmatpush1.msra.mxu0 0.0
    %719 = vmatprep.subr.mxu0 0.0
    %720 = vmatpush1.msra.mxu0 0.0
    %721 = vmatprep.subr.mxu0 0.0
    %722 = vmatpush1.msra.mxu0 0.0
    %723 = vmatprep.subr.mxu0 0.0
    %724 = vmatpush1.msra.mxu0 0.0
    %725 = vmatprep.subr.mxu0 0.0
    %726 = vmatpush1.msra.mxu0 0.0
    %727 = vmatprep.subr.mxu0 0.0
    %728 = vmatpush1.msra.mxu0 0.0
    %729 = vmatprep.subr.mxu0 0.0
    %730 = vmatpush1.msra.mxu0 0.0
    %731 = vmatprep.subr.mxu0 0.0
    %732 = vmatpush1.msra.mxu0 0.0
    %733 = vmatprep.subr.mxu0 0.0
    %734 = vmatpush1.msra.mxu0 0.0
    %735 = vmatprep.subr.mxu0 0.0
    %736 = vmatpush1.msra.mxu0 0.0
    %737 = vmatprep.subr.mxu0 0.0
    %738 = vmatpush1.msra.mxu0 0.0
    %739 = vmatprep.subr.mxu0 0.0
    %740 = vmatpush1.msra.mxu0 0.0
    %741 = vmatprep.mubr.f32.mxu0 0.0
    %v742 = vand.u32 %v130, 4294901760
    %v743 = vsub.f32 %v130, %v742
    %v744 = vand.u32 %v743, 4294901760
    %745 = vmatmul.mubr.f32.gmra.mrb[0].mxu0 %v744
    %v746 = vpop.f32.mrb[0].mxu0
    %v747 = vadd.f32 %v609, %v746
    %v748 = vpop.f32.mrb[0].mxu0
    %749 = vmatprep.mubr.f32.mxu0 0.0
    %v750 = vand.u32 %v131, 4294901760
    %v751 = vsub.f32 %v131, %v750
    %v752 = vand.u32 %v751, 4294901760
    %753 = vmatmul.mubr.f32.gmra.mrb[0].mxu0 %v752
    %v754 = vpop.f32.mrb[0].mxu0
    %v755 = vadd.f32 %v616, %v754
    %v756 = vpop.f32.mrb[0].mxu0
    %757 = vmatprep.mubr.f32.mxu0 0.0
    %v758 = vand.u32 %v132, 4294901760
    %v759 = vsub.f32 %v132, %v758
    %v760 = vand.u32 %v759, 4294901760
    %761 = vmatmul.mubr.f32.gmra.mrb[0].mxu0 %v760
    %v762 = vpop.f32.mrb[0].mxu0
    %v763 = vadd.f32 %v623, %v762
    %v764 = vpop.f32.mrb[0].mxu0
    %765 = vmatprep.mubr.f32.mxu0 0.0
    %v766 = vand.u32 %v133, 4294901760
    %v767 = vsub.f32 %v133, %v766
    %v768 = vand.u32 %v767, 4294901760
    %769 = vmatmul.mubr.f32.gmra.mrb[0].mxu0 %v768
    %v770 = vpop.f32.mrb[0].mxu0
    %v771 = vadd.f32 %v630, %v770
    %v772 = vpop.f32.mrb[0].mxu0
    %773 = vmatprep.mubr.f32.mxu0 0.0
    %v774 = vand.u32 %v134, 4294901760
    %v775 = vsub.f32 %v134, %v774
    %v776 = vand.u32 %v775, 4294901760
    %777 = vmatmul.mubr.f32.gmra.mrb[0].mxu0 %v776
    %v778 = vpop.f32.mrb[0].mxu0
    %v779 = vadd.f32 %v637, %v778
    %v780 = vpop.f32.mrb[0].mxu0
    %781 = vmatprep.mubr.f32.mxu0 0.0
    %v782 = vand.u32 %v135, 4294901760
    %v783 = vsub.f32 %v135, %v782
    %v784 = vand.u32 %v783, 4294901760
    %785 = vmatmul.mubr.f32.gmra.mrb[0].mxu0 %v784
    %v786 = vpop.f32.mrb[0].mxu0
    %v787 = vadd.f32 %v644, %v786
    %v788 = vpop.f32.mrb[0].mxu0
    %789 = vmatprep.mubr.f32.mxu0 0.0
    %v790 = vand.u32 %v136, 4294901760
    %v791 = vsub.f32 %v136, %v790
    %v792 = vand.u32 %v791, 4294901760
    %793 = vmatmul.mubr.f32.gmra.mrb[0].mxu0 %v792
    %v794 = vpop.f32.mrb[0].mxu0
    %v795 = vadd.f32 %v651, %v794
    %v796 = vpop.f32.mrb[0].mxu0
    %797 = vmatprep.mubr.f32.mxu0 0.0
    %v798 = vand.u32 %v137, 4294901760
    %v799 = vsub.f32 %v137, %v798
    %v800 = vand.u32 %v799, 4294901760
    %801 = vmatmul.mubr.f32.gmra.mrb[0].mxu0 %v800
    %v802 = vpop.f32.mrb[0].mxu0
    %v803 = vadd.f32 %v658, %v802
    %v804 = vpop.f32.mrb[0].mxu0
    %805 = vdwg.mxu0
    %806 = vmatprep.subr.mxu0 0.0
    %v807 = vand.u32 %v138, 4294901760
    %v808 = vsub.f32 %v138, %v807
    %v809 = vand.u32 %v808, 4294901760
    %810 = vmatpush1.msra.mxu0 %v809
    %811 = vmatprep.subr.mxu0 0.0
    %v812 = vand.u32 %v139, 4294901760
    %v813 = vsub.f32 %v139, %v812
    %v814 = vand.u32 %v813, 4294901760
    %815 = vmatpush1.msra.mxu0 %v814
    %816 = vmatprep.subr.mxu0 0.0
    %v817 = vand.u32 %v140, 4294901760
    %v818 = vsub.f32 %v140, %v817
    %v819 = vand.u32 %v818, 4294901760
    %820 = vmatpush1.msra.mxu0 %v819
    %821 = vmatprep.subr.mxu0 0.0
    %v822 = vand.u32 %v141, 4294901760
    %v823 = vsub.f32 %v141, %v822
    %v824 = vand.u32 %v823, 4294901760
    %825 = vmatpush1.msra.mxu0 %v824
    %826 = vmatprep.subr.mxu0 0.0
    %v827 = vand.u32 %v142, 4294901760
    %v828 = vsub.f32 %v142, %v827
    %v829 = vand.u32 %v828, 4294901760
    %830 = vmatpush1.msra.mxu0 %v829
    %831 = vmatprep.subr.mxu0 0.0
    %v832 = vand.u32 %v143, 4294901760
    %v833 = vsub.f32 %v143, %v832
    %v834 = vand.u32 %v833, 4294901760
    %835 = vmatpush1.msra.mxu0 %v834
    %836 = vmatprep.subr.mxu0 0.0
    %v837 = vand.u32 %v144, 4294901760
    %v838 = vsub.f32 %v144, %v837
    %v839 = vand.u32 %v838, 4294901760
    %840 = vmatpush1.msra.mxu0 %v839
    %841 = vmatprep.subr.mxu0 0.0
    %v842 = vand.u32 %v145, 4294901760
    %v843 = vsub.f32 %v145, %v842
    %v844 = vand.u32 %v843, 4294901760
    %845 = vmatpush1.msra.mxu0 %v844
    %846 = vmatprep.subr.mxu0 0.0
    %v847 = vand.u32 %v146, 4294901760
    %v848 = vsub.f32 %v146, %v847
    %v849 = vand.u32 %v848, 4294901760
    %850 = vmatpush1.msra.mxu0 %v849
    %851 = vmatprep.subr.mxu0 0.0
    %v852 = vand.u32 %v147, 4294901760
    %v853 = vsub.f32 %v147, %v852
    %v854 = vand.u32 %v853, 4294901760
    %855 = vmatpush1.msra.mxu0 %v854
    %856 = vmatprep.subr.mxu0 0.0
    %v857 = vand.u32 %v148, 4294901760
    %v858 = vsub.f32 %v148, %v857
    %v859 = vand.u32 %v858, 4294901760
    %860 = vmatpush1.msra.mxu0 %v859
    %861 = vmatprep.subr.mxu0 0.0
    %v862 = vand.u32 %v149, 4294901760
    %v863 = vsub.f32 %v149, %v862
    %v864 = vand.u32 %v863, 4294901760
    %865 = vmatpush1.msra.mxu0 %v864
    %866 = vmatprep.subr.mxu0 0.0
    %v867 = vand.u32 %v150, 4294901760
    %v868 = vsub.f32 %v150, %v867
    %v869 = vand.u32 %v868, 4294901760
    %870 = vmatpush1.msra.mxu0 %v869
    %871 = vmatprep.subr.mxu0 0.0
    %v872 = vand.u32 %v151, 4294901760
    %v873 = vsub.f32 %v151, %v872
    %v874 = vand.u32 %v873, 4294901760
    %875 = vmatpush1.msra.mxu0 %v874
    %876 = vmatprep.subr.mxu0 0.0
    %v877 = vand.u32 %v152, 4294901760
    %v878 = vsub.f32 %v152, %v877
    %v879 = vand.u32 %v878, 4294901760
    %880 = vmatpush1.msra.mxu0 %v879
    %881 = vmatprep.subr.mxu0 0.0
    %v882 = vand.u32 %v153, 4294901760
    %v883 = vsub.f32 %v153, %v882
    %v884 = vand.u32 %v883, 4294901760
    %885 = vmatpush1.msra.mxu0 %v884
    %886 = vmatprep.subr.mxu0 0.0
    %887 = vmatpush1.msra.mxu0 0.0
    %888 = vmatprep.subr.mxu0 0.0
    %889 = vmatpush1.msra.mxu0 0.0
    %890 = vmatprep.subr.mxu0 0.0
    %891 = vmatpush1.msra.mxu0 0.0
    %892 = vmatprep.subr.mxu0 0.0
    %893 = vmatpush1.msra.mxu0 0.0
    %894 = vmatprep.subr.mxu0 0.0
    %895 = vmatpush1.msra.mxu0 0.0
    %896 = vmatprep.subr.mxu0 0.0
    %897 = vmatpush1.msra.mxu0 0.0
    %898 = vmatprep.subr.mxu0 0.0
    %899 = vmatpush1.msra.mxu0 0.0
    %900 = vmatprep.subr.mxu0 0.0
    %901 = vmatpush1.msra.mxu0 0.0
    %902 = vmatprep.subr.mxu0 0.0
    %903 = vmatpush1.msra.mxu0 0.0
    %904 = vmatprep.subr.mxu0 0.0
    %905 = vmatpush1.msra.mxu0 0.0
    %906 = vmatprep.subr.mxu0 0.0
    %907 = vmatpush1.msra.mxu0 0.0
    %908 = vmatprep.subr.mxu0 0.0
    %909 = vmatpush1.msra.mxu0 0.0
    %910 = vmatprep.subr.mxu0 0.0
    %911 = vmatpush1.msra.mxu0 0.0
    %912 = vmatprep.subr.mxu0 0.0
    %913 = vmatpush1.msra.mxu0 0.0
    %914 = vmatprep.subr.mxu0 0.0
    %915 = vmatpush1.msra.mxu0 0.0
    %916 = vmatprep.subr.mxu0 0.0
    %917 = vmatpush1.msra.mxu0 0.0
    %918 = vmatprep.mubr.f32.mxu0 0.0
    %v919 = vand.u32 %v130, 4294901760
    %920 = vmatmul.mubr.f32.gmra.mrb[0].mxu0 %v919
    %v921 = vpop.f32.mrb[0].mxu0
    %v922 = vadd.f32 %v747, %v921
    %v923 = vpop.f32.mrb[0].mxu0
    %924 = vmatprep.mubr.f32.mxu0 0.0
    %v925 = vand.u32 %v131, 4294901760
    %926 = vmatmul.mubr.f32.gmra.mrb[0].mxu0 %v925
    %v927 = vpop.f32.mrb[0].mxu0
    %v928 = vadd.f32 %v755, %v927
    %v929 = vpop.f32.mrb[0].mxu0
    %930 = vmatprep.mubr.f32.mxu0 0.0
    %v931 = vand.u32 %v132, 4294901760
    %932 = vmatmul.mubr.f32.gmra.mrb[0].mxu0 %v931
    %v933 = vpop.f32.mrb[0].mxu0
    %v934 = vadd.f32 %v763, %v933
    %v935 = vpop.f32.mrb[0].mxu0
    %936 = vmatprep.mubr.f32.mxu0 0.0
    %v937 = vand.u32 %v133, 4294901760
    %938 = vmatmul.mubr.f32.gmra.mrb[0].mxu0 %v937
    %v939 = vpop.f32.mrb[0].mxu0
    %v940 = vadd.f32 %v771, %v939
    %v941 = vpop.f32.mrb[0].mxu0
    %942 = vmatprep.mubr.f32.mxu0 0.0
    %v943 = vand.u32 %v134, 4294901760
    %944 = vmatmul.mubr.f32.gmra.mrb[0].mxu0 %v943
    %v945 = vpop.f32.mrb[0].mxu0
    %v946 = vadd.f32 %v779, %v945
    %v947 = vpop.f32.mrb[0].mxu0
    %948 = vmatprep.mubr.f32.mxu0 0.0
    %v949 = vand.u32 %v135, 4294901760
    %950 = vmatmul.mubr.f32.gmra.mrb[0].mxu0 %v949
    %v951 = vpop.f32.mrb[0].mxu0
    %v952 = vadd.f32 %v787, %v951
    %v953 = vpop.f32.mrb[0].mxu0
    %954 = vmatprep.mubr.f32.mxu0 0.0
    %v955 = vand.u32 %v136, 4294901760
    %956 = vmatmul.mubr.f32.gmra.mrb[0].mxu0 %v955
    %v957 = vpop.f32.mrb[0].mxu0
    %v958 = vadd.f32 %v795, %v957
    %v959 = vpop.f32.mrb[0].mxu0
    %960 = vmatprep.mubr.f32.mxu0 0.0
    %v961 = vand.u32 %v137, 4294901760
    %962 = vmatmul.mubr.f32.gmra.mrb[0].mxu0 %v961
    %v963 = vpop.f32.mrb[0].mxu0
    %v964 = vadd.f32 %v803, %v963
    %v965 = vpop.f32.mrb[0].mxu0
    %966 = vdwg.mxu0
    %967 = vmatprep.subr.mxu0 0.0
    %v968 = vand.u32 %v138, 4294901760
    %969 = vmatpush1.msra.mxu0 %v968
    %970 = vmatprep.subr.mxu0 0.0
    %v971 = vand.u32 %v139, 4294901760
    %972 = vmatpush1.msra.mxu0 %v971
    %973 = vmatprep.subr.mxu0 0.0
    %v974 = vand.u32 %v140, 4294901760
    %975 = vmatpush1.msra.mxu0 %v974
    %976 = vmatprep.subr.mxu0 0.0
    %v977 = vand.u32 %v141, 4294901760
    %978 = vmatpush1.msra.mxu0 %v977
    %979 = vmatprep.subr.mxu0 0.0
    %v980 = vand.u32 %v142, 4294901760
    %981 = vmatpush1.msra.mxu0 %v980
    %982 = vmatprep.subr.mxu0 0.0
    %v983 = vand.u32 %v143, 4294901760
    %984 = vmatpush1.msra.mxu0 %v983
    %985 = vmatprep.subr.mxu0 0.0
    %v986 = vand.u32 %v144, 4294901760
    %987 = vmatpush1.msra.mxu0 %v986
    %988 = vmatprep.subr.mxu0 0.0
    %v989 = vand.u32 %v145, 4294901760
    %990 = vmatpush1.msra.mxu0 %v989
    %991 = vmatprep.subr.mxu0 0.0
    %v992 = vand.u32 %v146, 4294901760
    %993 = vmatpush1.msra.mxu0 %v992
    %994 = vmatprep.subr.mxu0 0.0
    %v995 = vand.u32 %v147, 4294901760
    %996 = vmatpush1.msra.mxu0 %v995
    %997 = vmatprep.subr.mxu0 0.0
    %v998 = vand.u32 %v148, 4294901760
    %999 = vmatpush1.msra.mxu0 %v998
    %1000 = vmatprep.subr.mxu0 0.0
    %v1001 = vand.u32 %v149, 4294901760
    %1002 = vmatpush1.msra.mxu0 %v1001
    %1003 = vmatprep.subr.mxu0 0.0
    %v1004 = vand.u32 %v150, 4294901760
    %1005 = vmatpush1.msra.mxu0 %v1004
    %1006 = vmatprep.subr.mxu0 0.0
    %v1007 = vand.u32 %v151, 4294901760
    %1008 = vmatpush1.msra.mxu0 %v1007
    %1009 = vmatprep.subr.mxu0 0.0
    %v1010 = vand.u32 %v152, 4294901760
    %1011 = vmatpush1.msra.mxu0 %v1010
    %1012 = vmatprep.subr.mxu0 0.0
    %v1013 = vand.u32 %v153, 4294901760
    %1014 = vmatpush1.msra.mxu0 %v1013
    %1015 = vmatprep.subr.mxu0 0.0
    %1016 = vmatpush1.msra.mxu0 0.0
    %1017 = vmatprep.subr.mxu0 0.0
    %1018 = vmatpush1.msra.mxu0 0.0
    %1019 = vmatprep.subr.mxu0 0.0
    %1020 = vmatpush1.msra.mxu0 0.0
    %1021 = vmatprep.subr.mxu0 0.0
    %1022 = vmatpush1.msra.mxu0 0.0
    %1023 = vmatprep.subr.mxu0 0.0
    %1024 = vmatpush1.msra.mxu0 0.0
    %1025 = vmatprep.subr.mxu0 0.0
    %1026 = vmatpush1.msra.mxu0 0.0
    %1027 = vmatprep.subr.mxu0 0.0
    %1028 = vmatpush1.msra.mxu0 0.0
    %1029 = vmatprep.subr.mxu0 0.0
    %1030 = vmatpush1.msra.mxu0 0.0
    %1031 = vmatprep.subr.mxu0 0.0
    %1032 = vmatpush1.msra.mxu0 0.0
    %1033 = vmatprep.subr.mxu0 0.0
    %1034 = vmatpush1.msra.mxu0 0.0
    %1035 = vmatprep.subr.mxu0 0.0
    %1036 = vmatpush1.msra.mxu0 0.0
    %1037 = vmatprep.subr.mxu0 0.0
    %1038 = vmatpush1.msra.mxu0 0.0
    %1039 = vmatprep.subr.mxu0 0.0
    %1040 = vmatpush1.msra.mxu0 0.0
    %1041 = vmatprep.subr.mxu0 0.0
    %1042 = vmatpush1.msra.mxu0 0.0
    %1043 = vmatprep.subr.mxu0 0.0
    %1044 = vmatpush1.msra.mxu0 0.0
    %1045 = vmatprep.subr.mxu0 0.0
    %1046 = vmatpush1.msra.mxu0 0.0
    %1047 = vmatprep.mubr.f32.mxu0 0.0
    %v1048 = vand.u32 %v130, 4294901760
    %1049 = vmatmul.mubr.f32.gmra.mrb[0].mxu0 %v1048
    %v1050 = vpop.f32.mrb[0].mxu0
    %v1051 = vadd.f32 %v922, %v1050
    %v1052 = vpop.f32.mrb[0].mxu0
    %1053 = vmatprep.mubr.f32.mxu0 0.0
    %v1054 = vand.u32 %v131, 4294901760
    %1055 = vmatmul.mubr.f32.gmra.mrb[0].mxu0 %v1054
    %v1056 = vpop.f32.mrb[0].mxu0
    %v1057 = vadd.f32 %v928, %v1056
    %v1058 = vpop.f32.mrb[0].mxu0
    %1059 = vmatprep.mubr.f32.mxu0 0.0
    %v1060 = vand.u32 %v132, 4294901760
    %1061 = vmatmul.mubr.f32.gmra.mrb[0].mxu0 %v1060
    %v1062 = vpop.f32.mrb[0].mxu0
    %v1063 = vadd.f32 %v934, %v1062
    %v1064 = vpop.f32.mrb[0].mxu0
    %1065 = vmatprep.mubr.f32.mxu0 0.0
    %v1066 = vand.u32 %v133, 4294901760
    %1067 = vmatmul.mubr.f32.gmra.mrb[0].mxu0 %v1066
    %v1068 = vpop.f32.mrb[0].mxu0
    %v1069 = vadd.f32 %v940, %v1068
    %v1070 = vpop.f32.mrb[0].mxu0
    %1071 = vmatprep.mubr.f32.mxu0 0.0
    %v1072 = vand.u32 %v134, 4294901760
    %1073 = vmatmul.mubr.f32.gmra.mrb[0].mxu0 %v1072
    %v1074 = vpop.f32.mrb[0].mxu0
    %v1075 = vadd.f32 %v946, %v1074
    %v1076 = vpop.f32.mrb[0].mxu0
    %1077 = vmatprep.mubr.f32.mxu0 0.0
    %v1078 = vand.u32 %v135, 4294901760
    %1079 = vmatmul.mubr.f32.gmra.mrb[0].mxu0 %v1078
    %v1080 = vpop.f32.mrb[0].mxu0
    %v1081 = vadd.f32 %v952, %v1080
    %v1082 = vpop.f32.mrb[0].mxu0
    %1083 = vmatprep.mubr.f32.mxu0 0.0
    %v1084 = vand.u32 %v136, 4294901760
    %1085 = vmatmul.mubr.f32.gmra.mrb[0].mxu0 %v1084
    %v1086 = vpop.f32.mrb[0].mxu0
    %v1087 = vadd.f32 %v958, %v1086
    %v1088 = vpop.f32.mrb[0].mxu0
    %1089 = vmatprep.mubr.f32.mxu0 0.0
    %v1090 = vand.u32 %v137, 4294901760
    %1091 = vmatmul.mubr.f32.gmra.mrb[0].mxu0 %v1090
    %v1092 = vpop.f32.mrb[0].mxu0
    %v1093 = vadd.f32 %v964, %v1092
    %v1094 = vpop.f32.mrb[0].mxu0
    %1095 = vdwg.mxu0
    %1096 = vst [vmem:[#allocation4] sm:$0xff] %v1051
    %1097 = vst [vmem:[#allocation4 + $0x8] sm:$0xff] %v1057
    %1098 = vst [vmem:[#allocation4 + $0x10] sm:$0xff] %v1063
    %1099 = vst [vmem:[#allocation4 + $0x18] sm:$0xff] %v1069
    %1100 = vst [vmem:[#allocation4 + $0x20] sm:$0xff] %v1075
    %1101 = vst [vmem:[#allocation4 + $0x28] sm:$0xff] %v1081
    %1102 = vst [vmem:[#allocation4 + $0x30] sm:$0xff] %v1087
    %1103 = vst [vmem:[#allocation4 + $0x38] sm:$0xff] %v1093
    %v1104 = vld [vmem:[%s2] sm:$0xff]
    %v1105 = vld [vmem:[%s2 + $0x8] sm:$0xff]
    %v1106 = vld [vmem:[%s2 + $0x10] sm:$0xff]
    %v1107 = vld [vmem:[%s2 + $0x18] sm:$0xff]
    %v1108 = vld [vmem:[%s2 + $0x20] sm:$0xff]
    %v1109 = vld [vmem:[%s2 + $0x28] sm:$0xff]
    %v1110 = vld [vmem:[%s2 + $0x30] sm:$0xff]
    %v1111 = vld [vmem:[%s2 + $0x38] sm:$0xff]
    %1113 = vset.pattern.permute.xlu0 0
    %1114 = vperm.xlu0 %1113, %v1104
    %v1115 = vpop.permute.xlu0 %1114
    %1118 = vset.pattern.permute.xlu0 0
    %1119 = vperm.xlu0 %1118, %v1105
    %v1120 = vpop.permute.xlu0 %1119
    %1123 = vset.pattern.permute.xlu0 0
    %1124 = vperm.xlu0 %1123, %v1106
    %v1125 = vpop.permute.xlu0 %1124
    %1128 = vset.pattern.permute.xlu0 0
    %1129 = vperm.xlu0 %1128, %v1107
    %v1130 = vpop.permute.xlu0 %1129
    %1133 = vset.pattern.permute.xlu0 0
    %1134 = vperm.xlu0 %1133, %v1108
    %v1135 = vpop.permute.xlu0 %1134
    %1138 = vset.pattern.permute.xlu0 0
    %1139 = vperm.xlu0 %1138, %v1109
    %v1140 = vpop.permute.xlu0 %1139
    %1143 = vset.pattern.permute.xlu0 0
    %1144 = vperm.xlu0 %1143, %v1110
    %v1145 = vpop.permute.xlu0 %1144
    %1148 = vset.pattern.permute.xlu0 0
    %1149 = vperm.xlu0 %1148, %v1111
    %v1150 = vpop.permute.xlu0 %1149
    %v1152 = vld [vmem:[%s3] sm:$0xff]
    %v1153 = vld [vmem:[%s3 + $0x8] sm:$0xff]
    %v1154 = vld [vmem:[%s3 + $0x10] sm:$0xff]
    %v1155 = vld [vmem:[%s3 + $0x18] sm:$0xff]
    %v1156 = vld [vmem:[%s3 + $0x20] sm:$0xff]
    %v1157 = vld [vmem:[%s3 + $0x28] sm:$0xff]
    %v1158 = vld [vmem:[%s3 + $0x30] sm:$0xff]
    %v1159 = vld [vmem:[%s3 + $0x38] sm:$0xff]
    %1161 = vset.pattern.permute.xlu0 0
    %1162 = vperm.xlu0 %1161, %v1152
    %v1163 = vpop.permute.xlu0 %1162
    %1166 = vset.pattern.permute.xlu0 0
    %1167 = vperm.xlu0 %1166, %v1153
    %v1168 = vpop.permute.xlu0 %1167
    %1171 = vset.pattern.permute.xlu0 0
    %1172 = vperm.xlu0 %1171, %v1154
    %v1173 = vpop.permute.xlu0 %1172
    %1176 = vset.pattern.permute.xlu0 0
    %1177 = vperm.xlu0 %1176, %v1155
    %v1178 = vpop.permute.xlu0 %1177
    %1181 = vset.pattern.permute.xlu0 0
    %1182 = vperm.xlu0 %1181, %v1156
    %v1183 = vpop.permute.xlu0 %1182
    %1186 = vset.pattern.permute.xlu0 0
    %1187 = vperm.xlu0 %1186, %v1157
    %v1188 = vpop.permute.xlu0 %1187
    %1191 = vset.pattern.permute.xlu0 0
    %1192 = vperm.xlu0 %1191, %v1158
    %v1193 = vpop.permute.xlu0 %1192
    %1196 = vset.pattern.permute.xlu0 0
    %1197 = vperm.xlu0 %1196, %v1159
    %v1198 = vpop.permute.xlu0 %1197
    %vm1200 = vcmask 130048
    %v1201 = vsel %vm1200, %v1115, %v1163
    %v1202 = vsel %vm1200, %v1120, %v1168
    %v1203 = vsel %vm1200, %v1125, %v1173
    %v1204 = vsel %vm1200, %v1130, %v1178
    %v1205 = vsel %vm1200, %v1135, %v1183
    %v1206 = vsel %vm1200, %v1140, %v1188
    %v1207 = vsel %vm1200, %v1145, %v1193
    %v1208 = vsel %vm1200, %v1150, %v1198
    %vm1209 = vcmask 261120
    %1210 = vst.msk [vmem:[#allocation5] sm:$0xff] %vm1209, %v1201
    %1211 = vst.msk [vmem:[#allocation5 + $0x8] sm:$0xff] %vm1209, %v1202
    %1212 = vst.msk [vmem:[#allocation5 + $0x10] sm:$0xff] %vm1209, %v1203
    %1213 = vst.msk [vmem:[#allocation5 + $0x18] sm:$0xff] %vm1209, %v1204
    %1214 = vst.msk [vmem:[#allocation5 + $0x20] sm:$0xff] %vm1209, %v1205
    %1215 = vst.msk [vmem:[#allocation5 + $0x28] sm:$0xff] %vm1209, %v1206
    %1216 = vst.msk [vmem:[#allocation5 + $0x30] sm:$0xff] %vm1209, %v1207
    %1217 = vst.msk [vmem:[#allocation5 + $0x38] sm:$0xff] %vm1209, %v1208
    %v1218 = vld [vmem:[%s5] sm:$0xff]
    %v1219 = vld [vmem:[%s5 + $0x8] sm:$0xff]
    %v1220 = vld [vmem:[%s5 + $0x10] sm:$0xff]
    %v1221 = vld [vmem:[%s5 + $0x18] sm:$0xff]
    %v1222 = vld [vmem:[#allocation2] sm:$0xff]
    %v1223 = vld [vmem:[#allocation3] sm:$0xff]
    %v1224 = vld [vmem:[#allocation4] sm:$0xff]
    %v1226 = vsel %vm1209, %v1222, 0
    %1228 = vmatprep.subr.mxu0 0.0
    %v1229 = vand.u32 %v1218, 4294901760
    %1230 = vmatpush1.msra.mxu0 %v1229
    %1231 = vmatprep.subr.mxu0 0.0
    %v1232 = vand.u32 %v1219, 4294901760
    %1233 = vmatpush1.msra.mxu0 %v1232
    %1234 = vmatprep.subr.mxu0 0.0
    %v1235 = vand.u32 %v1220, 4294901760
    %1236 = vmatpush1.msra.mxu0 %v1235
    %1237 = vmatprep.subr.mxu0 0.0
    %v1238 = vand.u32 %v1221, 4294901760
    %1239 = vmatpush1.msra.mxu0 %v1238
    %1240 = vmatprep.subr.mxu0 0.0
    %1241 = vmatpush1.msra.mxu0 0.0
    %1242 = vmatprep.subr.mxu0 0.0
    %1243 = vmatpush1.msra.mxu0 0.0
    %1244 = vmatprep.subr.mxu0 0.0
    %1245 = vmatpush1.msra.mxu0 0.0
    %1246 = vmatprep.subr.mxu0 0.0
    %1247 = vmatpush1.msra.mxu0 0.0
    %1248 = vmatprep.subr.mxu0 0.0
    %1249 = vmatpush1.msra.mxu0 0.0
    %1250 = vmatprep.subr.mxu0 0.0
    %1251 = vmatpush1.msra.mxu0 0.0
    %1252 = vmatprep.subr.mxu0 0.0
    %1253 = vmatpush1.msra.mxu0 0.0
    %1254 = vmatprep.subr.mxu0 0.0
    %1255 = vmatpush1.msra.mxu0 0.0
    %1256 = vmatprep.subr.mxu0 0.0
    %1257 = vmatpush1.msra.mxu0 0.0
    %1258 = vmatprep.subr.mxu0 0.0
    %1259 = vmatpush1.msra.mxu0 0.0
    %1260 = vmatprep.subr.mxu0 0.0
    %1261 = vmatpush1.msra.mxu0 0.0
    %1262 = vmatprep.subr.mxu0 0.0
    %1263 = vmatpush1.msra.mxu0 0.0
    %1264 = vmatprep.subr.mxu0 0.0
    %1265 = vmatpush1.msra.mxu0 0.0
    %1266 = vmatprep.subr.mxu0 0.0
    %1267 = vmatpush1.msra.mxu0 0.0
    %1268 = vmatprep.subr.mxu0 0.0
    %1269 = vmatpush1.msra.mxu0 0.0
    %1270 = vmatprep.subr.mxu0 0.0
    %1271 = vmatpush1.msra.mxu0 0.0
    %1272 = vmatprep.subr.mxu0 0.0
    %1273 = vmatpush1.msra.mxu0 0.0
    %1274 = vmatprep.subr.mxu0 0.0
    %1275 = vmatpush1.msra.mxu0 0.0
    %1276 = vmatprep.subr.mxu0 0.0
    %1277 = vmatpush1.msra.mxu0 0.0
    %1278 = vmatprep.subr.mxu0 0.0
    %1279 = vmatpush1.msra.mxu0 0.0
    %1280 = vmatprep.subr.mxu0 0.0
    %1281 = vmatpush1.msra.mxu0 0.0
    %1282 = vmatprep.subr.mxu0 0.0
    %1283 = vmatpush1.msra.mxu0 0.0
    %1284 = vmatprep.subr.mxu0 0.0
    %1285 = vmatpush1.msra.mxu0 0.0
    %1286 = vmatprep.subr.mxu0 0.0
    %1287 = vmatpush1.msra.mxu0 0.0
    %1288 = vmatprep.subr.mxu0 0.0
    %1289 = vmatpush1.msra.mxu0 0.0
    %1290 = vmatprep.subr.mxu0 0.0
    %1291 = vmatpush1.msra.mxu0 0.0
    %1292 = vmatprep.subr.mxu0 0.0
    %1293 = vmatpush1.msra.mxu0 0.0
    %1294 = vmatprep.subr.mxu0 0.0
    %1295 = vmatpush1.msra.mxu0 0.0
    %1296 = vmatprep.mubr.f32.mxu0 0.0
    %v1297 = vand.u32 %v1226, 4294901760
    %v1298 = vsub.f32 %v1226, %v1297
    %v1299 = vand.u32 %v1298, 4294901760
    %v1300 = vsub.f32 %v1298, %v1299
    %v1301 = vand.u32 %v1300, 4294901760
    %1302 = vmatmul.mubr.f32.gmra.mrb[0].mxu0 %v1301
    %v1303 = vpop.f32.mrb[0].mxu0
    %v1304 = vadd.f32 0.0, %v1303
    %v1305 = vpop.f32.mrb[0].mxu0
    %1306 = vdwg.mxu0
    %1307 = vmatprep.subr.mxu0 0.0
    %v1308 = vand.u32 %v1218, 4294901760
    %v1309 = vsub.f32 %v1218, %v1308
    %v1310 = vand.u32 %v1309, 4294901760
    %v1311 = vsub.f32 %v1309, %v1310
    %v1312 = vand.u32 %v1311, 4294901760
    %1313 = vmatpush1.msra.mxu0 %v1312
    %1314 = vmatprep.subr.mxu0 0.0
    %v1315 = vand.u32 %v1219, 4294901760
    %v1316 = vsub.f32 %v1219, %v1315
    %v1317 = vand.u32 %v1316, 4294901760
    %v1318 = vsub.f32 %v1316, %v1317
    %v1319 = vand.u32 %v1318, 4294901760
    %1320 = vmatpush1.msra.mxu0 %v1319
    %1321 = vmatprep.subr.mxu0 0.0
    %v1322 = vand.u32 %v1220, 4294901760
    %v1323 = vsub.f32 %v1220, %v1322
    %v1324 = vand.u32 %v1323, 4294901760
    %v1325 = vsub.f32 %v1323, %v1324
    %v1326 = vand.u32 %v1325, 4294901760
    %1327 = vmatpush1.msra.mxu0 %v1326
    %1328 = vmatprep.subr.mxu0 0.0
    %v1329 = vand.u32 %v1221, 4294901760
    %v1330 = vsub.f32 %v1221, %v1329
    %v1331 = vand.u32 %v1330, 4294901760
    %v1332 = vsub.f32 %v1330, %v1331
    %v1333 = vand.u32 %v1332, 4294901760
    %1334 = vmatpush1.msra.mxu0 %v1333
    %1335 = vmatprep.subr.mxu0 0.0
    %1336 = vmatpush1.msra.mxu0 0.0
    %1337 = vmatprep.subr.mxu0 0.0
    %1338 = vmatpush1.msra.mxu0 0.0
    %1339 = vmatprep.subr.mxu0 0.0
    %1340 = vmatpush1.msra.mxu0 0.0
    %1341 = vmatprep.subr.mxu0 0.0
    %1342 = vmatpush1.msra.mxu0 0.0
    %1343 = vmatprep.subr.mxu0 0.0
    %1344 = vmatpush1.msra.mxu0 0.0
    %1345 = vmatprep.subr.mxu0 0.0
    %1346 = vmatpush1.msra.mxu0 0.0
    %1347 = vmatprep.subr.mxu0 0.0
    %1348 = vmatpush1.msra.mxu0 0.0
    %1349 = vmatprep.subr.mxu0 0.0
    %1350 = vmatpush1.msra.mxu0 0.0
    %1351 = vmatprep.subr.mxu0 0.0
    %1352 = vmatpush1.msra.mxu0 0.0
    %1353 = vmatprep.subr.mxu0 0.0
    %1354 = vmatpush1.msra.mxu0 0.0
    %1355 = vmatprep.subr.mxu0 0.0
    %1356 = vmatpush1.msra.mxu0 0.0
    %1357 = vmatprep.subr.mxu0 0.0
    %1358 = vmatpush1.msra.mxu0 0.0
    %1359 = vmatprep.subr.mxu0 0.0
    %1360 = vmatpush1.msra.mxu0 0.0
    %1361 = vmatprep.subr.mxu0 0.0
    %1362 = vmatpush1.msra.mxu0 0.0
    %1363 = vmatprep.subr.mxu0 0.0
    %1364 = vmatpush1.msra.mxu0 0.0
    %1365 = vmatprep.subr.mxu0 0.0
    %1366 = vmatpush1.msra.mxu0 0.0
    %1367 = vmatprep.subr.mxu0 0.0
    %1368 = vmatpush1.msra.mxu0 0.0
    %1369 = vmatprep.subr.mxu0 0.0
    %1370 = vmatpush1.msra.mxu0 0.0
    %1371 = vmatprep.subr.mxu0 0.0
    %1372 = vmatpush1.msra.mxu0 0.0
    %1373 = vmatprep.subr.mxu0 0.0
    %1374 = vmatpush1.msra.mxu0 0.0
    %1375 = vmatprep.subr.mxu0 0.0
    %1376 = vmatpush1.msra.mxu0 0.0
    %1377 = vmatprep.subr.mxu0 0.0
    %1378 = vmatpush1.msra.mxu0 0.0
    %1379 = vmatprep.subr.mxu0 0.0
    %1380 = vmatpush1.msra.mxu0 0.0
    %1381 = vmatprep.subr.mxu0 0.0
    %1382 = vmatpush1.msra.mxu0 0.0
    %1383 = vmatprep.subr.mxu0 0.0
    %1384 = vmatpush1.msra.mxu0 0.0
    %1385 = vmatprep.subr.mxu0 0.0
    %1386 = vmatpush1.msra.mxu0 0.0
    %1387 = vmatprep.subr.mxu0 0.0
    %1388 = vmatpush1.msra.mxu0 0.0
    %1389 = vmatprep.subr.mxu0 0.0
    %1390 = vmatpush1.msra.mxu0 0.0
    %1391 = vmatprep.mubr.f32.mxu0 0.0
    %v1392 = vand.u32 %v1226, 4294901760
    %1393 = vmatmul.mubr.f32.gmra.mrb[0].mxu0 %v1392
    %v1394 = vpop.f32.mrb[0].mxu0
    %v1395 = vadd.f32 %v1304, %v1394
    %v1396 = vpop.f32.mrb[0].mxu0
    %1397 = vdwg.mxu0
    %1398 = vmatprep.subr.mxu0 0.0
    %v1399 = vand.u32 %v1218, 4294901760
    %v1400 = vsub.f32 %v1218, %v1399
    %1401 = vmatpush1.msra.mxu0 %v1400
    %1402 = vmatprep.subr.mxu0 0.0
    %v1403 = vand.u32 %v1219, 4294901760
    %v1404 = vsub.f32 %v1219, %v1403
    %1405 = vmatpush1.msra.mxu0 %v1404
    %1406 = vmatprep.subr.mxu0 0.0
    %v1407 = vand.u32 %v1220, 4294901760
    %v1408 = vsub.f32 %v1220, %v1407
    %1409 = vmatpush1.msra.mxu0 %v1408
    %1410 = vmatprep.subr.mxu0 0.0
    %v1411 = vand.u32 %v1221, 4294901760
    %v1412 = vsub.f32 %v1221, %v1411
    %1413 = vmatpush1.msra.mxu0 %v1412
    %1414 = vmatprep.subr.mxu0 0.0
    %1415 = vmatpush1.msra.mxu0 0.0
    %1416 = vmatprep.subr.mxu0 0.0
    %1417 = vmatpush1.msra.mxu0 0.0
    %1418 = vmatprep.subr.mxu0 0.0
    %1419 = vmatpush1.msra.mxu0 0.0
    %1420 = vmatprep.subr.mxu0 0.0
    %1421 = vmatpush1.msra.mxu0 0.0
    %1422 = vmatprep.subr.mxu0 0.0
    %1423 = vmatpush1.msra.mxu0 0.0
    %1424 = vmatprep.subr.mxu0 0.0
    %1425 = vmatpush1.msra.mxu0 0.0
    %1426 = vmatprep.subr.mxu0 0.0
    %1427 = vmatpush1.msra.mxu0 0.0
    %1428 = vmatprep.subr.mxu0 0.0
    %1429 = vmatpush1.msra.mxu0 0.0
    %1430 = vmatprep.subr.mxu0 0.0
    %1431 = vmatpush1.msra.mxu0 0.0
    %1432 = vmatprep.subr.mxu0 0.0
    %1433 = vmatpush1.msra.mxu0 0.0
    %1434 = vmatprep.subr.mxu0 0.0
    %1435 = vmatpush1.msra.mxu0 0.0
    %1436 = vmatprep.subr.mxu0 0.0
    %1437 = vmatpush1.msra.mxu0 0.0
    %1438 = vmatprep.subr.mxu0 0.0
    %1439 = vmatpush1.msra.mxu0 0.0
    %1440 = vmatprep.subr.mxu0 0.0
    %1441 = vmatpush1.msra.mxu0 0.0
    %1442 = vmatprep.subr.mxu0 0.0
    %1443 = vmatpush1.msra.mxu0 0.0
    %1444 = vmatprep.subr.mxu0 0.0
    %1445 = vmatpush1.msra.mxu0 0.0
    %1446 = vmatprep.subr.mxu0 0.0
    %1447 = vmatpush1.msra.mxu0 0.0
    %1448 = vmatprep.subr.mxu0 0.0
    %1449 = vmatpush1.msra.mxu0 0.0
    %1450 = vmatprep.subr.mxu0 0.0
    %1451 = vmatpush1.msra.mxu0 0.0
    %1452 = vmatprep.subr.mxu0 0.0
    %1453 = vmatpush1.msra.mxu0 0.0
    %1454 = vmatprep.subr.mxu0 0.0
    %1455 = vmatpush1.msra.mxu0 0.0
    %1456 = vmatprep.subr.mxu0 0.0
    %1457 = vmatpush1.msra.mxu0 0.0
    %1458 = vmatprep.subr.mxu0 0.0
    %1459 = vmatpush1.msra.mxu0 0.0
    %1460 = vmatprep.subr.mxu0 0.0
    %1461 = vmatpush1.msra.mxu0 0.0
    %1462 = vmatprep.subr.mxu0 0.0
    %1463 = vmatpush1.msra.mxu0 0.0
    %1464 = vmatprep.subr.mxu0 0.0
    %1465 = vmatpush1.msra.mxu0 0.0
    %1466 = vmatprep.subr.mxu0 0.0
    %1467 = vmatpush1.msra.mxu0 0.0
    %1468 = vmatprep.subr.mxu0 0.0
    %1469 = vmatpush1.msra.mxu0 0.0
    %1470 = vmatprep.mubr.f32.mxu0 0.0
    %v1471 = vand.u32 %v1226, 4294901760
    %v1472 = vsub.f32 %v1226, %v1471
    %1473 = vmatmul.mubr.f32.gmra.mrb[0].mxu0 %v1472
    %v1474 = vpop.f32.mrb[0].mxu0
    %v1475 = vadd.f32 %v1395, %v1474
    %v1476 = vpop.f32.mrb[0].mxu0
    %1477 = vdwg.mxu0
    %1478 = vmatprep.subr.mxu0 0.0
    %v1479 = vand.u32 %v1218, 4294901760
    %1480 = vmatpush1.msra.mxu0 %v1479
    %1481 = vmatprep.subr.mxu0 0.0
    %v1482 = vand.u32 %v1219, 4294901760
    %1483 = vmatpush1.msra.mxu0 %v1482
    %1484 = vmatprep.subr.mxu0 0.0
    %v1485 = vand.u32 %v1220, 4294901760
    %1486 = vmatpush1.msra.mxu0 %v1485
    %1487 = vmatprep.subr.mxu0 0.0
    %v1488 = vand.u32 %v1221, 4294901760
    %1489 = vmatpush1.msra.mxu0 %v1488
    %1490 = vmatprep.subr.mxu0 0.0
    %1491 = vmatpush1.msra.mxu0 0.0
    %1492 = vmatprep.subr.mxu0 0.0
    %1493 = vmatpush1.msra.mxu0 0.0
    %1494 = vmatprep.subr.mxu0 0.0
    %1495 = vmatpush1.msra.mxu0 0.0
    %1496 = vmatprep.subr.mxu0 0.0
    %1497 = vmatpush1.msra.mxu0 0.0
    %1498 = vmatprep.subr.mxu0 0.0
    %1499 = vmatpush1.msra.mxu0 0.0
    %1500 = vmatprep.subr.mxu0 0.0
    %1501 = vmatpush1.msra.mxu0 0.0
    %1502 = vmatprep.subr.mxu0 0.0
    %1503 = vmatpush1.msra.mxu0 0.0
    %1504 = vmatprep.subr.mxu0 0.0
    %1505 = vmatpush1.msra.mxu0 0.0
    %1506 = vmatprep.subr.mxu0 0.0
    %1507 = vmatpush1.msra.mxu0 0.0
    %1508 = vmatprep.subr.mxu0 0.0
    %1509 = vmatpush1.msra.mxu0 0.0
    %1510 = vmatprep.subr.mxu0 0.0
    %1511 = vmatpush1.msra.mxu0 0.0
    %1512 = vmatprep.subr.mxu0 0.0
    %1513 = vmatpush1.msra.mxu0 0.0
    %1514 = vmatprep.subr.mxu0 0.0
    %1515 = vmatpush1.msra.mxu0 0.0
    %1516 = vmatprep.subr.mxu0 0.0
    %1517 = vmatpush1.msra.mxu0 0.0
    %1518 = vmatprep.subr.mxu0 0.0
    %1519 = vmatpush1.msra.mxu0 0.0
    %1520 = vmatprep.subr.mxu0 0.0
    %1521 = vmatpush1.msra.mxu0 0.0
    %1522 = vmatprep.subr.mxu0 0.0
    %1523 = vmatpush1.msra.mxu0 0.0
    %1524 = vmatprep.subr.mxu0 0.0
    %1525 = vmatpush1.msra.mxu0 0.0
    %1526 = vmatprep.subr.mxu0 0.0
    %1527 = vmatpush1.msra.mxu0 0.0
    %1528 = vmatprep.subr.mxu0 0.0
    %1529 = vmatpush1.msra.mxu0 0.0
    %1530 = vmatprep.subr.mxu0 0.0
    %1531 = vmatpush1.msra.mxu0 0.0
    %1532 = vmatprep.subr.mxu0 0.0
    %1533 = vmatpush1.msra.mxu0 0.0
    %1534 = vmatprep.subr.mxu0 0.0
    %1535 = vmatpush1.msra.mxu0 0.0
    %1536 = vmatprep.subr.mxu0 0.0
    %1537 = vmatpush1.msra.mxu0 0.0
    %1538 = vmatprep.subr.mxu0 0.0
    %1539 = vmatpush1.msra.mxu0 0.0
    %1540 = vmatprep.subr.mxu0 0.0
    %1541 = vmatpush1.msra.mxu0 0.0
    %1542 = vmatprep.subr.mxu0 0.0
    %1543 = vmatpush1.msra.mxu0 0.0
    %1544 = vmatprep.subr.mxu0 0.0
    %1545 = vmatpush1.msra.mxu0 0.0
    %1546 = vmatprep.mubr.f32.mxu0 0.0
    %v1547 = vand.u32 %v1226, 4294901760
    %v1548 = vsub.f32 %v1226, %v1547
    %v1549 = vand.u32 %v1548, 4294901760
    %1550 = vmatmul.mubr.f32.gmra.mrb[0].mxu0 %v1549
    %v1551 = vpop.f32.mrb[0].mxu0
    %v1552 = vadd.f32 %v1475, %v1551
    %v1553 = vpop.f32.mrb[0].mxu0
    %1554 = vdwg.mxu0
    %1555 = vmatprep.subr.mxu0 0.0
    %v1556 = vand.u32 %v1218, 4294901760
    %v1557 = vsub.f32 %v1218, %v1556
    %v1558 = vand.u32 %v1557, 4294901760
    %1559 = vmatpush1.msra.mxu0 %v1558
    %1560 = vmatprep.subr.mxu0 0.0
    %v1561 = vand.u32 %v1219, 4294901760
    %v1562 = vsub.f32 %v1219, %v1561
    %v1563 = vand.u32 %v1562, 4294901760
    %1564 = vmatpush1.msra.mxu0 %v1563
    %1565 = vmatprep.subr.mxu0 0.0
    %v1566 = vand.u32 %v1220, 4294901760
    %v1567 = vsub.f32 %v1220, %v1566
    %v1568 = vand.u32 %v1567, 4294901760
    %1569 = vmatpush1.msra.mxu0 %v1568
    %1570 = vmatprep.subr.mxu0 0.0
    %v1571 = vand.u32 %v1221, 4294901760
    %v1572 = vsub.f32 %v1221, %v1571
    %v1573 = vand.u32 %v1572, 4294901760
    %1574 = vmatpush1.msra.mxu0 %v1573
    %1575 = vmatprep.subr.mxu0 0.0
    %1576 = vmatpush1.msra.mxu0 0.0
    %1577 = vmatprep.subr.mxu0 0.0
    %1578 = vmatpush1.msra.mxu0 0.0
    %1579 = vmatprep.subr.mxu0 0.0
    %1580 = vmatpush1.msra.mxu0 0.0
    %1581 = vmatprep.subr.mxu0 0.0
    %1582 = vmatpush1.msra.mxu0 0.0
    %1583 = vmatprep.subr.mxu0 0.0
    %1584 = vmatpush1.msra.mxu0 0.0
    %1585 = vmatprep.subr.mxu0 0.0
    %1586 = vmatpush1.msra.mxu0 0.0
    %1587 = vmatprep.subr.mxu0 0.0
    %1588 = vmatpush1.msra.mxu0 0.0
    %1589 = vmatprep.subr.mxu0 0.0
    %1590 = vmatpush1.msra.mxu0 0.0
    %1591 = vmatprep.subr.mxu0 0.0
    %1592 = vmatpush1.msra.mxu0 0.0
    %1593 = vmatprep.subr.mxu0 0.0
    %1594 = vmatpush1.msra.mxu0 0.0
    %1595 = vmatprep.subr.mxu0 0.0
    %1596 = vmatpush1.msra.mxu0 0.0
    %1597 = vmatprep.subr.mxu0 0.0
    %1598 = vmatpush1.msra.mxu0 0.0
    %1599 = vmatprep.subr.mxu0 0.0
    %1600 = vmatpush1.msra.mxu0 0.0
    %1601 = vmatprep.subr.mxu0 0.0
    %1602 = vmatpush1.msra.mxu0 0.0
    %1603 = vmatprep.subr.mxu0 0.0
    %1604 = vmatpush1.msra.mxu0 0.0
    %1605 = vmatprep.subr.mxu0 0.0
    %1606 = vmatpush1.msra.mxu0 0.0
    %1607 = vmatprep.subr.mxu0 0.0
    %1608 = vmatpush1.msra.mxu0 0.0
    %1609 = vmatprep.subr.mxu0 0.0
    %1610 = vmatpush1.msra.mxu0 0.0
    %1611 = vmatprep.subr.mxu0 0.0
    %1612 = vmatpush1.msra.mxu0 0.0
    %1613 = vmatprep.subr.mxu0 0.0
    %1614 = vmatpush1.msra.mxu0 0.0
    %1615 = vmatprep.subr.mxu0 0.0
    %1616 = vmatpush1.msra.mxu0 0.0
    %1617 = vmatprep.subr.mxu0 0.0
    %1618 = vmatpush1.msra.mxu0 0.0
    %1619 = vmatprep.subr.mxu0 0.0
    %1620 = vmatpush1.msra.mxu0 0.0
    %1621 = vmatprep.subr.mxu0 0.0
    %1622 = vmatpush1.msra.mxu0 0.0
    %1623 = vmatprep.subr.mxu0 0.0
    %1624 = vmatpush1.msra.mxu0 0.0
    %1625 = vmatprep.subr.mxu0 0.0
    %1626 = vmatpush1.msra.mxu0 0.0
    %1627 = vmatprep.subr.mxu0 0.0
    %1628 = vmatpush1.msra.mxu0 0.0
    %1629 = vmatprep.subr.mxu0 0.0
    %1630 = vmatpush1.msra.mxu0 0.0
    %1631 = vmatprep.mubr.f32.mxu0 0.0
    %v1632 = vand.u32 %v1226, 4294901760
    %1633 = vmatmul.mubr.f32.gmra.mrb[0].mxu0 %v1632
    %v1634 = vpop.f32.mrb[0].mxu0
    %v1635 = vadd.f32 %v1552, %v1634
    %v1636 = vpop.f32.mrb[0].mxu0
    %1637 = vdwg.mxu0
    %1638 = vmatprep.subr.mxu0 0.0
    %v1639 = vand.u32 %v1218, 4294901760
    %1640 = vmatpush1.msra.mxu0 %v1639
    %1641 = vmatprep.subr.mxu0 0.0
    %v1642 = vand.u32 %v1219, 4294901760
    %1643 = vmatpush1.msra.mxu0 %v1642
    %1644 = vmatprep.subr.mxu0 0.0
    %v1645 = vand.u32 %v1220, 4294901760
    %1646 = vmatpush1.msra.mxu0 %v1645
    %1647 = vmatprep.subr.mxu0 0.0
    %v1648 = vand.u32 %v1221, 4294901760
    %1649 = vmatpush1.msra.mxu0 %v1648
    %1650 = vmatprep.subr.mxu0 0.0
    %1651 = vmatpush1.msra.mxu0 0.0
    %1652 = vmatprep.subr.mxu0 0.0
    %1653 = vmatpush1.msra.mxu0 0.0
    %1654 = vmatprep.subr.mxu0 0.0
    %1655 = vmatpush1.msra.mxu0 0.0
    %1656 = vmatprep.subr.mxu0 0.0
    %1657 = vmatpush1.msra.mxu0 0.0
    %1658 = vmatprep.subr.mxu0 0.0
    %1659 = vmatpush1.msra.mxu0 0.0
    %1660 = vmatprep.subr.mxu0 0.0
    %1661 = vmatpush1.msra.mxu0 0.0
    %1662 = vmatprep.subr.mxu0 0.0
    %1663 = vmatpush1.msra.mxu0 0.0
    %1664 = vmatprep.subr.mxu0 0.0
    %1665 = vmatpush1.msra.mxu0 0.0
    %1666 = vmatprep.subr.mxu0 0.0
    %1667 = vmatpush1.msra.mxu0 0.0
    %1668 = vmatprep.subr.mxu0 0.0
    %1669 = vmatpush1.msra.mxu0 0.0
    %1670 = vmatprep.subr.mxu0 0.0
    %1671 = vmatpush1.msra.mxu0 0.0
    %1672 = vmatprep.subr.mxu0 0.0
    %1673 = vmatpush1.msra.mxu0 0.0
    %1674 = vmatprep.subr.mxu0 0.0
    %1675 = vmatpush1.msra.mxu0 0.0
    %1676 = vmatprep.subr.mxu0 0.0
    %1677 = vmatpush1.msra.mxu0 0.0
    %1678 = vmatprep.subr.mxu0 0.0
    %1679 = vmatpush1.msra.mxu0 0.0
    %1680 = vmatprep.subr.mxu0 0.0
    %1681 = vmatpush1.msra.mxu0 0.0
    %1682 = vmatprep.subr.mxu0 0.0
    %1683 = vmatpush1.msra.mxu0 0.0
    %1684 = vmatprep.subr.mxu0 0.0
    %1685 = vmatpush1.msra.mxu0 0.0
    %1686 = vmatprep.subr.mxu0 0.0
    %1687 = vmatpush1.msra.mxu0 0.0
    %1688 = vmatprep.subr.mxu0 0.0
    %1689 = vmatpush1.msra.mxu0 0.0
    %1690 = vmatprep.subr.mxu0 0.0
    %1691 = vmatpush1.msra.mxu0 0.0
    %1692 = vmatprep.subr.mxu0 0.0
    %1693 = vmatpush1.msra.mxu0 0.0
    %1694 = vmatprep.subr.mxu0 0.0
    %1695 = vmatpush1.msra.mxu0 0.0
    %1696 = vmatprep.subr.mxu0 0.0
    %1697 = vmatpush1.msra.mxu0 0.0
    %1698 = vmatprep.subr.mxu0 0.0
    %1699 = vmatpush1.msra.mxu0 0.0
    %1700 = vmatprep.subr.mxu0 0.0
    %1701 = vmatpush1.msra.mxu0 0.0
    %1702 = vmatprep.subr.mxu0 0.0
    %1703 = vmatpush1.msra.mxu0 0.0
    %1704 = vmatprep.subr.mxu0 0.0
    %1705 = vmatpush1.msra.mxu0 0.0
    %1706 = vmatprep.mubr.f32.mxu0 0.0
    %v1707 = vand.u32 %v1226, 4294901760
    %1708 = vmatmul.mubr.f32.gmra.mrb[0].mxu0 %v1707
    %v1709 = vpop.f32.mrb[0].mxu0
    %v1710 = vadd.f32 %v1635, %v1709
    %v1711 = vpop.f32.mrb[0].mxu0
    %1712 = vdwg.mxu0
    %v1713 = vadd.f32 %v1224, %v1710
    %v1714 = vxor.u32 %v1713, 2147483648
    %v1715 = vmul.f32 %v1714, 1.442695
    %v1716 = vpow.pop %v1715
    %v1717 = vadd.f32 %v1716, 1.0
    %v1718 = vrcp.pop %v1717
    %v1719 = vmul.f32 1.0, %v1718
    %v1720 = vtanh.pop %v1713
    %1722 = vrot.lane.b32.xlu0 %v1223, 32
    %v1723 = vpop.permute.xlu0 %1722
    %v1725 = vmul.f32 %v1719, %v1723
    %1727 = vrot.lane.b32.xlu0 %v1720, 32
    %v1728 = vpop.permute.xlu0 %1727
    %v1730 = vmul.f32 %v1719, %v1728
    %1732 = vrot.lane.b32.xlu0 %v1730, 32
    %v1733 = vpop.permute.xlu0 %1732
    %v1735 = vadd.f32 %v1725, %v1733
    %v1736 = vtanh.pop %v1735
    %1738 = vrot.lane.b32.xlu0 %v1736, 32
    %v1739 = vpop.permute.xlu0 %1738
    %v1741 = vmul.f32 %v1719, %v1739
    %1743 = vrot.lane.b32.xlu0 %v1741, 64
    %v1744 = vpop.permute.xlu0 %1743
    %1746 = vst.msk [vmem:[#allocation2] sm:$0xff] %vm1209, %v1744
    %1748 = vrot.lane.b32.xlu0 %v1735, 96
    %v1749 = vpop.permute.xlu0 %1748
    %1751 = vst.msk [vmem:[#allocation3] sm:$0xff] %vm1209, %v1749
    %v1752 = vld [vmem:[#allocation6] sm:$0xff]
    %v1753 = vld [vmem:[#allocation5] sm:$0xff]
    %1755 = vrot.lane.b32.xlu0 %v1753, 64
    %v1756 = vpop.permute.xlu0 %1755
    %v1758 = vsub.f32 %v1741, %v1756
    %1760 = vrot.lane.b32.xlu0 %v1758, 64
    %v1761 = vpop.permute.xlu0 %1760
    %v1763 = vmax.f32 %v1752, %v1761
    %1764 = vst.msk [vmem:[#allocation6] sm:$0xff] %vm1209, %v1763
    %v1765 = vld [vmem:[#allocation2] sm:$0xff]
    %v1766 = vld [vmem:[#allocation3] sm:$0xff]
    %s1767 = scalar_lea.vmem [#allocation4], 8
    %v1768 = vld [vmem:[%s1767] sm:$0xff]
    %v1770 = vsel %vm1209, %v1765, 0
    %1772 = vmatprep.subr.mxu0 0.0
    %v1773 = vand.u32 %v1218, 4294901760
    %1774 = vmatpush1.msra.mxu0 %v1773
    %1775 = vmatprep.subr.mxu0 0.0
    %v1776 = vand.u32 %v1219, 4294901760
    %1777 = vmatpush1.msra.mxu0 %v1776
    %1778 = vmatprep.subr.mxu0 0.0
    %v1779 = vand.u32 %v1220, 4294901760
    %1780 = vmatpush1.msra.mxu0 %v1779
    %1781 = vmatprep.subr.mxu0 0.0
    %v1782 = vand.u32 %v1221, 4294901760
    %1783 = vmatpush1.msra.mxu0 %v1782
    %1784 = vmatprep.subr.mxu0 0.0
    %1785 = vmatpush1.msra.mxu0 0.0
    %1786 = vmatprep.subr.mxu0 0.0
    %1787 = vmatpush1.msra.mxu0 0.0
    %1788 = vmatprep.subr.mxu0 0.0
    %1789 = vmatpush1.msra.mxu0 0.0
    %1790 = vmatprep.subr.mxu0 0.0
    %1791 = vmatpush1.msra.mxu0 0.0
    %1792 = vmatprep.subr.mxu0 0.0
    %1793 = vmatpush1.msra.mxu0 0.0
    %1794 = vmatprep.subr.mxu0 0.0
    %1795 = vmatpush1.msra.mxu0 0.0
    %1796 = vmatprep.subr.mxu0 0.0
    %1797 = vmatpush1.msra.mxu0 0.0
    %1798 = vmatprep.subr.mxu0 0.0
    %1799 = vmatpush1.msra.mxu0 0.0
    %1800 = vmatprep.subr.mxu0 0.0
    %1801 = vmatpush1.msra.mxu0 0.0
    %1802 = vmatprep.subr.mxu0 0.0
    %1803 = vmatpush1.msra.mxu0 0.0
    %1804 = vmatprep.subr.mxu0 0.0
    %1805 = vmatpush1.msra.mxu0 0.0
    %1806 = vmatprep.subr.mxu0 0.0
    %1807 = vmatpush1.msra.mxu0 0.0
    %1808 = vmatprep.subr.mxu0 0.0
    %1809 = vmatpush1.msra.mxu0 0.0
    %1810 = vmatprep.subr.mxu0 0.0
    %1811 = vmatpush1.msra.mxu0 0.0
    %1812 = vmatprep.subr.mxu0 0.0
    %1813 = vmatpush1.msra.mxu0 0.0
    %1814 = vmatprep.subr.mxu0 0.0
    %1815 = vmatpush1.msra.mxu0 0.0
    %1816 = vmatprep.subr.mxu0 0.0
    %1817 = vmatpush1.msra.mxu0 0.0
    %1818 = vmatprep.subr.mxu0 0.0
    %1819 = vmatpush1.msra.mxu0 0.0
    %1820 = vmatprep.subr.mxu0 0.0
    %1821 = vmatpush1.msra.mxu0 0.0
    %1822 = vmatprep.subr.mxu0 0.0
    %1823 = vmatpush1.msra.mxu0 0.0
    %1824 = vmatprep.subr.mxu0 0.0
    %1825 = vmatpush1.msra.mxu0 0.0
    %1826 = vmatprep.subr.mxu0 0.0
    %1827 = vmatpush1.msra.mxu0 0.0
    %1828 = vmatprep.subr.mxu0 0.0
    %1829 = vmatpush1.msra.mxu0 0.0
    %1830 = vmatprep.subr.mxu0 0.0
    %1831 = vmatpush1.msra.mxu0 0.0
    %1832 = vmatprep.subr.mxu0 0.0
    %1833 = vmatpush1.msra.mxu0 0.0
    %1834 = vmatprep.subr.mxu0 0.0
    %1835 = vmatpush1.msra.mxu0 0.0
    %1836 = vmatprep.subr.mxu0 0.0
    %1837 = vmatpush1.msra.mxu0 0.0
    %1838 = vmatprep.subr.mxu0 0.0
    %1839 = vmatpush1.msra.mxu0 0.0
    %1840 = vmatprep.mubr.f32.mxu0 0.0
    %v1841 = vand.u32 %v1770, 4294901760
    %v1842 = vsub.f32 %v1770, %v1841
    %v1843 = vand.u32 %v1842, 4294901760
    %v1844 = vsub.f32 %v1842, %v1843
    %v1845 = vand.u32 %v1844, 4294901760
    %1846 = vmatmul.mubr.f32.gmra.mrb[0].mxu0 %v1845
    %v1847 = vpop.f32.mrb[0].mxu0
    %v1848 = vadd.f32 0.0, %v1847
    %v1849 = vpop.f32.mrb[0].mxu0
    %1850 = vdwg.mxu0
    %1851 = vmatprep.subr.mxu0 0.0
    %v1852 = vand.u32 %v1218, 4294901760
    %v1853 = vsub.f32 %v1218, %v1852
    %v1854 = vand.u32 %v1853, 4294901760
    %v1855 = vsub.f32 %v1853, %v1854
    %v1856 = vand.u32 %v1855, 4294901760
    %1857 = vmatpush1.msra.mxu0 %v1856
    %1858 = vmatprep.subr.mxu0 0.0
    %v1859 = vand.u32 %v1219, 4294901760
    %v1860 = vsub.f32 %v1219, %v1859
    %v1861 = vand.u32 %v1860, 4294901760
    %v1862 = vsub.f32 %v1860, %v1861
    %v1863 = vand.u32 %v1862, 4294901760
    %1864 = vmatpush1.msra.mxu0 %v1863
    %1865 = vmatprep.subr.mxu0 0.0
    %v1866 = vand.u32 %v1220, 4294901760
    %v1867 = vsub.f32 %v1220, %v1866
    %v1868 = vand.u32 %v1867, 4294901760
    %v1869 = vsub.f32 %v1867, %v1868
    %v1870 = vand.u32 %v1869, 4294901760
    %1871 = vmatpush1.msra.mxu0 %v1870
    %1872 = vmatprep.subr.mxu0 0.0
    %v1873 = vand.u32 %v1221, 4294901760
    %v1874 = vsub.f32 %v1221, %v1873
    %v1875 = vand.u32 %v1874, 4294901760
    %v1876 = vsub.f32 %v1874, %v1875
    %v1877 = vand.u32 %v1876, 4294901760
    %1878 = vmatpush1.msra.mxu0 %v1877
    %1879 = vmatprep.subr.mxu0 0.0
    %1880 = vmatpush1.msra.mxu0 0.0
    %1881 = vmatprep.subr.mxu0 0.0
    %1882 = vmatpush1.msra.mxu0 0.0
    %1883 = vmatprep.subr.mxu0 0.0
    %1884 = vmatpush1.msra.mxu0 0.0
    %1885 = vmatprep.subr.mxu0 0.0
    %1886 = vmatpush1.msra.mxu0 0.0
    %1887 = vmatprep.subr.mxu0 0.0
    %1888 = vmatpush1.msra.mxu0 0.0
    %1889 = vmatprep.subr.mxu0 0.0
    %1890 = vmatpush1.msra.mxu0 0.0
    %1891 = vmatprep.subr.mxu0 0.0
    %1892 = vmatpush1.msra.mxu0 0.0
    %1893 = vmatprep.subr.mxu0 0.0
    %1894 = vmatpush1.msra.mxu0 0.0
    %1895 = vmatprep.subr.mxu0 0.0
    %1896 = vmatpush1.msra.mxu0 0.0
    %1897 = vmatprep.subr.mxu0 0.0
    %1898 = vmatpush1.msra.mxu0 0.0
    %1899 = vmatprep.subr.mxu0 0.0
    %1900 = vmatpush1.msra.mxu0 0.0
    %1901 = vmatprep.subr.mxu0 0.0
    %1902 = vmatpush1.msra.mxu0 0.0
    %1903 = vmatprep.subr.mxu0 0.0
    %1904 = vmatpush1.msra.mxu0 0.0
    %1905 = vmatprep.subr.mxu0 0.0
    %1906 = vmatpush1.msra.mxu0 0.0
    %1907 = vmatprep.subr.mxu0 0.0
    %1908 = vmatpush1.msra.mxu0 0.0
    %1909 = vmatprep.subr.mxu0 0.0
    %1910 = vmatpush1.msra.mxu0 0.0
    %1911 = vmatprep.subr.mxu0 0.0
    %1912 = vmatpush1.msra.mxu0 0.0
    %1913 = vmatprep.subr.mxu0 0.0
    %1914 = vmatpush1.msra.mxu0 0.0
    %1915 = vmatprep.subr.mxu0 0.0
    %1916 = vmatpush1.msra.mxu0 0.0
    %1917 = vmatprep.subr.mxu0 0.0
    %1918 = vmatpush1.msra.mxu0 0.0
    %1919 = vmatprep.subr.mxu0 0.0
    %1920 = vmatpush1.msra.mxu0 0.0
    %1921 = vmatprep.subr.mxu0 0.0
    %1922 = vmatpush1.msra.mxu0 0.0
    %1923 = vmatprep.subr.mxu0 0.0
    %1924 = vmatpush1.msra.mxu0 0.0
    %1925 = vmatprep.subr.mxu0 0.0
    %1926 = vmatpush1.msra.mxu0 0.0
    %1927 = vmatprep.subr.mxu0 0.0
    %1928 = vmatpush1.msra.mxu0 0.0
    %1929 = vmatprep.subr.mxu0 0.0
    %1930 = vmatpush1.msra.mxu0 0.0
    %1931 = vmatprep.subr.mxu0 0.0
    %1932 = vmatpush1.msra.mxu0 0.0
    %1933 = vmatprep.subr.mxu0 0.0
    %1934 = vmatpush1.msra.mxu0 0.0
    %1935 = vmatprep.mubr.f32.mxu0 0.0
    %v1936 = vand.u32 %v1770, 4294901760
    %1937 = vmatmul.mubr.f32.gmra.mrb[0].mxu0 %v1936
    %v1938 = vpop.f32.mrb[0].mxu0
    %v1939 = vadd.f32 %v1848, %v1938
    %v1940 = vpop.f32.mrb[0].mxu0
    %1941 = vdwg.mxu0
    %1942 = vmatprep.subr.mxu0 0.0
    %v1943 = vand.u32 %v1218, 4294901760
    %v1944 = vsub.f32 %v1218, %v1943
    %1945 = vmatpush1.msra.mxu0 %v1944
    %1946 = vmatprep.subr.mxu0 0.0
    %v1947 = vand.u32 %v1219, 4294901760
    %v1948 = vsub.f32 %v1219, %v1947
    %1949 = vmatpush1.msra.mxu0 %v1948
    %1950 = vmatprep.subr.mxu0 0.0
    %v1951 = vand.u32 %v1220, 4294901760
    %v1952 = vsub.f32 %v1220, %v1951
    %1953 = vmatpush1.msra.mxu0 %v1952
    %1954 = vmatprep.subr.mxu0 0.0
    %v1955 = vand.u32 %v1221, 4294901760
    %v1956 = vsub.f32 %v1221, %v1955
    %1957 = vmatpush1.msra.mxu0 %v1956
    %1958 = vmatprep.subr.mxu0 0.0
    %1959 = vmatpush1.msra.mxu0 0.0
    %1960 = vmatprep.subr.mxu0 0.0
    %1961 = vmatpush1.msra.mxu0 0.0
    %1962 = vmatprep.subr.mxu0 0.0
    %1963 = vmatpush1.msra.mxu0 0.0
    %1964 = vmatprep.subr.mxu0 0.0
    %1965 = vmatpush1.msra.mxu0 0.0
    %1966 = vmatprep.subr.mxu0 0.0
    %1967 = vmatpush1.msra.mxu0 0.0
    %1968 = vmatprep.subr.mxu0 0.0
    %1969 = vmatpush1.msra.mxu0 0.0
    %1970 = vmatprep.subr.mxu0 0.0
    %1971 = vmatpush1.msra.mxu0 0.0
    %1972 = vmatprep.subr.mxu0 0.0
    %1973 = vmatpush1.msra.mxu0 0.0
    %1974 = vmatprep.subr.mxu0 0.0
    %1975 = vmatpush1.msra.mxu0 0.0
    %1976 = vmatprep.subr.mxu0 0.0
    %1977 = vmatpush1.msra.mxu0 0.0
    %1978 = vmatprep.subr.mxu0 0.0
    %1979 = vmatpush1.msra.mxu0 0.0
    %1980 = vmatprep.subr.mxu0 0.0
    %1981 = vmatpush1.msra.mxu0 0.0
    %1982 = vmatprep.subr.mxu0 0.0
    %1983 = vmatpush1.msra.mxu0 0.0
    %1984 = vmatprep.subr.mxu0 0.0
    %1985 = vmatpush1.msra.mxu0 0.0
    %1986 = vmatprep.subr.mxu0 0.0
    %1987 = vmatpush1.msra.mxu0 0.0
    %1988 = vmatprep.subr.mxu0 0.0
    %1989 = vmatpush1.msra.mxu0 0.0
    %1990 = vmatprep.subr.mxu0 0.0
    %1991 = vmatpush1.msra.mxu0 0.0
    %1992 = vmatprep.subr.mxu0 0.0
    %1993 = vmatpush1.msra.mxu0 0.0
    %1994 = vmatprep.subr.mxu0 0.0
    %1995 = vmatpush1.msra.mxu0 0.0
    %1996 = vmatprep.subr.mxu0 0.0
    %1997 = vmatpush1.msra.mxu0 0.0
    %1998 = vmatprep.subr.mxu0 0.0
    %1999 = vmatpush1.msra.mxu0 0.0
    %2000 = vmatprep.subr.mxu0 0.0
    %2001 = vmatpush1.msra.mxu0 0.0
    %2002 = vmatprep.subr.mxu0 0.0
    %2003 = vmatpush1.msra.mxu0 0.0
    %2004 = vmatprep.subr.mxu0 0.0
    %2005 = vmatpush1.msra.mxu0 0.0
    %2006 = vmatprep.subr.mxu0 0.0
    %2007 = vmatpush1.msra.mxu0 0.0
    %2008 = vmatprep.subr.mxu0 0.0
    %2009 = vmatpush1.msra.mxu0 0.0
    %2010 = vmatprep.subr.mxu0 0.0
    %2011 = vmatpush1.msra.mxu0 0.0
    %2012 = vmatprep.subr.mxu0 0.0
    %2013 = vmatpush1.msra.mxu0 0.0
    %2014 = vmatprep.mubr.f32.mxu0 0.0
    %v2015 = vand.u32 %v1770, 4294901760
    %v2016 = vsub.f32 %v1770, %v2015
    %2017 = vmatmul.mubr.f32.gmra.mrb[0].mxu0 %v2016
    %v2018 = vpop.f32.mrb[0].mxu0
    %v2019 = vadd.f32 %v1939, %v2018
    %v2020 = vpop.f32.mrb[0].mxu0
    %2021 = vdwg.mxu0
    %2022 = vmatprep.subr.mxu0 0.0
    %v2023 = vand.u32 %v1218, 4294901760
    %2024 = vmatpush1.msra.mxu0 %v2023
    %2025 = vmatprep.subr.mxu0 0.0
    %v2026 = vand.u32 %v1219, 4294901760
    %2027 = vmatpush1.msra.mxu0 %v2026
    %2028 = vmatprep.subr.mxu0 0.0
    %v2029 = vand.u32 %v1220, 4294901760
    %2030 = vmatpush1.msra.mxu0 %v2029
    %2031 = vmatprep.subr.mxu0 0.0
    %v2032 = vand.u32 %v1221, 4294901760
    %2033 = vmatpush1.msra.mxu0 %v2032
    %2034 = vmatprep.subr.mxu0 0.0
    %2035 = vmatpush1.msra.mxu0 0.0
    %2036 = vmatprep.subr.mxu0 0.0
    %2037 = vmatpush1.msra.mxu0 0.0
    %2038 = vmatprep.subr.mxu0 0.0
    %2039 = vmatpush1.msra.mxu0 0.0
    %2040 = vmatprep.subr.mxu0 0.0
    %2041 = vmatpush1.msra.mxu0 0.0
    %2042 = vmatprep.subr.mxu0 0.0
    %2043 = vmatpush1.msra.mxu0 0.0
    %2044 = vmatprep.subr.mxu0 0.0
    %2045 = vmatpush1.msra.mxu0 0.0
    %2046 = vmatprep.subr.mxu0 0.0
    %2047 = vmatpush1.msra.mxu0 0.0
    %2048 = vmatprep.subr.mxu0 0.0
    %2049 = vmatpush1.msra.mxu0 0.0
    %2050 = vmatprep.subr.mxu0 0.0
    %2051 = vmatpush1.msra.mxu0 0.0
    %2052 = vmatprep.subr.mxu0 0.0
    %2053 = vmatpush1.msra.mxu0 0.0
    %2054 = vmatprep.subr.mxu0 0.0
    %2055 = vmatpush1.msra.mxu0 0.0
    %2056 = vmatprep.subr.mxu0 0.0
    %2057 = vmatpush1.msra.mxu0 0.0
    %2058 = vmatprep.subr.mxu0 0.0
    %2059 = vmatpush1.msra.mxu0 0.0
    %2060 = vmatprep.subr.mxu0 0.0
    %2061 = vmatpush1.msra.mxu0 0.0
    %2062 = vmatprep.subr.mxu0 0.0
    %2063 = vmatpush1.msra.mxu0 0.0
    %2064 = vmatprep.subr.mxu0 0.0
    %2065 = vmatpush1.msra.mxu0 0.0
    %2066 = vmatprep.subr.mxu0 0.0
    %2067 = vmatpush1.msra.mxu0 0.0
    %2068 = vmatprep.subr.mxu0 0.0
    %2069 = vmatpush1.msra.mxu0 0.0
    %2070 = vmatprep.subr.mxu0 0.0
    %2071 = vmatpush1.msra.mxu0 0.0
    %2072 = vmatprep.subr.mxu0 0.0
    %2073 = vmatpush1.msra.mxu0 0.0
    %2074 = vmatprep.subr.mxu0 0.0
    %2075 = vmatpush1.msra.mxu0 0.0
    %2076 = vmatprep.subr.mxu0 0.0
    %2077 = vmatpush1.msra.mxu0 0.0
    %2078 = vmatprep.subr.mxu0 0.0
    %2079 = vmatpush1.msra.mxu0 0.0
    %2080 = vmatprep.subr.mxu0 0.0
    %2081 = vmatpush1.msra.mxu0 0.0
    %2082 = vmatprep.subr.mxu0 0.0
    %2083 = vmatpush1.msra.mxu0 0.0
    %2084 = vmatprep.subr.mxu0 0.0
    %2085 = vmatpush1.msra.mxu0 0.0
    %2086 = vmatprep.subr.mxu0 0.0
    %2087 = vmatpush1.msra.mxu0 0.0
    %2088 = vmatprep.subr.mxu0 0.0
    %2089 = vmatpush1.msra.mxu0 0.0
    %2090 = vmatprep.mubr.f32.mxu0 0.0
    %v2091 = vand.u32 %v1770, 4294901760
    %v2092 = vsub.f32 %v1770, %v2091
    %v2093 = vand.u32 %v2092, 4294901760
    %2094 = vmatmul.mubr.f32.gmra.mrb[0].mxu0 %v2093
    %v2095 = vpop.f32.mrb[0].mxu0
    %v2096 = vadd.f32 %v2019, %v2095
    %v2097 = vpop.f32.mrb[0].mxu0
    %2098 = vdwg.mxu0
    %2099 = vmatprep.subr.mxu0 0.0
    %v2100 = vand.u32 %v1218, 4294901760
    %v2101 = vsub.f32 %v1218, %v2100
    %v2102 = vand.u32 %v2101, 4294901760
    %2103 = vmatpush1.msra.mxu0 %v2102
    %2104 = vmatprep.subr.mxu0 0.0
    %v2105 = vand.u32 %v1219, 4294901760
    %v2106 = vsub.f32 %v1219, %v2105
    %v2107 = vand.u32 %v2106, 4294901760
    %2108 = vmatpush1.msra.mxu0 %v2107
    %2109 = vmatprep.subr.mxu0 0.0
    %v2110 = vand.u32 %v1220, 4294901760
    %v2111 = vsub.f32 %v1220, %v2110
    %v2112 = vand.u32 %v2111, 4294901760
    %2113 = vmatpush1.msra.mxu0 %v2112
    %2114 = vmatprep.subr.mxu0 0.0
    %v2115 = vand.u32 %v1221, 4294901760
    %v2116 = vsub.f32 %v1221, %v2115
    %v2117 = vand.u32 %v2116, 4294901760
    %2118 = vmatpush1.msra.mxu0 %v2117
    %2119 = vmatprep.subr.mxu0 0.0
    %2120 = vmatpush1.msra.mxu0 0.0
    %2121 = vmatprep.subr.mxu0 0.0
    %2122 = vmatpush1.msra.mxu0 0.0
    %2123 = vmatprep.subr.mxu0 0.0
    %2124 = vmatpush1.msra.mxu0 0.0
    %2125 = vmatprep.subr.mxu0 0.0
    %2126 = vmatpush1.msra.mxu0 0.0
    %2127 = vmatprep.subr.mxu0 0.0
    %2128 = vmatpush1.msra.mxu0 0.0
    %2129 = vmatprep.subr.mxu0 0.0
    %2130 = vmatpush1.msra.mxu0 0.0
    %2131 = vmatprep.subr.mxu0 0.0
    %2132 = vmatpush1.msra.mxu0 0.0
    %2133 = vmatprep.subr.mxu0 0.0
    %2134 = vmatpush1.msra.mxu0 0.0
    %2135 = vmatprep.subr.mxu0 0.0
    %2136 = vmatpush1.msra.mxu0 0.0
    %2137 = vmatprep.subr.mxu0 0.0
    %2138 = vmatpush1.msra.mxu0 0.0
    %2139 = vmatprep.subr.mxu0 0.0
    %2140 = vmatpush1.msra.mxu0 0.0
    %2141 = vmatprep.subr.mxu0 0.0
    %2142 = vmatpush1.msra.mxu0 0.0
    %2143 = vmatprep.subr.mxu0 0.0
    %2144 = vmatpush1.msra.mxu0 0.0
    %2145 = vmatprep.subr.mxu0 0.0
    %2146 = vmatpush1.msra.mxu0 0.0
    %2147 = vmatprep.subr.mxu0 0.0
    %2148 = vmatpush1.msra.mxu0 0.0
    %2149 = vmatprep.subr.mxu0 0.0
    %2150 = vmatpush1.msra.mxu0 0.0
    %2151 = vmatprep.subr.mxu0 0.0
    %2152 = vmatpush1.msra.mxu0 0.0
    %2153 = vmatprep.subr.mxu0 0.0
    %2154 = vmatpush1.msra.mxu0 0.0
    %2155 = vmatprep.subr.mxu0 0.0
    %2156 = vmatpush1.msra.mxu0 0.0
    %2157 = vmatprep.subr.mxu0 0.0
    %2158 = vmatpush1.msra.mxu0 0.0
    %2159 = vmatprep.subr.mxu0 0.0
    %2160 = vmatpush1.msra.mxu0 0.0
    %2161 = vmatprep.subr.mxu0 0.0
    %2162 = vmatpush1.msra.mxu0 0.0
    %2163 = vmatprep.subr.mxu0 0.0
    %2164 = vmatpush1.msra.mxu0 0.0
    %2165 = vmatprep.subr.mxu0 0.0
    %2166 = vmatpush1.msra.mxu0 0.0
    %2167 = vmatprep.subr.mxu0 0.0
    %2168 = vmatpush1.msra.mxu0 0.0
    %2169 = vmatprep.subr.mxu0 0.0
    %2170 = vmatpush1.msra.mxu0 0.0
    %2171 = vmatprep.subr.mxu0 0.0
    %2172 = vmatpush1.msra.mxu0 0.0
    %2173 = vmatprep.subr.mxu0 0.0
    %2174 = vmatpush1.msra.mxu0 0.0
    %2175 = vmatprep.mubr.f32.mxu0 0.0
    %v2176 = vand.u32 %v1770, 4294901760
    %2177 = vmatmul.mubr.f32.gmra.mrb[0].mxu0 %v2176
    %v2178 = vpop.f32.mrb[0].mxu0
    %v2179 = vadd.f32 %v2096, %v2178
    %v2180 = vpop.f32.mrb[0].mxu0
    %2181 = vdwg.mxu0
    %2182 = vmatprep.subr.mxu0 0.0
    %v2183 = vand.u32 %v1218, 4294901760
    %2184 = vmatpush1.msra.mxu0 %v2183
    %2185 = vmatprep.subr.mxu0 0.0
    %v2186 = vand.u32 %v1219, 4294901760
    %2187 = vmatpush1.msra.mxu0 %v2186
    %2188 = vmatprep.subr.mxu0 0.0
    %v2189 = vand.u32 %v1220, 4294901760
    %2190 = vmatpush1.msra.mxu0 %v2189
    %2191 = vmatprep.subr.mxu0 0.0
    %v2192 = vand.u32 %v1221, 4294901760
    %2193 = vmatpush1.msra.mxu0 %v2192
    %2194 = vmatprep.subr.mxu0 0.0
    %2195 = vmatpush1.msra.mxu0 0.0
    %2196 = vmatprep.subr.mxu0 0.0
    %2197 = vmatpush1.msra.mxu0 0.0
    %2198 = vmatprep.subr.mxu0 0.0
    %2199 = vmatpush1.msra.mxu0 0.0
    %2200 = vmatprep.subr.mxu0 0.0
    %2201 = vmatpush1.msra.mxu0 0.0
    %2202 = vmatprep.subr.mxu0 0.0
    %2203 = vmatpush1.msra.mxu0 0.0
    %2204 = vmatprep.subr.mxu0 0.0
    %2205 = vmatpush1.msra.mxu0 0.0
    %2206 = vmatprep.subr.mxu0 0.0
    %2207 = vmatpush1.msra.mxu0 0.0
    %2208 = vmatprep.subr.mxu0 0.0
    %2209 = vmatpush1.msra.mxu0 0.0
    %2210 = vmatprep.subr.mxu0 0.0
    %2211 = vmatpush1.msra.mxu0 0.0
    %2212 = vmatprep.subr.mxu0 0.0
    %2213 = vmatpush1.msra.mxu0 0.0
    %2214 = vmatprep.subr.mxu0 0.0
    %2215 = vmatpush1.msra.mxu0 0.0
    %2216 = vmatprep.subr.mxu0 0.0
    %2217 = vmatpush1.msra.mxu0 0.0
    %2218 = vmatprep.subr.mxu0 0.0
    %2219 = vmatpush1.msra.mxu0 0.0
    %2220 = vmatprep.subr.mxu0 0.0
    %2221 = vmatpush1.msra.mxu0 0.0
    %2222 = vmatprep.subr.mxu0 0.0
    %2223 = vmatpush1.msra.mxu0 0.0
    %2224 = vmatprep.subr.mxu0 0.0
    %2225 = vmatpush1.msra.mxu0 0.0
    %2226 = vmatprep.subr.mxu0 0.0
    %2227 = vmatpush1.msra.mxu0 0.0
    %2228 = vmatprep.subr.mxu0 0.0
    %2229 = vmatpush1.msra.mxu0 0.0
    %2230 = vmatprep.subr.mxu0 0.0
    %2231 = vmatpush1.msra.mxu0 0.0
    %2232 = vmatprep.subr.mxu0 0.0
    %2233 = vmatpush1.msra.mxu0 0.0
    %2234 = vmatprep.subr.mxu0 0.0
    %2235 = vmatpush1.msra.mxu0 0.0
    %2236 = vmatprep.subr.mxu0 0.0
    %2237 = vmatpush1.msra.mxu0 0.0
    %2238 = vmatprep.subr.mxu0 0.0
    %2239 = vmatpush1.msra.mxu0 0.0
    %2240 = vmatprep.subr.mxu0 0.0
    %2241 = vmatpush1.msra.mxu0 0.0
    %2242 = vmatprep.subr.mxu0 0.0
    %2243 = vmatpush1.msra.mxu0 0.0
    %2244 = vmatprep.subr.mxu0 0.0
    %2245 = vmatpush1.msra.mxu0 0.0
    %2246 = vmatprep.subr.mxu0 0.0
    %2247 = vmatpush1.msra.mxu0 0.0
    %2248 = vmatprep.subr.mxu0 0.0
    %2249 = vmatpush1.msra.mxu0 0.0
    %2250 = vmatprep.mubr.f32.mxu0 0.0
    %v2251 = vand.u32 %v1770, 4294901760
    %2252 = vmatmul.mubr.f32.gmra.mrb[0].mxu0 %v2251
    %v2253 = vpop.f32.mrb[0].mxu0
    %v2254 = vadd.f32 %v2179, %v2253
    %v2255 = vpop.f32.mrb[0].mxu0
    %2256 = vdwg.mxu0
    %v2257 = vadd.f32 %v1768, %v2254
    %v2258 = vxor.u32 %v2257, 2147483648
    %v2259 = vmul.f32 %v2258, 1.442695
    %v2260 = vpow.pop %v2259
    %v2261 = vadd.f32 %v2260, 1.0
    %v2262 = vrcp.pop %v2261
    %v2263 = vmul.f32 1.0, %v2262
    %v2264 = vtanh.pop %v2257
    %2266 = vrot.lane.b32.xlu0 %v1766, 32
    %v2267 = vpop.permute.xlu0 %2266
    %v2269 = vmul.f32 %v2263, %v2267
    %2271 = vrot.lane.b32.xlu0 %v2264, 32
    %v2272 = vpop.permute.xlu0 %2271
    %v2274 = vmul.f32 %v2263, %v2272
    %2276 = vrot.lane.b32.xlu0 %v2274, 32
    %v2277 = vpop.permute.xlu0 %2276
    %v2279 = vadd.f32 %v2269, %v2277
    %v2280 = vtanh.pop %v2279
    %2282 = vrot.lane.b32.xlu0 %v2280, 32
    %v2283 = vpop.permute.xlu0 %2282
    %v2285 = vmul.f32 %v2263, %v2283
    %2287 = vrot.lane.b32.xlu0 %v2285, 64
    %v2288 = vpop.permute.xlu0 %2287
    %2290 = vst.msk [vmem:[#allocation2] sm:$0xff] %vm1209, %v2288
    %2292 = vrot.lane.b32.xlu0 %v2279, 96
    %v2293 = vpop.permute.xlu0 %2292
    %2295 = vst.msk [vmem:[#allocation3] sm:$0xff] %vm1209, %v2293
    %v2296 = vld [vmem:[#allocation6] sm:$0xff]
    %s2297 = scalar_lea.vmem [#allocation5], 8
    %v2298 = vld [vmem:[%s2297] sm:$0xff]
    %2300 = vrot.lane.b32.xlu0 %v2298, 64
    %v2301 = vpop.permute.xlu0 %2300
    %v2303 = vsub.f32 %v2285, %v2301
    %2305 = vrot.lane.b32.xlu0 %v2303, 64
    %v2306 = vpop.permute.xlu0 %2305
    %v2308 = vmax.f32 %v2296, %v2306
    %2309 = vst.msk [vmem:[#allocation6] sm:$0xff] %vm1209, %v2308
    %v2310 = vld [vmem:[#allocation2] sm:$0xff]
    %v2311 = vld [vmem:[#allocation3] sm:$0xff]
    %s2312 = scalar_lea.vmem [#allocation4], 16
    %v2313 = vld [vmem:[%s2312] sm:$0xff]
    %v2315 = vsel %vm1209, %v2310, 0
    %2317 = vmatprep.subr.mxu0 0.0
    %v2318 = vand.u32 %v1218, 4294901760
    %2319 = vmatpush1.msra.mxu0 %v2318
    %2320 = vmatprep.subr.mxu0 0.0
    %v2321 = vand.u32 %v1219, 4294901760
    %2322 = vmatpush1.msra.mxu0 %v2321
    %2323 = vmatprep.subr.mxu0 0.0
    %v2324 = vand.u32 %v1220, 4294901760
    %2325 = vmatpush1.msra.mxu0 %v2324
    %2326 = vmatprep.subr.mxu0 0.0
    %v2327 = vand.u32 %v1221, 4294901760
    %2328 = vmatpush1.msra.mxu0 %v2327
    %2329 = vmatprep.subr.mxu0 0.0
    %2330 = vmatpush1.msra.mxu0 0.0
    %2331 = vmatprep.subr.mxu0 0.0
    %2332 = vmatpush1.msra.mxu0 0.0
    %2333 = vmatprep.subr.mxu0 0.0
    %2334 = vmatpush1.msra.mxu0 0.0
    %2335 = vmatprep.subr.mxu0 0.0
    %2336 = vmatpush1.msra.mxu0 0.0
    %2337 = vmatprep.subr.mxu0 0.0
    %2338 = vmatpush1.msra.mxu0 0.0
    %2339 = vmatprep.subr.mxu0 0.0
    %2340 = vmatpush1.msra.mxu0 0.0
    %2341 = vmatprep.subr.mxu0 0.0
    %2342 = vmatpush1.msra.mxu0 0.0
    %2343 = vmatprep.subr.mxu0 0.0
    %2344 = vmatpush1.msra.mxu0 0.0
    %2345 = vmatprep.subr.mxu0 0.0
    %2346 = vmatpush1.msra.mxu0 0.0
    %2347 = vmatprep.subr.mxu0 0.0
    %2348 = vmatpush1.msra.mxu0 0.0
    %2349 = vmatprep.subr.mxu0 0.0
    %2350 = vmatpush1.msra.mxu0 0.0
    %2351 = vmatprep.subr.mxu0 0.0
    %2352 = vmatpush1.msra.mxu0 0.0
    %2353 = vmatprep.subr.mxu0 0.0
    %2354 = vmatpush1.msra.mxu0 0.0
    %2355 = vmatprep.subr.mxu0 0.0
    %2356 = vmatpush1.msra.mxu0 0.0
    %2357 = vmatprep.subr.mxu0 0.0
    %2358 = vmatpush1.msra.mxu0 0.0
    %2359 = vmatprep.subr.mxu0 0.0
    %2360 = vmatpush1.msra.mxu0 0.0
    %2361 = vmatprep.subr.mxu0 0.0
    %2362 = vmatpush1.msra.mxu0 0.0
    %2363 = vmatprep.subr.mxu0 0.0
    %2364 = vmatpush1.msra.mxu0 0.0
    %2365 = vmatprep.subr.mxu0 0.0
    %2366 = vmatpush1.msra.mxu0 0.0
    %2367 = vmatprep.subr.mxu0 0.0
    %2368 = vmatpush1.msra.mxu0 0.0
    %2369 = vmatprep.subr.mxu0 0.0
    %2370 = vmatpush1.msra.mxu0 0.0
    %2371 = vmatprep.subr.mxu0 0.0
    %2372 = vmatpush1.msra.mxu0 0.0
    %2373 = vmatprep.subr.mxu0 0.0
    %2374 = vmatpush1.msra.mxu0 0.0
    %2375 = vmatprep.subr.mxu0 0.0
    %2376 = vmatpush1.msra.mxu0 0.0
    %2377 = vmatprep.subr.mxu0 0.0
    %2378 = vmatpush1.msra.mxu0 0.0
    %2379 = vmatprep.subr.mxu0 0.0
    %2380 = vmatpush1.msra.mxu0 0.0
    %2381 = vmatprep.subr.mxu0 0.0
    %2382 = vmatpush1.msra.mxu0 0.0
    %2383 = vmatprep.subr.mxu0 0.0
    %2384 = vmatpush1.msra.mxu0 0.0
    %2385 = vmatprep.mubr.f32.mxu0 0.0
    %v2386 = vand.u32 %v2315, 4294901760
    %v2387 = vsub.f32 %v2315, %v2386
    %v2388 = vand.u32 %v2387, 4294901760
    %v2389 = vsub.f32 %v2387, %v2388
    %v2390 = vand.u32 %v2389, 4294901760
    %2391 = vmatmul.mubr.f32.gmra.mrb[0].mxu0 %v2390
    %v2392 = vpop.f32.mrb[0].mxu0
    %v2393 = vadd.f32 0.0, %v2392
    %v2394 = vpop.f32.mrb[0].mxu0
    %2395 = vdwg.mxu0
    %2396 = vmatprep.subr.mxu0 0.0
    %v2397 = vand.u32 %v1218, 4294901760
    %v2398 = vsub.f32 %v1218, %v2397
    %v2399 = vand.u32 %v2398, 4294901760
    %v2400 = vsub.f32 %v2398, %v2399
    %v2401 = vand.u32 %v2400, 4294901760
    %2402 = vmatpush1.msra.mxu0 %v2401
    %2403 = vmatprep.subr.mxu0 0.0
    %v2404 = vand.u32 %v1219, 4294901760
    %v2405 = vsub.f32 %v1219, %v2404
    %v2406 = vand.u32 %v2405, 4294901760
    %v2407 = vsub.f32 %v2405, %v2406
    %v2408 = vand.u32 %v2407, 4294901760
    %2409 = vmatpush1.msra.mxu0 %v2408
    %2410 = vmatprep.subr.mxu0 0.0
    %v2411 = vand.u32 %v1220, 4294901760
    %v2412 = vsub.f32 %v1220, %v2411
    %v2413 = vand.u32 %v2412, 4294901760
    %v2414 = vsub.f32 %v2412, %v2413
    %v2415 = vand.u32 %v2414, 4294901760
    %2416 = vmatpush1.msra.mxu0 %v2415
    %2417 = vmatprep.subr.mxu0 0.0
    %v2418 = vand.u32 %v1221, 4294901760
    %v2419 = vsub.f32 %v1221, %v2418
    %v2420 = vand.u32 %v2419, 4294901760
    %v2421 = vsub.f32 %v2419, %v2420
    %v2422 = vand.u32 %v2421, 4294901760
    %2423 = vmatpush1.msra.mxu0 %v2422
    %2424 = vmatprep.subr.mxu0 0.0
    %2425 = vmatpush1.msra.mxu0 0.0
    %2426 = vmatprep.subr.mxu0 0.0
    %2427 = vmatpush1.msra.mxu0 0.0
    %2428 = vmatprep.subr.mxu0 0.0
    %2429 = vmatpush1.msra.mxu0 0.0
    %2430 = vmatprep.subr.mxu0 0.0
    %2431 = vmatpush1.msra.mxu0 0.0
    %2432 = vmatprep.subr.mxu0 0.0
    %2433 = vmatpush1.msra.mxu0 0.0
    %2434 = vmatprep.subr.mxu0 0.0
    %2435 = vmatpush1.msra.mxu0 0.0
    %2436 = vmatprep.subr.mxu0 0.0
    %2437 = vmatpush1.msra.mxu0 0.0
    %2438 = vmatprep.subr.mxu0 0.0
    %2439 = vmatpush1.msra.mxu0 0.0
    %2440 = vmatprep.subr.mxu0 0.0
    %2441 = vmatpush1.msra.mxu0 0.0
    %2442 = vmatprep.subr.mxu0 0.0
    %2443 = vmatpush1.msra.mxu0 0.0
    %2444 = vmatprep.subr.mxu0 0.0
    %2445 = vmatpush1.msra.mxu0 0.0
    %2446 = vmatprep.subr.mxu0 0.0
    %2447 = vmatpush1.msra.mxu0 0.0
    %2448 = vmatprep.subr.mxu0 0.0
    %2449 = vmatpush1.msra.mxu0 0.0
    %2450 = vmatprep.subr.mxu0 0.0
    %2451 = vmatpush1.msra.mxu0 0.0
    %2452 = vmatprep.subr.mxu0 0.0
    %2453 = vmatpush1.msra.mxu0 0.0
    %2454 = vmatprep.subr.mxu0 0.0
    %2455 = vmatpush1.msra.mxu0 0.0
    %2456 = vmatprep.subr.mxu0 0.0
    %2457 = vmatpush1.msra.mxu0 0.0
    %2458 = vmatprep.subr.mxu0 0.0
    %2459 = vmatpush1.msra.mxu0 0.0
    %2460 = vmatprep.subr.mxu0 0.0
    %2461 = vmatpush1.msra.mxu0 0.0
    %2462 = vmatprep.subr.mxu0 0.0
    %2463 = vmatpush1.msra.mxu0 0.0
    %2464 = vmatprep.subr.mxu0 0.0
    %2465 = vmatpush1.msra.mxu0 0.0
    %2466 = vmatprep.subr.mxu0 0.0
    %2467 = vmatpush1.msra.mxu0 0.0
    %2468 = vmatprep.subr.mxu0 0.0
    %2469 = vmatpush1.msra.mxu0 0.0
    %2470 = vmatprep.subr.mxu0 0.0
    %2471 = vmatpush1.msra.mxu0 0.0
    %2472 = vmatprep.subr.mxu0 0.0
    %2473 = vmatpush1.msra.mxu0 0.0
    %2474 = vmatprep.subr.mxu0 0.0
    %2475 = vmatpush1.msra.mxu0 0.0
    %2476 = vmatprep.subr.mxu0 0.0
    %2477 = vmatpush1.msra.mxu0 0.0
    %2478 = vmatprep.subr.mxu0 0.0
    %2479 = vmatpush1.msra.mxu0 0.0
    %2480 = vmatprep.mubr.f32.mxu0 0.0
    %v2481 = vand.u32 %v2315, 4294901760
    %2482 = vmatmul.mubr.f32.gmra.mrb[0].mxu0 %v2481
    %v2483 = vpop.f32.mrb[0].mxu0
    %v2484 = vadd.f32 %v2393, %v2483
    %v2485 = vpop.f32.mrb[0].mxu0
    %2486 = vdwg.mxu0
    %2487 = vmatprep.subr.mxu0 0.0
    %v2488 = vand.u32 %v1218, 4294901760
    %v2489 = vsub.f32 %v1218, %v2488
    %2490 = vmatpush1.msra.mxu0 %v2489
    %2491 = vmatprep.subr.mxu0 0.0
    %v2492 = vand.u32 %v1219, 4294901760
    %v2493 = vsub.f32 %v1219, %v2492
    %2494 = vmatpush1.msra.mxu0 %v2493
    %2495 = vmatprep.subr.mxu0 0.0
    %v2496 = vand.u32 %v1220, 4294901760
    %v2497 = vsub.f32 %v1220, %v2496
    %2498 = vmatpush1.msra.mxu0 %v2497
    %2499 = vmatprep.subr.mxu0 0.0
    %v2500 = vand.u32 %v1221, 4294901760
    %v2501 = vsub.f32 %v1221, %v2500
    %2502 = vmatpush1.msra.mxu0 %v2501
    %2503 = vmatprep.subr.mxu0 0.0
    %2504 = vmatpush1.msra.mxu0 0.0
    %2505 = vmatprep.subr.mxu0 0.0
    %2506 = vmatpush1.msra.mxu0 0.0
    %2507 = vmatprep.subr.mxu0 0.0
    %2508 = vmatpush1.msra.mxu0 0.0
    %2509 = vmatprep.subr.mxu0 0.0
    %2510 = vmatpush1.msra.mxu0 0.0
    %2511 = vmatprep.subr.mxu0 0.0
    %2512 = vmatpush1.msra.mxu0 0.0
    %2513 = vmatprep.subr.mxu0 0.0
    %2514 = vmatpush1.msra.mxu0 0.0
    %2515 = vmatprep.subr.mxu0 0.0
    %2516 = vmatpush1.msra.mxu0 0.0
    %2517 = vmatprep.subr.mxu0 0.0
    %2518 = vmatpush1.msra.mxu0 0.0
    %2519 = vmatprep.subr.mxu0 0.0
    %2520 = vmatpush1.msra.mxu0 0.0
    %2521 = vmatprep.subr.mxu0 0.0
    %2522 = vmatpush1.msra.mxu0 0.0
    %2523 = vmatprep.subr.mxu0 0.0
    %2524 = vmatpush1.msra.mxu0 0.0
    %2525 = vmatprep.subr.mxu0 0.0
    %2526 = vmatpush1.msra.mxu0 0.0
    %2527 = vmatprep.subr.mxu0 0.0
    %2528 = vmatpush1.msra.mxu0 0.0
    %2529 = vmatprep.subr.mxu0 0.0
    %2530 = vmatpush1.msra.mxu0 0.0
    %2531 = vmatprep.subr.mxu0 0.0
    %2532 = vmatpush1.msra.mxu0 0.0
    %2533 = vmatprep.subr.mxu0 0.0
    %2534 = vmatpush1.msra.mxu0 0.0
    %2535 = vmatprep.subr.mxu0 0.0
    %2536 = vmatpush1.msra.mxu0 0.0
    %2537 = vmatprep.subr.mxu0 0.0
    %2538 = vmatpush1.msra.mxu0 0.0
    %2539 = vmatprep.subr.mxu0 0.0
    %2540 = vmatpush1.msra.mxu0 0.0
    %2541 = vmatprep.subr.mxu0 0.0
    %2542 = vmatpush1.msra.mxu0 0.0
    %2543 = vmatprep.subr.mxu0 0.0
    %2544 = vmatpush1.msra.mxu0 0.0
    %2545 = vmatprep.subr.mxu0 0.0
    %2546 = vmatpush1.msra.mxu0 0.0
    %2547 = vmatprep.subr.mxu0 0.0
    %2548 = vmatpush1.msra.mxu0 0.0
    %2549 = vmatprep.subr.mxu0 0.0
    %2550 = vmatpush1.msra.mxu0 0.0
    %2551 = vmatprep.subr.mxu0 0.0
    %2552 = vmatpush1.msra.mxu0 0.0
    %2553 = vmatprep.subr.mxu0 0.0
    %2554 = vmatpush1.msra.mxu0 0.0
    %2555 = vmatprep.subr.mxu0 0.0
    %2556 = vmatpush1.msra.mxu0 0.0
    %2557 = vmatprep.subr.mxu0 0.0
    %2558 = vmatpush1.msra.mxu0 0.0
    %2559 = vmatprep.mubr.f32.mxu0 0.0
    %v2560 = vand.u32 %v2315, 4294901760
    %v2561 = vsub.f32 %v2315, %v2560
    %2562 = vmatmul.mubr.f32.gmra.mrb[0].mxu0 %v2561
    %v2563 = vpop.f32.mrb[0].mxu0
    %v2564 = vadd.f32 %v2484, %v2563
    %v2565 = vpop.f32.mrb[0].mxu0
    %2566 = vdwg.mxu0
    %2567 = vmatprep.subr.mxu0 0.0
    %v2568 = vand.u32 %v1218, 4294901760
    %2569 = vmatpush1.msra.mxu0 %v2568
    %2570 = vmatprep.subr.mxu0 0.0
    %v2571 = vand.u32 %v1219, 4294901760
    %2572 = vmatpush1.msra.mxu0 %v2571
    %2573 = vmatprep.subr.mxu0 0.0
    %v2574 = vand.u32 %v1220, 4294901760
    %2575 = vmatpush1.msra.mxu0 %v2574
    %2576 = vmatprep.subr.mxu0 0.0
    %v2577 = vand.u32 %v1221, 4294901760
    %2578 = vmatpush1.msra.mxu0 %v2577
    %2579 = vmatprep.subr.mxu0 0.0
    %2580 = vmatpush1.msra.mxu0 0.0
    %2581 = vmatprep.subr.mxu0 0.0
    %2582 = vmatpush1.msra.mxu0 0.0
    %2583 = vmatprep.subr.mxu0 0.0
    %2584 = vmatpush1.msra.mxu0 0.0
    %2585 = vmatprep.subr.mxu0 0.0
    %2586 = vmatpush1.msra.mxu0 0.0
    %2587 = vmatprep.subr.mxu0 0.0
    %2588 = vmatpush1.msra.mxu0 0.0
    %2589 = vmatprep.subr.mxu0 0.0
    %2590 = vmatpush1.msra.mxu0 0.0
    %2591 = vmatprep.subr.mxu0 0.0
    %2592 = vmatpush1.msra.mxu0 0.0
    %2593 = vmatprep.subr.mxu0 0.0
    %2594 = vmatpush1.msra.mxu0 0.0
    %2595 = vmatprep.subr.mxu0 0.0
    %2596 = vmatpush1.msra.mxu0 0.0
    %2597 = vmatprep.subr.mxu0 0.0
    %2598 = vmatpush1.msra.mxu0 0.0
    %2599 = vmatprep.subr.mxu0 0.0
    %2600 = vmatpush1.msra.mxu0 0.0
    %2601 = vmatprep.subr.mxu0 0.0
    %2602 = vmatpush1.msra.mxu0 0.0
    %2603 = vmatprep.subr.mxu0 0.0
    %2604 = vmatpush1.msra.mxu0 0.0
    %2605 = vmatprep.subr.mxu0 0.0
    %2606 = vmatpush1.msra.mxu0 0.0
    %2607 = vmatprep.subr.mxu0 0.0
    %2608 = vmatpush1.msra.mxu0 0.0
    %2609 = vmatprep.subr.mxu0 0.0
    %2610 = vmatpush1.msra.mxu0 0.0
    %2611 = vmatprep.subr.mxu0 0.0
    %2612 = vmatpush1.msra.mxu0 0.0
    %2613 = vmatprep.subr.mxu0 0.0
    %2614 = vmatpush1.msra.mxu0 0.0
    %2615 = vmatprep.subr.mxu0 0.0
    %2616 = vmatpush1.msra.mxu0 0.0
    %2617 = vmatprep.subr.mxu0 0.0
    %2618 = vmatpush1.msra.mxu0 0.0
    %2619 = vmatprep.subr.mxu0 0.0
    %2620 = vmatpush1.msra.mxu0 0.0
    %2621 = vmatprep.subr.mxu0 0.0
    %2622 = vmatpush1.msra.mxu0 0.0
    %2623 = vmatprep.subr.mxu0 0.0
    %2624 = vmatpush1.msra.mxu0 0.0
    %2625 = vmatprep.subr.mxu0 0.0
    %2626 = vmatpush1.msra.mxu0 0.0
    %2627 = vmatprep.subr.mxu0 0.0
    %2628 = vmatpush1.msra.mxu0 0.0
    %2629 = vmatprep.subr.mxu0 0.0
    %2630 = vmatpush1.msra.mxu0 0.0
    %2631 = vmatprep.subr.mxu0 0.0
    %2632 = vmatpush1.msra.mxu0 0.0
    %2633 = vmatprep.subr.mxu0 0.0
    %2634 = vmatpush1.msra.mxu0 0.0
    %2635 = vmatprep.mubr.f32.mxu0 0.0
    %v2636 = vand.u32 %v2315, 4294901760
    %v2637 = vsub.f32 %v2315, %v2636
    %v2638 = vand.u32 %v2637, 4294901760
    %2639 = vmatmul.mubr.f32.gmra.mrb[0].mxu0 %v2638
    %v2640 = vpop.f32.mrb[0].mxu0
    %v2641 = vadd.f32 %v2564, %v2640
    %v2642 = vpop.f32.mrb[0].mxu0
    %2643 = vdwg.mxu0
    %2644 = vmatprep.subr.mxu0 0.0
    %v2645 = vand.u32 %v1218, 4294901760
    %v2646 = vsub.f32 %v1218, %v2645
    %v2647 = vand.u32 %v2646, 4294901760
    %2648 = vmatpush1.msra.mxu0 %v2647
    %2649 = vmatprep.subr.mxu0 0.0
    %v2650 = vand.u32 %v1219, 4294901760
    %v2651 = vsub.f32 %v1219, %v2650
    %v2652 = vand.u32 %v2651, 4294901760
    %2653 = vmatpush1.msra.mxu0 %v2652
    %2654 = vmatprep.subr.mxu0 0.0
    %v2655 = vand.u32 %v1220, 4294901760
    %v2656 = vsub.f32 %v1220, %v2655
    %v2657 = vand.u32 %v2656, 4294901760
    %2658 = vmatpush1.msra.mxu0 %v2657
    %2659 = vmatprep.subr.mxu0 0.0
    %v2660 = vand.u32 %v1221, 4294901760
    %v2661 = vsub.f32 %v1221, %v2660
    %v2662 = vand.u32 %v2661, 4294901760
    %2663 = vmatpush1.msra.mxu0 %v2662
    %2664 = vmatprep.subr.mxu0 0.0
    %2665 = vmatpush1.msra.mxu0 0.0
    %2666 = vmatprep.subr.mxu0 0.0
    %2667 = vmatpush1.msra.mxu0 0.0
    %2668 = vmatprep.subr.mxu0 0.0
    %2669 = vmatpush1.msra.mxu0 0.0
    %2670 = vmatprep.subr.mxu0 0.0
    %2671 = vmatpush1.msra.mxu0 0.0
    %2672 = vmatprep.subr.mxu0 0.0
    %2673 = vmatpush1.msra.mxu0 0.0
    %2674 = vmatprep.subr.mxu0 0.0
    %2675 = vmatpush1.msra.mxu0 0.0
    %2676 = vmatprep.subr.mxu0 0.0
    %2677 = vmatpush1.msra.mxu0 0.0
    %2678 = vmatprep.subr.mxu0 0.0
    %2679 = vmatpush1.msra.mxu0 0.0
    %2680 = vmatprep.subr.mxu0 0.0
    %2681 = vmatpush1.msra.mxu0 0.0
    %2682 = vmatprep.subr.mxu0 0.0
    %2683 = vmatpush1.msra.mxu0 0.0
    %2684 = vmatprep.subr.mxu0 0.0
    %2685 = vmatpush1.msra.mxu0 0.0
    %2686 = vmatprep.subr.mxu0 0.0
    %2687 = vmatpush1.msra.mxu0 0.0
    %2688 = vmatprep.subr.mxu0 0.0
    %2689 = vmatpush1.msra.mxu0 0.0
    %2690 = vmatprep.subr.mxu0 0.0
    %2691 = vmatpush1.msra.mxu0 0.0
    %2692 = vmatprep.subr.mxu0 0.0
    %2693 = vmatpush1.msra.mxu0 0.0
    %2694 = vmatprep.subr.mxu0 0.0
    %2695 = vmatpush1.msra.mxu0 0.0
    %2696 = vmatprep.subr.mxu0 0.0
    %2697 = vmatpush1.msra.mxu0 0.0
    %2698 = vmatprep.subr.mxu0 0.0
    %2699 = vmatpush1.msra.mxu0 0.0
    %2700 = vmatprep.subr.mxu0 0.0
    %2701 = vmatpush1.msra.mxu0 0.0
    %2702 = vmatprep.subr.mxu0 0.0
    %2703 = vmatpush1.msra.mxu0 0.0
    %2704 = vmatprep.subr.mxu0 0.0
    %2705 = vmatpush1.msra.mxu0 0.0
    %2706 = vmatprep.subr.mxu0 0.0
    %2707 = vmatpush1.msra.mxu0 0.0
    %2708 = vmatprep.subr.mxu0 0.0
    %2709 = vmatpush1.msra.mxu0 0.0
    %2710 = vmatprep.subr.mxu0 0.0
    %2711 = vmatpush1.msra.mxu0 0.0
    %2712 = vmatprep.subr.mxu0 0.0
    %2713 = vmatpush1.msra.mxu0 0.0
    %2714 = vmatprep.subr.mxu0 0.0
    %2715 = vmatpush1.msra.mxu0 0.0
    %2716 = vmatprep.subr.mxu0 0.0
    %2717 = vmatpush1.msra.mxu0 0.0
    %2718 = vmatprep.subr.mxu0 0.0
    %2719 = vmatpush1.msra.mxu0 0.0
    %2720 = vmatprep.mubr.f32.mxu0 0.0
    %v2721 = vand.u32 %v2315, 4294901760
    %2722 = vmatmul.mubr.f32.gmra.mrb[0].mxu0 %v2721
    %v2723 = vpop.f32.mrb[0].mxu0
    %v2724 = vadd.f32 %v2641, %v2723
    %v2725 = vpop.f32.mrb[0].mxu0
    %2726 = vdwg.mxu0
    %2727 = vmatprep.subr.mxu0 0.0
    %v2728 = vand.u32 %v1218, 4294901760
    %2729 = vmatpush1.msra.mxu0 %v2728
    %2730 = vmatprep.subr.mxu0 0.0
    %v2731 = vand.u32 %v1219, 4294901760
    %2732 = vmatpush1.msra.mxu0 %v2731
    %2733 = vmatprep.subr.mxu0 0.0
    %v2734 = vand.u32 %v1220, 4294901760
    %2735 = vmatpush1.msra.mxu0 %v2734
    %2736 = vmatprep.subr.mxu0 0.0
    %v2737 = vand.u32 %v1221, 4294901760
    %2738 = vmatpush1.msra.mxu0 %v2737
    %2739 = vmatprep.subr.mxu0 0.0
    %2740 = vmatpush1.msra.mxu0 0.0
    %2741 = vmatprep.subr.mxu0 0.0
    %2742 = vmatpush1.msra.mxu0 0.0
    %2743 = vmatprep.subr.mxu0 0.0
    %2744 = vmatpush1.msra.mxu0 0.0
    %2745 = vmatprep.subr.mxu0 0.0
    %2746 = vmatpush1.msra.mxu0 0.0
    %2747 = vmatprep.subr.mxu0 0.0
    %2748 = vmatpush1.msra.mxu0 0.0
    %2749 = vmatprep.subr.mxu0 0.0
    %2750 = vmatpush1.msra.mxu0 0.0
    %2751 = vmatprep.subr.mxu0 0.0
    %2752 = vmatpush1.msra.mxu0 0.0
    %2753 = vmatprep.subr.mxu0 0.0
    %2754 = vmatpush1.msra.mxu0 0.0
    %2755 = vmatprep.subr.mxu0 0.0
    %2756 = vmatpush1.msra.mxu0 0.0
    %2757 = vmatprep.subr.mxu0 0.0
    %2758 = vmatpush1.msra.mxu0 0.0
    %2759 = vmatprep.subr.mxu0 0.0
    %2760 = vmatpush1.msra.mxu0 0.0
    %2761 = vmatprep.subr.mxu0 0.0
    %2762 = vmatpush1.msra.mxu0 0.0
    %2763 = vmatprep.subr.mxu0 0.0
    %2764 = vmatpush1.msra.mxu0 0.0
    %2765 = vmatprep.subr.mxu0 0.0
    %2766 = vmatpush1.msra.mxu0 0.0
    %2767 = vmatprep.subr.mxu0 0.0
    %2768 = vmatpush1.msra.mxu0 0.0
    %2769 = vmatprep.subr.mxu0 0.0
    %2770 = vmatpush1.msra.mxu0 0.0
    %2771 = vmatprep.subr.mxu0 0.0
    %2772 = vmatpush1.msra.mxu0 0.0
    %2773 = vmatprep.subr.mxu0 0.0
    %2774 = vmatpush1.msra.mxu0 0.0
    %2775 = vmatprep.subr.mxu0 0.0
    %2776 = vmatpush1.msra.mxu0 0.0
    %2777 = vmatprep.subr.mxu0 0.0
    %2778 = vmatpush1.msra.mxu0 0.0
    %2779 = vmatprep.subr.mxu0 0.0
    %2780 = vmatpush1.msra.mxu0 0.0
    %2781 = vmatprep.subr.mxu0 0.0
    %2782 = vmatpush1.msra.mxu0 0.0
    %2783 = vmatprep.subr.mxu0 0.0
    %2784 = vmatpush1.msra.mxu0 0.0
    %2785 = vmatprep.subr.mxu0 0.0
    %2786 = vmatpush1.msra.mxu0 0.0
    %2787 = vmatprep.subr.mxu0 0.0
    %2788 = vmatpush1.msra.mxu0 0.0
    %2789 = vmatprep.subr.mxu0 0.0
    %2790 = vmatpush1.msra.mxu0 0.0
    %2791 = vmatprep.subr.mxu0 0.0
    %2792 = vmatpush1.msra.mxu0 0.0
    %2793 = vmatprep.subr.mxu0 0.0
    %2794 = vmatpush1.msra.mxu0 0.0
    %2795 = vmatprep.mubr.f32.mxu0 0.0
    %v2796 = vand.u32 %v2315, 4294901760
    %2797 = vmatmul.mubr.f32.gmra.mrb[0].mxu0 %v2796
    %v2798 = vpop.f32.mrb[0].mxu0
    %v2799 = vadd.f32 %v2724, %v2798
    %v2800 = vpop.f32.mrb[0].mxu0
    %2801 = vdwg.mxu0
    %v2802 = vadd.f32 %v2313, %v2799
    %v2803 = vxor.u32 %v2802, 2147483648
    %v2804 = vmul.f32 %v2803, 1.442695
    %v2805 = vpow.pop %v2804
    %v2806 = vadd.f32 %v2805, 1.0
    %v2807 = vrcp.pop %v2806
    %v2808 = vmul.f32 1.0, %v2807
    %v2809 = vtanh.pop %v2802
    %2811 = vrot.lane.b32.xlu0 %v2311, 32
    %v2812 = vpop.permute.xlu0 %2811
    %v2814 = vmul.f32 %v2808, %v2812
    %2816 = vrot.lane.b32.xlu0 %v2809, 32
    %v2817 = vpop.permute.xlu0 %2816
    %v2819 = vmul.f32 %v2808, %v2817
    %2821 = vrot.lane.b32.xlu0 %v2819, 32
    %v2822 = vpop.permute.xlu0 %2821
    %v2824 = vadd.f32 %v2814, %v2822
    %v2825 = vtanh.pop %v2824
    %2827 = vrot.lane.b32.xlu0 %v2825, 32
    %v2828 = vpop.permute.xlu0 %2827
    %v2830 = vmul.f32 %v2808, %v2828
    %2832 = vrot.lane.b32.xlu0 %v2830, 64
    %v2833 = vpop.permute.xlu0 %2832
    %2835 = vst.msk [vmem:[#allocation2] sm:$0xff] %vm1209, %v2833
    %2837 = vrot.lane.b32.xlu0 %v2824, 96
    %v2838 = vpop.permute.xlu0 %2837
    %2840 = vst.msk [vmem:[#allocation3] sm:$0xff] %vm1209, %v2838
    %v2841 = vld [vmem:[#allocation6] sm:$0xff]
    %s2842 = scalar_lea.vmem [#allocation5], 16
    %v2843 = vld [vmem:[%s2842] sm:$0xff]
    %2845 = vrot.lane.b32.xlu0 %v2843, 64
    %v2846 = vpop.permute.xlu0 %2845
    %v2848 = vsub.f32 %v2830, %v2846
    %2850 = vrot.lane.b32.xlu0 %v2848, 64
    %v2851 = vpop.permute.xlu0 %2850
    %v2853 = vmax.f32 %v2841, %v2851
    %2854 = vst.msk [vmem:[#allocation6] sm:$0xff] %vm1209, %v2853
    %v2855 = vld [vmem:[#allocation2] sm:$0xff]
    %v2856 = vld [vmem:[#allocation3] sm:$0xff]
    %s2857 = scalar_lea.vmem [#allocation4], 24
    %v2858 = vld [vmem:[%s2857] sm:$0xff]
    %v2860 = vsel %vm1209, %v2855, 0
    %2862 = vmatprep.subr.mxu0 0.0
    %v2863 = vand.u32 %v1218, 4294901760
    %2864 = vmatpush1.msra.mxu0 %v2863
    %2865 = vmatprep.subr.mxu0 0.0
    %v2866 = vand.u32 %v1219, 4294901760
    %2867 = vmatpush1.msra.mxu0 %v2866
    %2868 = vmatprep.subr.mxu0 0.0
    %v2869 = vand.u32 %v1220, 4294901760
    %2870 = vmatpush1.msra.mxu0 %v2869
    %2871 = vmatprep.subr.mxu0 0.0
    %v2872 = vand.u32 %v1221, 4294901760
    %2873 = vmatpush1.msra.mxu0 %v2872
    %2874 = vmatprep.subr.mxu0 0.0
    %2875 = vmatpush1.msra.mxu0 0.0
    %2876 = vmatprep.subr.mxu0 0.0
    %2877 = vmatpush1.msra.mxu0 0.0
    %2878 = vmatprep.subr.mxu0 0.0
    %2879 = vmatpush1.msra.mxu0 0.0
    %2880 = vmatprep.subr.mxu0 0.0
    %2881 = vmatpush1.msra.mxu0 0.0
    %2882 = vmatprep.subr.mxu0 0.0
    %2883 = vmatpush1.msra.mxu0 0.0
    %2884 = vmatprep.subr.mxu0 0.0
    %2885 = vmatpush1.msra.mxu0 0.0
    %2886 = vmatprep.subr.mxu0 0.0
    %2887 = vmatpush1.msra.mxu0 0.0
    %2888 = vmatprep.subr.mxu0 0.0
    %2889 = vmatpush1.msra.mxu0 0.0
    %2890 = vmatprep.subr.mxu0 0.0
    %2891 = vmatpush1.msra.mxu0 0.0
    %2892 = vmatprep.subr.mxu0 0.0
    %2893 = vmatpush1.msra.mxu0 0.0
    %2894 = vmatprep.subr.mxu0 0.0
    %2895 = vmatpush1.msra.mxu0 0.0
    %2896 = vmatprep.subr.mxu0 0.0
    %2897 = vmatpush1.msra.mxu0 0.0
    %2898 = vmatprep.subr.mxu0 0.0
    %2899 = vmatpush1.msra.mxu0 0.0
    %2900 = vmatprep.subr.mxu0 0.0
    %2901 = vmatpush1.msra.mxu0 0.0
    %2902 = vmatprep.subr.mxu0 0.0
    %2903 = vmatpush1.msra.mxu0 0.0
    %2904 = vmatprep.subr.mxu0 0.0
    %2905 = vmatpush1.msra.mxu0 0.0
    %2906 = vmatprep.subr.mxu0 0.0
    %2907 = vmatpush1.msra.mxu0 0.0
    %2908 = vmatprep.subr.mxu0 0.0
    %2909 = vmatpush1.msra.mxu0 0.0
    %2910 = vmatprep.subr.mxu0 0.0
    %2911 = vmatpush1.msra.mxu0 0.0
    %2912 = vmatprep.subr.mxu0 0.0
    %2913 = vmatpush1.msra.mxu0 0.0
    %2914 = vmatprep.subr.mxu0 0.0
    %2915 = vmatpush1.msra.mxu0 0.0
    %2916 = vmatprep.subr.mxu0 0.0
    %2917 = vmatpush1.msra.mxu0 0.0
    %2918 = vmatprep.subr.mxu0 0.0
    %2919 = vmatpush1.msra.mxu0 0.0
    %2920 = vmatprep.subr.mxu0 0.0
    %2921 = vmatpush1.msra.mxu0 0.0
    %2922 = vmatprep.subr.mxu0 0.0
    %2923 = vmatpush1.msra.mxu0 0.0
    %2924 = vmatprep.subr.mxu0 0.0
    %2925 = vmatpush1.msra.mxu0 0.0
    %2926 = vmatprep.subr.mxu0 0.0
    %2927 = vmatpush1.msra.mxu0 0.0
    %2928 = vmatprep.subr.mxu0 0.0
    %2929 = vmatpush1.msra.mxu0 0.0
    %2930 = vmatprep.mubr.f32.mxu0 0.0
    %v2931 = vand.u32 %v2860, 4294901760
    %v2932 = vsub.f32 %v2860, %v2931
    %v2933 = vand.u32 %v2932, 4294901760
    %v2934 = vsub.f32 %v2932, %v2933
    %v2935 = vand.u32 %v2934, 4294901760
    %2936 = vmatmul.mubr.f32.gmra.mrb[0].mxu0 %v2935
    %v2937 = vpop.f32.mrb[0].mxu0
    %v2938 = vadd.f32 0.0, %v2937
    %v2939 = vpop.f32.mrb[0].mxu0
    %2940 = vdwg.mxu0
    %2941 = vmatprep.subr.mxu0 0.0
    %v2942 = vand.u32 %v1218, 4294901760
    %v2943 = vsub.f32 %v1218, %v2942
    %v2944 = vand.u32 %v2943, 4294901760
    %v2945 = vsub.f32 %v2943, %v2944
    %v2946 = vand.u32 %v2945, 4294901760
    %2947 = vmatpush1.msra.mxu0 %v2946
    %2948 = vmatprep.subr.mxu0 0.0
    %v2949 = vand.u32 %v1219, 4294901760
    %v2950 = vsub.f32 %v1219, %v2949
    %v2951 = vand.u32 %v2950, 4294901760
    %v2952 = vsub.f32 %v2950, %v2951
    %v2953 = vand.u32 %v2952, 4294901760
    %2954 = vmatpush1.msra.mxu0 %v2953
    %2955 = vmatprep.subr.mxu0 0.0
    %v2956 = vand.u32 %v1220, 4294901760
    %v2957 = vsub.f32 %v1220, %v2956
    %v2958 = vand.u32 %v2957, 4294901760
    %v2959 = vsub.f32 %v2957, %v2958
    %v2960 = vand.u32 %v2959, 4294901760
    %2961 = vmatpush1.msra.mxu0 %v2960
    %2962 = vmatprep.subr.mxu0 0.0
    %v2963 = vand.u32 %v1221, 4294901760
    %v2964 = vsub.f32 %v1221, %v2963
    %v2965 = vand.u32 %v2964, 4294901760
    %v2966 = vsub.f32 %v2964, %v2965
    %v2967 = vand.u32 %v2966, 4294901760
    %2968 = vmatpush1.msra.mxu0 %v2967
    %2969 = vmatprep.subr.mxu0 0.0
    %2970 = vmatpush1.msra.mxu0 0.0
    %2971 = vmatprep.subr.mxu0 0.0
    %2972 = vmatpush1.msra.mxu0 0.0
    %2973 = vmatprep.subr.mxu0 0.0
    %2974 = vmatpush1.msra.mxu0 0.0
    %2975 = vmatprep.subr.mxu0 0.0
    %2976 = vmatpush1.msra.mxu0 0.0
    %2977 = vmatprep.subr.mxu0 0.0
    %2978 = vmatpush1.msra.mxu0 0.0
    %2979 = vmatprep.subr.mxu0 0.0
    %2980 = vmatpush1.msra.mxu0 0.0
    %2981 = vmatprep.subr.mxu0 0.0
    %2982 = vmatpush1.msra.mxu0 0.0
    %2983 = vmatprep.subr.mxu0 0.0
    %2984 = vmatpush1.msra.mxu0 0.0
    %2985 = vmatprep.subr.mxu0 0.0
    %2986 = vmatpush1.msra.mxu0 0.0
    %2987 = vmatprep.subr.mxu0 0.0
    %2988 = vmatpush1.msra.mxu0 0.0
    %2989 = vmatprep.subr.mxu0 0.0
    %2990 = vmatpush1.msra.mxu0 0.0
    %2991 = vmatprep.subr.mxu0 0.0
    %2992 = vmatpush1.msra.mxu0 0.0
    %2993 = vmatprep.subr.mxu0 0.0
    %2994 = vmatpush1.msra.mxu0 0.0
    %2995 = vmatprep.subr.mxu0 0.0
    %2996 = vmatpush1.msra.mxu0 0.0
    %2997 = vmatprep.subr.mxu0 0.0
    %2998 = vmatpush1.msra.mxu0 0.0
    %2999 = vmatprep.subr.mxu0 0.0
    %3000 = vmatpush1.msra.mxu0 0.0
    %3001 = vmatprep.subr.mxu0 0.0
    %3002 = vmatpush1.msra.mxu0 0.0
    %3003 = vmatprep.subr.mxu0 0.0
    %3004 = vmatpush1.msra.mxu0 0.0
    %3005 = vmatprep.subr.mxu0 0.0
    %3006 = vmatpush1.msra.mxu0 0.0
    %3007 = vmatprep.subr.mxu0 0.0
    %3008 = vmatpush1.msra.mxu0 0.0
    %3009 = vmatprep.subr.mxu0 0.0
    %3010 = vmatpush1.msra.mxu0 0.0
    %3011 = vmatprep.subr.mxu0 0.0
    %3012 = vmatpush1.msra.mxu0 0.0
    %3013 = vmatprep.subr.mxu0 0.0
    %3014 = vmatpush1.msra.mxu0 0.0
    %3015 = vmatprep.subr.mxu0 0.0
    %3016 = vmatpush1.msra.mxu0 0.0
    %3017 = vmatprep.subr.mxu0 0.0
    %3018 = vmatpush1.msra.mxu0 0.0
    %3019 = vmatprep.subr.mxu0 0.0
    %3020 = vmatpush1.msra.mxu0 0.0
    %3021 = vmatprep.subr.mxu0 0.0
    %3022 = vmatpush1.msra.mxu0 0.0
    %3023 = vmatprep.subr.mxu0 0.0
    %3024 = vmatpush1.msra.mxu0 0.0
    %3025 = vmatprep.mubr.f32.mxu0 0.0
    %v3026 = vand.u32 %v2860, 4294901760
    %3027 = vmatmul.mubr.f32.gmra.mrb[0].mxu0 %v3026
    %v3028 = vpop.f32.mrb[0].mxu0
    %v3029 = vadd.f32 %v2938, %v3028
    %v3030 = vpop.f32.mrb[0].mxu0
    %3031 = vdwg.mxu0
    %3032 = vmatprep.subr.mxu0 0.0
    %v3033 = vand.u32 %v1218, 4294901760
    %v3034 = vsub.f32 %v1218, %v3033
    %3035 = vmatpush1.msra.mxu0 %v3034
    %3036 = vmatprep.subr.mxu0 0.0
    %v3037 = vand.u32 %v1219, 4294901760
    %v3038 = vsub.f32 %v1219, %v3037
    %3039 = vmatpush1.msra.mxu0 %v3038
    %3040 = vmatprep.subr.mxu0 0.0
    %v3041 = vand.u32 %v1220, 4294901760
    %v3042 = vsub.f32 %v1220, %v3041
    %3043 = vmatpush1.msra.mxu0 %v3042
    %3044 = vmatprep.subr.mxu0 0.0
    %v3045 = vand.u32 %v1221, 4294901760
    %v3046 = vsub.f32 %v1221, %v3045
    %3047 = vmatpush1.msra.mxu0 %v3046
    %3048 = vmatprep.subr.mxu0 0.0
    %3049 = vmatpush1.msra.mxu0 0.0
    %3050 = vmatprep.subr.mxu0 0.0
    %3051 = vmatpush1.msra.mxu0 0.0
    %3052 = vmatprep.subr.mxu0 0.0
    %3053 = vmatpush1.msra.mxu0 0.0
    %3054 = vmatprep.subr.mxu0 0.0
    %3055 = vmatpush1.msra.mxu0 0.0
    %3056 = vmatprep.subr.mxu0 0.0
    %3057 = vmatpush1.msra.mxu0 0.0
    %3058 = vmatprep.subr.mxu0 0.0
    %3059 = vmatpush1.msra.mxu0 0.0
    %3060 = vmatprep.subr.mxu0 0.0
    %3061 = vmatpush1.msra.mxu0 0.0
    %3062 = vmatprep.subr.mxu0 0.0
    %3063 = vmatpush1.msra.mxu0 0.0
    %3064 = vmatprep.subr.mxu0 0.0
    %3065 = vmatpush1.msra.mxu0 0.0
    %3066 = vmatprep.subr.mxu0 0.0
    %3067 = vmatpush1.msra.mxu0 0.0
    %3068 = vmatprep.subr.mxu0 0.0
    %3069 = vmatpush1.msra.mxu0 0.0
    %3070 = vmatprep.subr.mxu0 0.0
    %3071 = vmatpush1.msra.mxu0 0.0
    %3072 = vmatprep.subr.mxu0 0.0
    %3073 = vmatpush1.msra.mxu0 0.0
    %3074 = vmatprep.subr.mxu0 0.0
    %3075 = vmatpush1.msra.mxu0 0.0
    %3076 = vmatprep.subr.mxu0 0.0
    %3077 = vmatpush1.msra.mxu0 0.0
    %3078 = vmatprep.subr.mxu0 0.0
    %3079 = vmatpush1.msra.mxu0 0.0
    %3080 = vmatprep.subr.mxu0 0.0
    %3081 = vmatpush1.msra.mxu0 0.0
    %3082 = vmatprep.subr.mxu0 0.0
    %3083 = vmatpush1.msra.mxu0 0.0
    %3084 = vmatprep.subr.mxu0 0.0
    %3085 = vmatpush1.msra.mxu0 0.0
    %3086 = vmatprep.subr.mxu0 0.0
    %3087 = vmatpush1.msra.mxu0 0.0
    %3088 = vmatprep.subr.mxu0 0.0
    %3089 = vmatpush1.msra.mxu0 0.0
    %3090 = vmatprep.subr.mxu0 0.0
    %3091 = vmatpush1.msra.mxu0 0.0
    %3092 = vmatprep.subr.mxu0 0.0
    %3093 = vmatpush1.msra.mxu0 0.0
    %3094 = vmatprep.subr.mxu0 0.0
    %3095 = vmatpush1.msra.mxu0 0.0
    %3096 = vmatprep.subr.mxu0 0.0
    %3097 = vmatpush1.msra.mxu0 0.0
    %3098 = vmatprep.subr.mxu0 0.0
    %3099 = vmatpush1.msra.mxu0 0.0
    %3100 = vmatprep.subr.mxu0 0.0
    %3101 = vmatpush1.msra.mxu0 0.0
    %3102 = vmatprep.subr.mxu0 0.0
    %3103 = vmatpush1.msra.mxu0 0.0
    %3104 = vmatprep.mubr.f32.mxu0 0.0
    %v3105 = vand.u32 %v2860, 4294901760
    %v3106 = vsub.f32 %v2860, %v3105
    %3107 = vmatmul.mubr.f32.gmra.mrb[0].mxu0 %v3106
    %v3108 = vpop.f32.mrb[0].mxu0
    %v3109 = vadd.f32 %v3029, %v3108
    %v3110 = vpop.f32.mrb[0].mxu0
    %3111 = vdwg.mxu0
    %3112 = vmatprep.subr.mxu0 0.0
    %v3113 = vand.u32 %v1218, 4294901760
    %3114 = vmatpush1.msra.mxu0 %v3113
    %3115 = vmatprep.subr.mxu0 0.0
    %v3116 = vand.u32 %v1219, 4294901760
    %3117 = vmatpush1.msra.mxu0 %v3116
    %3118 = vmatprep.subr.mxu0 0.0
    %v3119 = vand.u32 %v1220, 4294901760
    %3120 = vmatpush1.msra.mxu0 %v3119
    %3121 = vmatprep.subr.mxu0 0.0
    %v3122 = vand.u32 %v1221, 4294901760
    %3123 = vmatpush1.msra.mxu0 %v3122
    %3124 = vmatprep.subr.mxu0 0.0
    %3125 = vmatpush1.msra.mxu0 0.0
    %3126 = vmatprep.subr.mxu0 0.0
    %3127 = vmatpush1.msra.mxu0 0.0
    %3128 = vmatprep.subr.mxu0 0.0
    %3129 = vmatpush1.msra.mxu0 0.0
    %3130 = vmatprep.subr.mxu0 0.0
    %3131 = vmatpush1.msra.mxu0 0.0
    %3132 = vmatprep.subr.mxu0 0.0
    %3133 = vmatpush1.msra.mxu0 0.0
    %3134 = vmatprep.subr.mxu0 0.0
    %3135 = vmatpush1.msra.mxu0 0.0
    %3136 = vmatprep.subr.mxu0 0.0
    %3137 = vmatpush1.msra.mxu0 0.0
    %3138 = vmatprep.subr.mxu0 0.0
    %3139 = vmatpush1.msra.mxu0 0.0
    %3140 = vmatprep.subr.mxu0 0.0
    %3141 = vmatpush1.msra.mxu0 0.0
    %3142 = vmatprep.subr.mxu0 0.0
    %3143 = vmatpush1.msra.mxu0 0.0
    %3144 = vmatprep.subr.mxu0 0.0
    %3145 = vmatpush1.msra.mxu0 0.0
    %3146 = vmatprep.subr.mxu0 0.0
    %3147 = vmatpush1.msra.mxu0 0.0
    %3148 = vmatprep.subr.mxu0 0.0
    %3149 = vmatpush1.msra.mxu0 0.0
    %3150 = vmatprep.subr.mxu0 0.0
    %3151 = vmatpush1.msra.mxu0 0.0
    %3152 = vmatprep.subr.mxu0 0.0
    %3153 = vmatpush1.msra.mxu0 0.0
    %3154 = vmatprep.subr.mxu0 0.0
    %3155 = vmatpush1.msra.mxu0 0.0
    %3156 = vmatprep.subr.mxu0 0.0
    %3157 = vmatpush1.msra.mxu0 0.0
    %3158 = vmatprep.subr.mxu0 0.0
    %3159 = vmatpush1.msra.mxu0 0.0
    %3160 = vmatprep.subr.mxu0 0.0
    %3161 = vmatpush1.msra.mxu0 0.0
    %3162 = vmatprep.subr.mxu0 0.0
    %3163 = vmatpush1.msra.mxu0 0.0
    %3164 = vmatprep.subr.mxu0 0.0
    %3165 = vmatpush1.msra.mxu0 0.0
    %3166 = vmatprep.subr.mxu0 0.0
    %3167 = vmatpush1.msra.mxu0 0.0
    %3168 = vmatprep.subr.mxu0 0.0
    %3169 = vmatpush1.msra.mxu0 0.0
    %3170 = vmatprep.subr.mxu0 0.0
    %3171 = vmatpush1.msra.mxu0 0.0
    %3172 = vmatprep.subr.mxu0 0.0
    %3173 = vmatpush1.msra.mxu0 0.0
    %3174 = vmatprep.subr.mxu0 0.0
    %3175 = vmatpush1.msra.mxu0 0.0
    %3176 = vmatprep.subr.mxu0 0.0
    %3177 = vmatpush1.msra.mxu0 0.0
    %3178 = vmatprep.subr.mxu0 0.0
    %3179 = vmatpush1.msra.mxu0 0.0
    %3180 = vmatprep.mubr.f32.mxu0 0.0
    %v3181 = vand.u32 %v2860, 4294901760
    %v3182 = vsub.f32 %v2860, %v3181
    %v3183 = vand.u32 %v3182, 4294901760
    %3184 = vmatmul.mubr.f32.gmra.mrb[0].mxu0 %v3183
    %v3185 = vpop.f32.mrb[0].mxu0
    %v3186 = vadd.f32 %v3109, %v3185
    %v3187 = vpop.f32.mrb[0].mxu0
    %3188 = vdwg.mxu0
    %3189 = vmatprep.subr.mxu0 0.0
    %v3190 = vand.u32 %v1218, 4294901760
    %v3191 = vsub.f32 %v1218, %v3190
    %v3192 = vand.u32 %v3191, 4294901760
    %3193 = vmatpush1.msra.mxu0 %v3192
    %3194 = vmatprep.subr.mxu0 0.0
    %v3195 = vand.u32 %v1219, 4294901760
    %v3196 = vsub.f32 %v1219, %v3195
    %v3197 = vand.u32 %v3196, 4294901760
    %3198 = vmatpush1.msra.mxu0 %v3197
    %3199 = vmatprep.subr.mxu0 0.0
    %v3200 = vand.u32 %v1220, 4294901760
    %v3201 = vsub.f32 %v1220, %v3200
    %v3202 = vand.u32 %v3201, 4294901760
    %3203 = vmatpush1.msra.mxu0 %v3202
    %3204 = vmatprep.subr.mxu0 0.0
    %v3205 = vand.u32 %v1221, 4294901760
    %v3206 = vsub.f32 %v1221, %v3205
    %v3207 = vand.u32 %v3206, 4294901760
    %3208 = vmatpush1.msra.mxu0 %v3207
    %3209 = vmatprep.subr.mxu0 0.0
    %3210 = vmatpush1.msra.mxu0 0.0
    %3211 = vmatprep.subr.mxu0 0.0
    %3212 = vmatpush1.msra.mxu0 0.0
    %3213 = vmatprep.subr.mxu0 0.0
    %3214 = vmatpush1.msra.mxu0 0.0
    %3215 = vmatprep.subr.mxu0 0.0
    %3216 = vmatpush1.msra.mxu0 0.0
    %3217 = vmatprep.subr.mxu0 0.0
    %3218 = vmatpush1.msra.mxu0 0.0
    %3219 = vmatprep.subr.mxu0 0.0
    %3220 = vmatpush1.msra.mxu0 0.0
    %3221 = vmatprep.subr.mxu0 0.0
    %3222 = vmatpush1.msra.mxu0 0.0
    %3223 = vmatprep.subr.mxu0 0.0
    %3224 = vmatpush1.msra.mxu0 0.0
    %3225 = vmatprep.subr.mxu0 0.0
    %3226 = vmatpush1.msra.mxu0 0.0
    %3227 = vmatprep.subr.mxu0 0.0
    %3228 = vmatpush1.msra.mxu0 0.0
    %3229 = vmatprep.subr.mxu0 0.0
    %3230 = vmatpush1.msra.mxu0 0.0
    %3231 = vmatprep.subr.mxu0 0.0
    %3232 = vmatpush1.msra.mxu0 0.0
    %3233 = vmatprep.subr.mxu0 0.0
    %3234 = vmatpush1.msra.mxu0 0.0
    %3235 = vmatprep.subr.mxu0 0.0
    %3236 = vmatpush1.msra.mxu0 0.0
    %3237 = vmatprep.subr.mxu0 0.0
    %3238 = vmatpush1.msra.mxu0 0.0
    %3239 = vmatprep.subr.mxu0 0.0
    %3240 = vmatpush1.msra.mxu0 0.0
    %3241 = vmatprep.subr.mxu0 0.0
    %3242 = vmatpush1.msra.mxu0 0.0
    %3243 = vmatprep.subr.mxu0 0.0
    %3244 = vmatpush1.msra.mxu0 0.0
    %3245 = vmatprep.subr.mxu0 0.0
    %3246 = vmatpush1.msra.mxu0 0.0
    %3247 = vmatprep.subr.mxu0 0.0
    %3248 = vmatpush1.msra.mxu0 0.0
    %3249 = vmatprep.subr.mxu0 0.0
    %3250 = vmatpush1.msra.mxu0 0.0
    %3251 = vmatprep.subr.mxu0 0.0
    %3252 = vmatpush1.msra.mxu0 0.0
    %3253 = vmatprep.subr.mxu0 0.0
    %3254 = vmatpush1.msra.mxu0 0.0
    %3255 = vmatprep.subr.mxu0 0.0
    %3256 = vmatpush1.msra.mxu0 0.0
    %3257 = vmatprep.subr.mxu0 0.0
    %3258 = vmatpush1.msra.mxu0 0.0
    %3259 = vmatprep.subr.mxu0 0.0
    %3260 = vmatpush1.msra.mxu0 0.0
    %3261 = vmatprep.subr.mxu0 0.0
    %3262 = vmatpush1.msra.mxu0 0.0
    %3263 = vmatprep.subr.mxu0 0.0
    %3264 = vmatpush1.msra.mxu0 0.0
    %3265 = vmatprep.mubr.f32.mxu0 0.0
    %v3266 = vand.u32 %v2860, 4294901760
    %3267 = vmatmul.mubr.f32.gmra.mrb[0].mxu0 %v3266
    %v3268 = vpop.f32.mrb[0].mxu0
    %v3269 = vadd.f32 %v3186, %v3268
    %v3270 = vpop.f32.mrb[0].mxu0
    %3271 = vdwg.mxu0
    %3272 = vmatprep.subr.mxu0 0.0
    %v3273 = vand.u32 %v1218, 4294901760
    %3274 = vmatpush1.msra.mxu0 %v3273
    %3275 = vmatprep.subr.mxu0 0.0
    %v3276 = vand.u32 %v1219, 4294901760
    %3277 = vmatpush1.msra.mxu0 %v3276
    %3278 = vmatprep.subr.mxu0 0.0
    %v3279 = vand.u32 %v1220, 4294901760
    %3280 = vmatpush1.msra.mxu0 %v3279
    %3281 = vmatprep.subr.mxu0 0.0
    %v3282 = vand.u32 %v1221, 4294901760
    %3283 = vmatpush1.msra.mxu0 %v3282
    %3284 = vmatprep.subr.mxu0 0.0
    %3285 = vmatpush1.msra.mxu0 0.0
    %3286 = vmatprep.subr.mxu0 0.0
    %3287 = vmatpush1.msra.mxu0 0.0
    %3288 = vmatprep.subr.mxu0 0.0
    %3289 = vmatpush1.msra.mxu0 0.0
    %3290 = vmatprep.subr.mxu0 0.0
    %3291 = vmatpush1.msra.mxu0 0.0
    %3292 = vmatprep.subr.mxu0 0.0
    %3293 = vmatpush1.msra.mxu0 0.0
    %3294 = vmatprep.subr.mxu0 0.0
    %3295 = vmatpush1.msra.mxu0 0.0
    %3296 = vmatprep.subr.mxu0 0.0
    %3297 = vmatpush1.msra.mxu0 0.0
    %3298 = vmatprep.subr.mxu0 0.0
    %3299 = vmatpush1.msra.mxu0 0.0
    %3300 = vmatprep.subr.mxu0 0.0
    %3301 = vmatpush1.msra.mxu0 0.0
    %3302 = vmatprep.subr.mxu0 0.0
    %3303 = vmatpush1.msra.mxu0 0.0
    %3304 = vmatprep.subr.mxu0 0.0
    %3305 = vmatpush1.msra.mxu0 0.0
    %3306 = vmatprep.subr.mxu0 0.0
    %3307 = vmatpush1.msra.mxu0 0.0
    %3308 = vmatprep.subr.mxu0 0.0
    %3309 = vmatpush1.msra.mxu0 0.0
    %3310 = vmatprep.subr.mxu0 0.0
    %3311 = vmatpush1.msra.mxu0 0.0
    %3312 = vmatprep.subr.mxu0 0.0
    %3313 = vmatpush1.msra.mxu0 0.0
    %3314 = vmatprep.subr.mxu0 0.0
    %3315 = vmatpush1.msra.mxu0 0.0
    %3316 = vmatprep.subr.mxu0 0.0
    %3317 = vmatpush1.msra.mxu0 0.0
    %3318 = vmatprep.subr.mxu0 0.0
    %3319 = vmatpush1.msra.mxu0 0.0
    %3320 = vmatprep.subr.mxu0 0.0
    %3321 = vmatpush1.msra.mxu0 0.0
    %3322 = vmatprep.subr.mxu0 0.0
    %3323 = vmatpush1.msra.mxu0 0.0
    %3324 = vmatprep.subr.mxu0 0.0
    %3325 = vmatpush1.msra.mxu0 0.0
    %3326 = vmatprep.subr.mxu0 0.0
    %3327 = vmatpush1.msra.mxu0 0.0
    %3328 = vmatprep.subr.mxu0 0.0
    %3329 = vmatpush1.msra.mxu0 0.0
    %3330 = vmatprep.subr.mxu0 0.0
    %3331 = vmatpush1.msra.mxu0 0.0
    %3332 = vmatprep.subr.mxu0 0.0
    %3333 = vmatpush1.msra.mxu0 0.0
    %3334 = vmatprep.subr.mxu0 0.0
    %3335 = vmatpush1.msra.mxu0 0.0
    %3336 = vmatprep.subr.mxu0 0.0
    %3337 = vmatpush1.msra.mxu0 0.0
    %3338 = vmatprep.subr.mxu0 0.0
    %3339 = vmatpush1.msra.mxu0 0.0
    %3340 = vmatprep.mubr.f32.mxu0 0.0
    %v3341 = vand.u32 %v2860, 4294901760
    %3342 = vmatmul.mubr.f32.gmra.mrb[0].mxu0 %v3341
    %v3343 = vpop.f32.mrb[0].mxu0
    %v3344 = vadd.f32 %v3269, %v3343
    %v3345 = vpop.f32.mrb[0].mxu0
    %3346 = vdwg.mxu0
    %v3347 = vadd.f32 %v2858, %v3344
    %v3348 = vxor.u32 %v3347, 2147483648
    %v3349 = vmul.f32 %v3348, 1.442695
    %v3350 = vpow.pop %v3349
    %v3351 = vadd.f32 %v3350, 1.0
    %v3352 = vrcp.pop %v3351
    %v3353 = vmul.f32 1.0, %v3352
    %v3354 = vtanh.pop %v3347
    %3356 = vrot.lane.b32.xlu0 %v2856, 32
    %v3357 = vpop.permute.xlu0 %3356
    %v3359 = vmul.f32 %v3353, %v3357
    %3361 = vrot.lane.b32.xlu0 %v3354, 32
    %v3362 = vpop.permute.xlu0 %3361
    %v3364 = vmul.f32 %v3353, %v3362
    %3366 = vrot.lane.b32.xlu0 %v3364, 32
    %v3367 = vpop.permute.xlu0 %3366
    %v3369 = vadd.f32 %v3359, %v3367
    %v3370 = vtanh.pop %v3369
    %3372 = vrot.lane.b32.xlu0 %v3370, 32
    %v3373 = vpop.permute.xlu0 %3372
    %v3375 = vmul.f32 %v3353, %v3373
    %3377 = vrot.lane.b32.xlu0 %v3375, 64
    %v3378 = vpop.permute.xlu0 %3377
    %3380 = vst.msk [vmem:[#allocation2] sm:$0xff] %vm1209, %v3378
    %3382 = vrot.lane.b32.xlu0 %v3369, 96
    %v3383 = vpop.permute.xlu0 %3382
    %3385 = vst.msk [vmem:[#allocation3] sm:$0xff] %vm1209, %v3383
    %v3386 = vld [vmem:[#allocation6] sm:$0xff]
    %s3387 = scalar_lea.vmem [#allocation5], 24
    %v3388 = vld [vmem:[%s3387] sm:$0xff]
    %3390 = vrot.lane.b32.xlu0 %v3388, 64
    %v3391 = vpop.permute.xlu0 %3390
    %v3393 = vsub.f32 %v3375, %v3391
    %3395 = vrot.lane.b32.xlu0 %v3393, 64
    %v3396 = vpop.permute.xlu0 %3395
    %v3398 = vmax.f32 %v3386, %v3396
    %3399 = vst.msk [vmem:[#allocation6] sm:$0xff] %vm1209, %v3398
    %v3400 = vld [vmem:[#allocation2] sm:$0xff]
    %v3401 = vld [vmem:[#allocation3] sm:$0xff]
    %s3402 = scalar_lea.vmem [#allocation4], 32
    %v3403 = vld [vmem:[%s3402] sm:$0xff]
    %v3405 = vsel %vm1209, %v3400, 0
    %3407 = vmatprep.subr.mxu0 0.0
    %v3408 = vand.u32 %v1218, 4294901760
    %3409 = vmatpush1.msra.mxu0 %v3408
    %3410 = vmatprep.subr.mxu0 0.0
    %v3411 = vand.u32 %v1219, 4294901760
    %3412 = vmatpush1.msra.mxu0 %v3411
    %3413 = vmatprep.subr.mxu0 0.0
    %v3414 = vand.u32 %v1220, 4294901760
    %3415 = vmatpush1.msra.mxu0 %v3414
    %3416 = vmatprep.subr.mxu0 0.0
    %v3417 = vand.u32 %v1221, 4294901760
    %3418 = vmatpush1.msra.mxu0 %v3417
    %3419 = vmatprep.subr.mxu0 0.0
    %3420 = vmatpush1.msra.mxu0 0.0
    %3421 = vmatprep.subr.mxu0 0.0
    %3422 = vmatpush1.msra.mxu0 0.0
    %3423 = vmatprep.subr.mxu0 0.0
    %3424 = vmatpush1.msra.mxu0 0.0
    %3425 = vmatprep.subr.mxu0 0.0
    %3426 = vmatpush1.msra.mxu0 0.0
    %3427 = vmatprep.subr.mxu0 0.0
    %3428 = vmatpush1.msra.mxu0 0.0
    %3429 = vmatprep.subr.mxu0 0.0
    %3430 = vmatpush1.msra.mxu0 0.0
    %3431 = vmatprep.subr.mxu0 0.0
    %3432 = vmatpush1.msra.mxu0 0.0
    %3433 = vmatprep.subr.mxu0 0.0
    %3434 = vmatpush1.msra.mxu0 0.0
    %3435 = vmatprep.subr.mxu0 0.0
    %3436 = vmatpush1.msra.mxu0 0.0
    %3437 = vmatprep.subr.mxu0 0.0
    %3438 = vmatpush1.msra.mxu0 0.0
    %3439 = vmatprep.subr.mxu0 0.0
    %3440 = vmatpush1.msra.mxu0 0.0
    %3441 = vmatprep.subr.mxu0 0.0
    %3442 = vmatpush1.msra.mxu0 0.0
    %3443 = vmatprep.subr.mxu0 0.0
    %3444 = vmatpush1.msra.mxu0 0.0
    %3445 = vmatprep.subr.mxu0 0.0
    %3446 = vmatpush1.msra.mxu0 0.0
    %3447 = vmatprep.subr.mxu0 0.0
    %3448 = vmatpush1.msra.mxu0 0.0
    %3449 = vmatprep.subr.mxu0 0.0
    %3450 = vmatpush1.msra.mxu0 0.0
    %3451 = vmatprep.subr.mxu0 0.0
    %3452 = vmatpush1.msra.mxu0 0.0
    %3453 = vmatprep.subr.mxu0 0.0
    %3454 = vmatpush1.msra.mxu0 0.0
    %3455 = vmatprep.subr.mxu0 0.0
    %3456 = vmatpush1.msra.mxu0 0.0
    %3457 = vmatprep.subr.mxu0 0.0
    %3458 = vmatpush1.msra.mxu0 0.0
    %3459 = vmatprep.subr.mxu0 0.0
    %3460 = vmatpush1.msra.mxu0 0.0
    %3461 = vmatprep.subr.mxu0 0.0
    %3462 = vmatpush1.msra.mxu0 0.0
    %3463 = vmatprep.subr.mxu0 0.0
    %3464 = vmatpush1.msra.mxu0 0.0
    %3465 = vmatprep.subr.mxu0 0.0
    %3466 = vmatpush1.msra.mxu0 0.0
    %3467 = vmatprep.subr.mxu0 0.0
    %3468 = vmatpush1.msra.mxu0 0.0
    %3469 = vmatprep.subr.mxu0 0.0
    %3470 = vmatpush1.msra.mxu0 0.0
    %3471 = vmatprep.subr.mxu0 0.0
    %3472 = vmatpush1.msra.mxu0 0.0
    %3473 = vmatprep.subr.mxu0 0.0
    %3474 = vmatpush1.msra.mxu0 0.0
    %3475 = vmatprep.mubr.f32.mxu0 0.0
    %v3476 = vand.u32 %v3405, 4294901760
    %v3477 = vsub.f32 %v3405, %v3476
    %v3478 = vand.u32 %v3477, 4294901760
    %v3479 = vsub.f32 %v3477, %v3478
    %v3480 = vand.u32 %v3479, 4294901760
    %3481 = vmatmul.mubr.f32.gmra.mrb[0].mxu0 %v3480
    %v3482 = vpop.f32.mrb[0].mxu0
    %v3483 = vadd.f32 0.0, %v3482
    %v3484 = vpop.f32.mrb[0].mxu0
    %3485 = vdwg.mxu0
    %3486 = vmatprep.subr.mxu0 0.0
    %v3487 = vand.u32 %v1218, 4294901760
    %v3488 = vsub.f32 %v1218, %v3487
    %v3489 = vand.u32 %v3488, 4294901760
    %v3490 = vsub.f32 %v3488, %v3489
    %v3491 = vand.u32 %v3490, 4294901760
    %3492 = vmatpush1.msra.mxu0 %v3491
    %3493 = vmatprep.subr.mxu0 0.0
    %v3494 = vand.u32 %v1219, 4294901760
    %v3495 = vsub.f32 %v1219, %v3494
    %v3496 = vand.u32 %v3495, 4294901760
    %v3497 = vsub.f32 %v3495, %v3496
    %v3498 = vand.u32 %v3497, 4294901760
    %3499 = vmatpush1.msra.mxu0 %v3498
    %3500 = vmatprep.subr.mxu0 0.0
    %v3501 = vand.u32 %v1220, 4294901760
    %v3502 = vsub.f32 %v1220, %v3501
    %v3503 = vand.u32 %v3502, 4294901760
    %v3504 = vsub.f32 %v3502, %v3503
    %v3505 = vand.u32 %v3504, 4294901760
    %3506 = vmatpush1.msra.mxu0 %v3505
    %3507 = vmatprep.subr.mxu0 0.0
    %v3508 = vand.u32 %v1221, 4294901760
    %v3509 = vsub.f32 %v1221, %v3508
    %v3510 = vand.u32 %v3509, 4294901760
    %v3511 = vsub.f32 %v3509, %v3510
    %v3512 = vand.u32 %v3511, 4294901760
    %3513 = vmatpush1.msra.mxu0 %v3512
    %3514 = vmatprep.subr.mxu0 0.0
    %3515 = vmatpush1.msra.mxu0 0.0
    %3516 = vmatprep.subr.mxu0 0.0
    %3517 = vmatpush1.msra.mxu0 0.0
    %3518 = vmatprep.subr.mxu0 0.0
    %3519 = vmatpush1.msra.mxu0 0.0
    %3520 = vmatprep.subr.mxu0 0.0
    %3521 = vmatpush1.msra.mxu0 0.0
    %3522 = vmatprep.subr.mxu0 0.0
    %3523 = vmatpush1.msra.mxu0 0.0
    %3524 = vmatprep.subr.mxu0 0.0
    %3525 = vmatpush1.msra.mxu0 0.0
    %3526 = vmatprep.subr.mxu0 0.0
    %3527 = vmatpush1.msra.mxu0 0.0
    %3528 = vmatprep.subr.mxu0 0.0
    %3529 = vmatpush1.msra.mxu0 0.0
    %3530 = vmatprep.subr.mxu0 0.0
    %3531 = vmatpush1.msra.mxu0 0.0
    %3532 = vmatprep.subr.mxu0 0.0
    %3533 = vmatpush1.msra.mxu0 0.0
    %3534 = vmatprep.subr.mxu0 0.0
    %3535 = vmatpush1.msra.mxu0 0.0
    %3536 = vmatprep.subr.mxu0 0.0
    %3537 = vmatpush1.msra.mxu0 0.0
    %3538 = vmatprep.subr.mxu0 0.0
    %3539 = vmatpush1.msra.mxu0 0.0
    %3540 = vmatprep.subr.mxu0 0.0
    %3541 = vmatpush1.msra.mxu0 0.0
    %3542 = vmatprep.subr.mxu0 0.0
    %3543 = vmatpush1.msra.mxu0 0.0
    %3544 = vmatprep.subr.mxu0 0.0
    %3545 = vmatpush1.msra.mxu0 0.0
    %3546 = vmatprep.subr.mxu0 0.0
    %3547 = vmatpush1.msra.mxu0 0.0
    %3548 = vmatprep.subr.mxu0 0.0
    %3549 = vmatpush1.msra.mxu0 0.0
    %3550 = vmatprep.subr.mxu0 0.0
    %3551 = vmatpush1.msra.mxu0 0.0
    %3552 = vmatprep.subr.mxu0 0.0
    %3553 = vmatpush1.msra.mxu0 0.0
    %3554 = vmatprep.subr.mxu0 0.0
    %3555 = vmatpush1.msra.mxu0 0.0
    %3556 = vmatprep.subr.mxu0 0.0
    %3557 = vmatpush1.msra.mxu0 0.0
    %3558 = vmatprep.subr.mxu0 0.0
    %3559 = vmatpush1.msra.mxu0 0.0
    %3560 = vmatprep.subr.mxu0 0.0
    %3561 = vmatpush1.msra.mxu0 0.0
    %3562 = vmatprep.subr.mxu0 0.0
    %3563 = vmatpush1.msra.mxu0 0.0
    %3564 = vmatprep.subr.mxu0 0.0
    %3565 = vmatpush1.msra.mxu0 0.0
    %3566 = vmatprep.subr.mxu0 0.0
    %3567 = vmatpush1.msra.mxu0 0.0
    %3568 = vmatprep.subr.mxu0 0.0
    %3569 = vmatpush1.msra.mxu0 0.0
    %3570 = vmatprep.mubr.f32.mxu0 0.0
    %v3571 = vand.u32 %v3405, 4294901760
    %3572 = vmatmul.mubr.f32.gmra.mrb[0].mxu0 %v3571
    %v3573 = vpop.f32.mrb[0].mxu0
    %v3574 = vadd.f32 %v3483, %v3573
    %v3575 = vpop.f32.mrb[0].mxu0
    %3576 = vdwg.mxu0
    %3577 = vmatprep.subr.mxu0 0.0
    %v3578 = vand.u32 %v1218, 4294901760
    %v3579 = vsub.f32 %v1218, %v3578
    %3580 = vmatpush1.msra.mxu0 %v3579
    %3581 = vmatprep.subr.mxu0 0.0
    %v3582 = vand.u32 %v1219, 4294901760
    %v3583 = vsub.f32 %v1219, %v3582
    %3584 = vmatpush1.msra.mxu0 %v3583
    %3585 = vmatprep.subr.mxu0 0.0
    %v3586 = vand.u32 %v1220, 4294901760
    %v3587 = vsub.f32 %v1220, %v3586
    %3588 = vmatpush1.msra.mxu0 %v3587
    %3589 = vmatprep.subr.mxu0 0.0
    %v3590 = vand.u32 %v1221, 4294901760
    %v3591 = vsub.f32 %v1221, %v3590
    %3592 = vmatpush1.msra.mxu0 %v3591
    %3593 = vmatprep.subr.mxu0 0.0
    %3594 = vmatpush1.msra.mxu0 0.0
    %3595 = vmatprep.subr.mxu0 0.0
    %3596 = vmatpush1.msra.mxu0 0.0
    %3597 = vmatprep.subr.mxu0 0.0
    %3598 = vmatpush1.msra.mxu0 0.0
    %3599 = vmatprep.subr.mxu0 0.0
    %3600 = vmatpush1.msra.mxu0 0.0
    %3601 = vmatprep.subr.mxu0 0.0
    %3602 = vmatpush1.msra.mxu0 0.0
    %3603 = vmatprep.subr.mxu0 0.0
    %3604 = vmatpush1.msra.mxu0 0.0
    %3605 = vmatprep.subr.mxu0 0.0
    %3606 = vmatpush1.msra.mxu0 0.0
    %3607 = vmatprep.subr.mxu0 0.0
    %3608 = vmatpush1.msra.mxu0 0.0
    %3609 = vmatprep.subr.mxu0 0.0
    %3610 = vmatpush1.msra.mxu0 0.0
    %3611 = vmatprep.subr.mxu0 0.0
    %3612 = vmatpush1.msra.mxu0 0.0
    %3613 = vmatprep.subr.mxu0 0.0
    %3614 = vmatpush1.msra.mxu0 0.0
    %3615 = vmatprep.subr.mxu0 0.0
    %3616 = vmatpush1.msra.mxu0 0.0
    %3617 = vmatprep.subr.mxu0 0.0
    %3618 = vmatpush1.msra.mxu0 0.0
    %3619 = vmatprep.subr.mxu0 0.0
    %3620 = vmatpush1.msra.mxu0 0.0
    %3621 = vmatprep.subr.mxu0 0.0
    %3622 = vmatpush1.msra.mxu0 0.0
    %3623 = vmatprep.subr.mxu0 0.0
    %3624 = vmatpush1.msra.mxu0 0.0
    %3625 = vmatprep.subr.mxu0 0.0
    %3626 = vmatpush1.msra.mxu0 0.0
    %3627 = vmatprep.subr.mxu0 0.0
    %3628 = vmatpush1.msra.mxu0 0.0
    %3629 = vmatprep.subr.mxu0 0.0
    %3630 = vmatpush1.msra.mxu0 0.0
    %3631 = vmatprep.subr.mxu0 0.0
    %3632 = vmatpush1.msra.mxu0 0.0
    %3633 = vmatprep.subr.mxu0 0.0
    %3634 = vmatpush1.msra.mxu0 0.0
    %3635 = vmatprep.subr.mxu0 0.0
    %3636 = vmatpush1.msra.mxu0 0.0
    %3637 = vmatprep.subr.mxu0 0.0
    %3638 = vmatpush1.msra.mxu0 0.0
    %3639 = vmatprep.subr.mxu0 0.0
    %3640 = vmatpush1.msra.mxu0 0.0
    %3641 = vmatprep.subr.mxu0 0.0
    %3642 = vmatpush1.msra.mxu0 0.0
    %3643 = vmatprep.subr.mxu0 0.0
    %3644 = vmatpush1.msra.mxu0 0.0
    %3645 = vmatprep.subr.mxu0 0.0
    %3646 = vmatpush1.msra.mxu0 0.0
    %3647 = vmatprep.subr.mxu0 0.0
    %3648 = vmatpush1.msra.mxu0 0.0
    %3649 = vmatprep.mubr.f32.mxu0 0.0
    %v3650 = vand.u32 %v3405, 4294901760
    %v3651 = vsub.f32 %v3405, %v3650
    %3652 = vmatmul.mubr.f32.gmra.mrb[0].mxu0 %v3651
    %v3653 = vpop.f32.mrb[0].mxu0
    %v3654 = vadd.f32 %v3574, %v3653
    %v3655 = vpop.f32.mrb[0].mxu0
    %3656 = vdwg.mxu0
    %3657 = vmatprep.subr.mxu0 0.0
    %v3658 = vand.u32 %v1218, 4294901760
    %3659 = vmatpush1.msra.mxu0 %v3658
    %3660 = vmatprep.subr.mxu0 0.0
    %v3661 = vand.u32 %v1219, 4294901760
    %3662 = vmatpush1.msra.mxu0 %v3661
    %3663 = vmatprep.subr.mxu0 0.0
    %v3664 = vand.u32 %v1220, 4294901760
    %3665 = vmatpush1.msra.mxu0 %v3664
    %3666 = vmatprep.subr.mxu0 0.0
    %v3667 = vand.u32 %v1221, 4294901760
    %3668 = vmatpush1.msra.mxu0 %v3667
    %3669 = vmatprep.subr.mxu0 0.0
    %3670 = vmatpush1.msra.mxu0 0.0
    %3671 = vmatprep.subr.mxu0 0.0
    %3672 = vmatpush1.msra.mxu0 0.0
    %3673 = vmatprep.subr.mxu0 0.0
    %3674 = vmatpush1.msra.mxu0 0.0
    %3675 = vmatprep.subr.mxu0 0.0
    %3676 = vmatpush1.msra.mxu0 0.0
    %3677 = vmatprep.subr.mxu0 0.0
    %3678 = vmatpush1.msra.mxu0 0.0
    %3679 = vmatprep.subr.mxu0 0.0
    %3680 = vmatpush1.msra.mxu0 0.0
    %3681 = vmatprep.subr.mxu0 0.0
    %3682 = vmatpush1.msra.mxu0 0.0
    %3683 = vmatprep.subr.mxu0 0.0
    %3684 = vmatpush1.msra.mxu0 0.0
    %3685 = vmatprep.subr.mxu0 0.0
    %3686 = vmatpush1.msra.mxu0 0.0
    %3687 = vmatprep.subr.mxu0 0.0
    %3688 = vmatpush1.msra.mxu0 0.0
    %3689 = vmatprep.subr.mxu0 0.0
    %3690 = vmatpush1.msra.mxu0 0.0
    %3691 = vmatprep.subr.mxu0 0.0
    %3692 = vmatpush1.msra.mxu0 0.0
    %3693 = vmatprep.subr.mxu0 0.0
    %3694 = vmatpush1.msra.mxu0 0.0
    %3695 = vmatprep.subr.mxu0 0.0
    %3696 = vmatpush1.msra.mxu0 0.0
    %3697 = vmatprep.subr.mxu0 0.0
    %3698 = vmatpush1.msra.mxu0 0.0
    %3699 = vmatprep.subr.mxu0 0.0
    %3700 = vmatpush1.msra.mxu0 0.0
    %3701 = vmatprep.subr.mxu0 0.0
    %3702 = vmatpush1.msra.mxu0 0.0
    %3703 = vmatprep.subr.mxu0 0.0
    %3704 = vmatpush1.msra.mxu0 0.0
    %3705 = vmatprep.subr.mxu0 0.0
    %3706 = vmatpush1.msra.mxu0 0.0
    %3707 = vmatprep.subr.mxu0 0.0
    %3708 = vmatpush1.msra.mxu0 0.0
    %3709 = vmatprep.subr.mxu0 0.0
    %3710 = vmatpush1.msra.mxu0 0.0
    %3711 = vmatprep.subr.mxu0 0.0
    %3712 = vmatpush1.msra.mxu0 0.0
    %3713 = vmatprep.subr.mxu0 0.0
    %3714 = vmatpush1.msra.mxu0 0.0
    %3715 = vmatprep.subr.mxu0 0.0
    %3716 = vmatpush1.msra.mxu0 0.0
    %3717 = vmatprep.subr.mxu0 0.0
    %3718 = vmatpush1.msra.mxu0 0.0
    %3719 = vmatprep.subr.mxu0 0.0
    %3720 = vmatpush1.msra.mxu0 0.0
    %3721 = vmatprep.subr.mxu0 0.0
    %3722 = vmatpush1.msra.mxu0 0.0
    %3723 = vmatprep.subr.mxu0 0.0
    %3724 = vmatpush1.msra.mxu0 0.0
    %3725 = vmatprep.mubr.f32.mxu0 0.0
    %v3726 = vand.u32 %v3405, 4294901760
    %v3727 = vsub.f32 %v3405, %v3726
    %v3728 = vand.u32 %v3727, 4294901760
    %3729 = vmatmul.mubr.f32.gmra.mrb[0].mxu0 %v3728
    %v3730 = vpop.f32.mrb[0].mxu0
    %v3731 = vadd.f32 %v3654, %v3730
    %v3732 = vpop.f32.mrb[0].mxu0
    %3733 = vdwg.mxu0
    %3734 = vmatprep.subr.mxu0 0.0
    %v3735 = vand.u32 %v1218, 4294901760
    %v3736 = vsub.f32 %v1218, %v3735
    %v3737 = vand.u32 %v3736, 4294901760
    %3738 = vmatpush1.msra.mxu0 %v3737
    %3739 = vmatprep.subr.mxu0 0.0
    %v3740 = vand.u32 %v1219, 4294901760
    %v3741 = vsub.f32 %v1219, %v3740
    %v3742 = vand.u32 %v3741, 4294901760
    %3743 = vmatpush1.msra.mxu0 %v3742
    %3744 = vmatprep.subr.mxu0 0.0
    %v3745 = vand.u32 %v1220, 4294901760
    %v3746 = vsub.f32 %v1220, %v3745
    %v3747 = vand.u32 %v3746, 4294901760
    %3748 = vmatpush1.msra.mxu0 %v3747
    %3749 = vmatprep.subr.mxu0 0.0
    %v3750 = vand.u32 %v1221, 4294901760
    %v3751 = vsub.f32 %v1221, %v3750
    %v3752 = vand.u32 %v3751, 4294901760
    %3753 = vmatpush1.msra.mxu0 %v3752
    %3754 = vmatprep.subr.mxu0 0.0
    %3755 = vmatpush1.msra.mxu0 0.0
    %3756 = vmatprep.subr.mxu0 0.0
    %3757 = vmatpush1.msra.mxu0 0.0
    %3758 = vmatprep.subr.mxu0 0.0
    %3759 = vmatpush1.msra.mxu0 0.0
    %3760 = vmatprep.subr.mxu0 0.0
    %3761 = vmatpush1.msra.mxu0 0.0
    %3762 = vmatprep.subr.mxu0 0.0
    %3763 = vmatpush1.msra.mxu0 0.0
    %3764 = vmatprep.subr.mxu0 0.0
    %3765 = vmatpush1.msra.mxu0 0.0
    %3766 = vmatprep.subr.mxu0 0.0
    %3767 = vmatpush1.msra.mxu0 0.0
    %3768 = vmatprep.subr.mxu0 0.0
    %3769 = vmatpush1.msra.mxu0 0.0
    %3770 = vmatprep.subr.mxu0 0.0
    %3771 = vmatpush1.msra.mxu0 0.0
    %3772 = vmatprep.subr.mxu0 0.0
    %3773 = vmatpush1.msra.mxu0 0.0
    %3774 = vmatprep.subr.mxu0 0.0
    %3775 = vmatpush1.msra.mxu0 0.0
    %3776 = vmatprep.subr.mxu0 0.0
    %3777 = vmatpush1.msra.mxu0 0.0
    %3778 = vmatprep.subr.mxu0 0.0
    %3779 = vmatpush1.msra.mxu0 0.0
    %3780 = vmatprep.subr.mxu0 0.0
    %3781 = vmatpush1.msra.mxu0 0.0
    %3782 = vmatprep.subr.mxu0 0.0
    %3783 = vmatpush1.msra.mxu0 0.0
    %3784 = vmatprep.subr.mxu0 0.0
    %3785 = vmatpush1.msra.mxu0 0.0
    %3786 = vmatprep.subr.mxu0 0.0
    %3787 = vmatpush1.msra.mxu0 0.0
    %3788 = vmatprep.subr.mxu0 0.0
    %3789 = vmatpush1.msra.mxu0 0.0
    %3790 = vmatprep.subr.mxu0 0.0
    %3791 = vmatpush1.msra.mxu0 0.0
    %3792 = vmatprep.subr.mxu0 0.0
    %3793 = vmatpush1.msra.mxu0 0.0
    %3794 = vmatprep.subr.mxu0 0.0
    %3795 = vmatpush1.msra.mxu0 0.0
    %3796 = vmatprep.subr.mxu0 0.0
    %3797 = vmatpush1.msra.mxu0 0.0
    %3798 = vmatprep.subr.mxu0 0.0
    %3799 = vmatpush1.msra.mxu0 0.0
    %3800 = vmatprep.subr.mxu0 0.0
    %3801 = vmatpush1.msra.mxu0 0.0
    %3802 = vmatprep.subr.mxu0 0.0
    %3803 = vmatpush1.msra.mxu0 0.0
    %3804 = vmatprep.subr.mxu0 0.0
    %3805 = vmatpush1.msra.mxu0 0.0
    %3806 = vmatprep.subr.mxu0 0.0
    %3807 = vmatpush1.msra.mxu0 0.0
    %3808 = vmatprep.subr.mxu0 0.0
    %3809 = vmatpush1.msra.mxu0 0.0
    %3810 = vmatprep.mubr.f32.mxu0 0.0
    %v3811 = vand.u32 %v3405, 4294901760
    %3812 = vmatmul.mubr.f32.gmra.mrb[0].mxu0 %v3811
    %v3813 = vpop.f32.mrb[0].mxu0
    %v3814 = vadd.f32 %v3731, %v3813
    %v3815 = vpop.f32.mrb[0].mxu0
    %3816 = vdwg.mxu0
    %3817 = vmatprep.subr.mxu0 0.0
    %v3818 = vand.u32 %v1218, 4294901760
    %3819 = vmatpush1.msra.mxu0 %v3818
    %3820 = vmatprep.subr.mxu0 0.0
    %v3821 = vand.u32 %v1219, 4294901760
    %3822 = vmatpush1.msra.mxu0 %v3821
    %3823 = vmatprep.subr.mxu0 0.0
    %v3824 = vand.u32 %v1220, 4294901760
    %3825 = vmatpush1.msra.mxu0 %v3824
    %3826 = vmatprep.subr.mxu0 0.0
    %v3827 = vand.u32 %v1221, 4294901760
    %3828 = vmatpush1.msra.mxu0 %v3827
    %3829 = vmatprep.subr.mxu0 0.0
    %3830 = vmatpush1.msra.mxu0 0.0
    %3831 = vmatprep.subr.mxu0 0.0
    %3832 = vmatpush1.msra.mxu0 0.0
    %3833 = vmatprep.subr.mxu0 0.0
    %3834 = vmatpush1.msra.mxu0 0.0
    %3835 = vmatprep.subr.mxu0 0.0
    %3836 = vmatpush1.msra.mxu0 0.0
    %3837 = vmatprep.subr.mxu0 0.0
    %3838 = vmatpush1.msra.mxu0 0.0
    %3839 = vmatprep.subr.mxu0 0.0
    %3840 = vmatpush1.msra.mxu0 0.0
    %3841 = vmatprep.subr.mxu0 0.0
    %3842 = vmatpush1.msra.mxu0 0.0
    %3843 = vmatprep.subr.mxu0 0.0
    %3844 = vmatpush1.msra.mxu0 0.0
    %3845 = vmatprep.subr.mxu0 0.0
    %3846 = vmatpush1.msra.mxu0 0.0
    %3847 = vmatprep.subr.mxu0 0.0
    %3848 = vmatpush1.msra.mxu0 0.0
    %3849 = vmatprep.subr.mxu0 0.0
    %3850 = vmatpush1.msra.mxu0 0.0
    %3851 = vmatprep.subr.mxu0 0.0
    %3852 = vmatpush1.msra.mxu0 0.0
    %3853 = vmatprep.subr.mxu0 0.0
    %3854 = vmatpush1.msra.mxu0 0.0
    %3855 = vmatprep.subr.mxu0 0.0
    %3856 = vmatpush1.msra.mxu0 0.0
    %3857 = vmatprep.subr.mxu0 0.0
    %3858 = vmatpush1.msra.mxu0 0.0
    %3859 = vmatprep.subr.mxu0 0.0
    %3860 = vmatpush1.msra.mxu0 0.0
    %3861 = vmatprep.subr.mxu0 0.0
    %3862 = vmatpush1.msra.mxu0 0.0
    %3863 = vmatprep.subr.mxu0 0.0
    %3864 = vmatpush1.msra.mxu0 0.0
    %3865 = vmatprep.subr.mxu0 0.0
    %3866 = vmatpush1.msra.mxu0 0.0
    %3867 = vmatprep.subr.mxu0 0.0
    %3868 = vmatpush1.msra.mxu0 0.0
    %3869 = vmatprep.subr.mxu0 0.0
    %3870 = vmatpush1.msra.mxu0 0.0
    %3871 = vmatprep.subr.mxu0 0.0
    %3872 = vmatpush1.msra.mxu0 0.0
    %3873 = vmatprep.subr.mxu0 0.0
    %3874 = vmatpush1.msra.mxu0 0.0
    %3875 = vmatprep.subr.mxu0 0.0
    %3876 = vmatpush1.msra.mxu0 0.0
    %3877 = vmatprep.subr.mxu0 0.0
    %3878 = vmatpush1.msra.mxu0 0.0
    %3879 = vmatprep.subr.mxu0 0.0
    %3880 = vmatpush1.msra.mxu0 0.0
    %3881 = vmatprep.subr.mxu0 0.0
    %3882 = vmatpush1.msra.mxu0 0.0
    %3883 = vmatprep.subr.mxu0 0.0
    %3884 = vmatpush1.msra.mxu0 0.0
    %3885 = vmatprep.mubr.f32.mxu0 0.0
    %v3886 = vand.u32 %v3405, 4294901760
    %3887 = vmatmul.mubr.f32.gmra.mrb[0].mxu0 %v3886
    %v3888 = vpop.f32.mrb[0].mxu0
    %v3889 = vadd.f32 %v3814, %v3888
    %v3890 = vpop.f32.mrb[0].mxu0
    %3891 = vdwg.mxu0
    %v3892 = vadd.f32 %v3403, %v3889
    %v3893 = vxor.u32 %v3892, 2147483648
    %v3894 = vmul.f32 %v3893, 1.442695
    %v3895 = vpow.pop %v3894
    %v3896 = vadd.f32 %v3895, 1.0
    %v3897 = vrcp.pop %v3896
    %v3898 = vmul.f32 1.0, %v3897
    %v3899 = vtanh.pop %v3892
    %3901 = vrot.lane.b32.xlu0 %v3401, 32
    %v3902 = vpop.permute.xlu0 %3901
    %v3904 = vmul.f32 %v3898, %v3902
    %3906 = vrot.lane.b32.xlu0 %v3899, 32
    %v3907 = vpop.permute.xlu0 %3906
    %v3909 = vmul.f32 %v3898, %v3907
    %3911 = vrot.lane.b32.xlu0 %v3909, 32
    %v3912 = vpop.permute.xlu0 %3911
    %v3914 = vadd.f32 %v3904, %v3912
    %v3915 = vtanh.pop %v3914
    %3917 = vrot.lane.b32.xlu0 %v3915, 32
    %v3918 = vpop.permute.xlu0 %3917
    %v3920 = vmul.f32 %v3898, %v3918
    %3922 = vrot.lane.b32.xlu0 %v3920, 64
    %v3923 = vpop.permute.xlu0 %3922
    %3925 = vst.msk [vmem:[#allocation2] sm:$0xff] %vm1209, %v3923
    %3927 = vrot.lane.b32.xlu0 %v3914, 96
    %v3928 = vpop.permute.xlu0 %3927
    %3930 = vst.msk [vmem:[#allocation3] sm:$0xff] %vm1209, %v3928
    %v3931 = vld [vmem:[#allocation6] sm:$0xff]
    %s3932 = scalar_lea.vmem [#allocation5], 32
    %v3933 = vld [vmem:[%s3932] sm:$0xff]
    %3935 = vrot.lane.b32.xlu0 %v3933, 64
    %v3936 = vpop.permute.xlu0 %3935
    %v3938 = vsub.f32 %v3920, %v3936
    %3940 = vrot.lane.b32.xlu0 %v3938, 64
    %v3941 = vpop.permute.xlu0 %3940
    %v3943 = vmax.f32 %v3931, %v3941
    %3944 = vst.msk [vmem:[#allocation6] sm:$0xff] %vm1209, %v3943
    %v3945 = vld [vmem:[#allocation2] sm:$0xff]
    %v3946 = vld [vmem:[#allocation3] sm:$0xff]
    %s3947 = scalar_lea.vmem [#allocation4], 40
    %v3948 = vld [vmem:[%s3947] sm:$0xff]
    %v3950 = vsel %vm1209, %v3945, 0
    %3952 = vmatprep.subr.mxu0 0.0
    %v3953 = vand.u32 %v1218, 4294901760
    %3954 = vmatpush1.msra.mxu0 %v3953
    %3955 = vmatprep.subr.mxu0 0.0
    %v3956 = vand.u32 %v1219, 4294901760
    %3957 = vmatpush1.msra.mxu0 %v3956
    %3958 = vmatprep.subr.mxu0 0.0
    %v3959 = vand.u32 %v1220, 4294901760
    %3960 = vmatpush1.msra.mxu0 %v3959
    %3961 = vmatprep.subr.mxu0 0.0
    %v3962 = vand.u32 %v1221, 4294901760
    %3963 = vmatpush1.msra.mxu0 %v3962
    %3964 = vmatprep.subr.mxu0 0.0
    %3965 = vmatpush1.msra.mxu0 0.0
    %3966 = vmatprep.subr.mxu0 0.0
    %3967 = vmatpush1.msra.mxu0 0.0
    %3968 = vmatprep.subr.mxu0 0.0
    %3969 = vmatpush1.msra.mxu0 0.0
    %3970 = vmatprep.subr.mxu0 0.0
    %3971 = vmatpush1.msra.mxu0 0.0
    %3972 = vmatprep.subr.mxu0 0.0
    %3973 = vmatpush1.msra.mxu0 0.0
    %3974 = vmatprep.subr.mxu0 0.0
    %3975 = vmatpush1.msra.mxu0 0.0
    %3976 = vmatprep.subr.mxu0 0.0
    %3977 = vmatpush1.msra.mxu0 0.0
    %3978 = vmatprep.subr.mxu0 0.0
    %3979 = vmatpush1.msra.mxu0 0.0
    %3980 = vmatprep.subr.mxu0 0.0
    %3981 = vmatpush1.msra.mxu0 0.0
    %3982 = vmatprep.subr.mxu0 0.0
    %3983 = vmatpush1.msra.mxu0 0.0
    %3984 = vmatprep.subr.mxu0 0.0
    %3985 = vmatpush1.msra.mxu0 0.0
    %3986 = vmatprep.subr.mxu0 0.0
    %3987 = vmatpush1.msra.mxu0 0.0
    %3988 = vmatprep.subr.mxu0 0.0
    %3989 = vmatpush1.msra.mxu0 0.0
    %3990 = vmatprep.subr.mxu0 0.0
    %3991 = vmatpush1.msra.mxu0 0.0
    %3992 = vmatprep.subr.mxu0 0.0
    %3993 = vmatpush1.msra.mxu0 0.0
    %3994 = vmatprep.subr.mxu0 0.0
    %3995 = vmatpush1.msra.mxu0 0.0
    %3996 = vmatprep.subr.mxu0 0.0
    %3997 = vmatpush1.msra.mxu0 0.0
    %3998 = vmatprep.subr.mxu0 0.0
    %3999 = vmatpush1.msra.mxu0 0.0
    %4000 = vmatprep.subr.mxu0 0.0
    %4001 = vmatpush1.msra.mxu0 0.0
    %4002 = vmatprep.subr.mxu0 0.0
    %4003 = vmatpush1.msra.mxu0 0.0
    %4004 = vmatprep.subr.mxu0 0.0
    %4005 = vmatpush1.msra.mxu0 0.0
    %4006 = vmatprep.subr.mxu0 0.0
    %4007 = vmatpush1.msra.mxu0 0.0
    %4008 = vmatprep.subr.mxu0 0.0
    %4009 = vmatpush1.msra.mxu0 0.0
    %4010 = vmatprep.subr.mxu0 0.0
    %4011 = vmatpush1.msra.mxu0 0.0
    %4012 = vmatprep.subr.mxu0 0.0
    %4013 = vmatpush1.msra.mxu0 0.0
    %4014 = vmatprep.subr.mxu0 0.0
    %4015 = vmatpush1.msra.mxu0 0.0
    %4016 = vmatprep.subr.mxu0 0.0
    %4017 = vmatpush1.msra.mxu0 0.0
    %4018 = vmatprep.subr.mxu0 0.0
    %4019 = vmatpush1.msra.mxu0 0.0
    %4020 = vmatprep.mubr.f32.mxu0 0.0
    %v4021 = vand.u32 %v3950, 4294901760
    %v4022 = vsub.f32 %v3950, %v4021
    %v4023 = vand.u32 %v4022, 4294901760
    %v4024 = vsub.f32 %v4022, %v4023
    %v4025 = vand.u32 %v4024, 4294901760
    %4026 = vmatmul.mubr.f32.gmra.mrb[0].mxu0 %v4025
    %v4027 = vpop.f32.mrb[0].mxu0
    %v4028 = vadd.f32 0.0, %v4027
    %v4029 = vpop.f32.mrb[0].mxu0
    %4030 = vdwg.mxu0
    %4031 = vmatprep.subr.mxu0 0.0
    %v4032 = vand.u32 %v1218, 4294901760
    %v4033 = vsub.f32 %v1218, %v4032
    %v4034 = vand.u32 %v4033, 4294901760
    %v4035 = vsub.f32 %v4033, %v4034
    %v4036 = vand.u32 %v4035, 4294901760
    %4037 = vmatpush1.msra.mxu0 %v4036
    %4038 = vmatprep.subr.mxu0 0.0
    %v4039 = vand.u32 %v1219, 4294901760
    %v4040 = vsub.f32 %v1219, %v4039
    %v4041 = vand.u32 %v4040, 4294901760
    %v4042 = vsub.f32 %v4040, %v4041
    %v4043 = vand.u32 %v4042, 4294901760
    %4044 = vmatpush1.msra.mxu0 %v4043
    %4045 = vmatprep.subr.mxu0 0.0
    %v4046 = vand.u32 %v1220, 4294901760
    %v4047 = vsub.f32 %v1220, %v4046
    %v4048 = vand.u32 %v4047, 4294901760
    %v4049 = vsub.f32 %v4047, %v4048
    %v4050 = vand.u32 %v4049, 4294901760
    %4051 = vmatpush1.msra.mxu0 %v4050
    %4052 = vmatprep.subr.mxu0 0.0
    %v4053 = vand.u32 %v1221, 4294901760
    %v4054 = vsub.f32 %v1221, %v4053
    %v4055 = vand.u32 %v4054, 4294901760
    %v4056 = vsub.f32 %v4054, %v4055
    %v4057 = vand.u32 %v4056, 4294901760
    %4058 = vmatpush1.msra.mxu0 %v4057
    %4059 = vmatprep.subr.mxu0 0.0
    %4060 = vmatpush1.msra.mxu0 0.0
    %4061 = vmatprep.subr.mxu0 0.0
    %4062 = vmatpush1.msra.mxu0 0.0
    %4063 = vmatprep.subr.mxu0 0.0
    %4064 = vmatpush1.msra.mxu0 0.0
    %4065 = vmatprep.subr.mxu0 0.0
    %4066 = vmatpush1.msra.mxu0 0.0
    %4067 = vmatprep.subr.mxu0 0.0
    %4068 = vmatpush1.msra.mxu0 0.0
    %4069 = vmatprep.subr.mxu0 0.0
    %4070 = vmatpush1.msra.mxu0 0.0
    %4071 = vmatprep.subr.mxu0 0.0
    %4072 = vmatpush1.msra.mxu0 0.0
    %4073 = vmatprep.subr.mxu0 0.0
    %4074 = vmatpush1.msra.mxu0 0.0
    %4075 = vmatprep.subr.mxu0 0.0
    %4076 = vmatpush1.msra.mxu0 0.0
    %4077 = vmatprep.subr.mxu0 0.0
    %4078 = vmatpush1.msra.mxu0 0.0
    %4079 = vmatprep.subr.mxu0 0.0
    %4080 = vmatpush1.msra.mxu0 0.0
    %4081 = vmatprep.subr.mxu0 0.0
    %4082 = vmatpush1.msra.mxu0 0.0
    %4083 = vmatprep.subr.mxu0 0.0
    %4084 = vmatpush1.msra.mxu0 0.0
    %4085 = vmatprep.subr.mxu0 0.0
    %4086 = vmatpush1.msra.mxu0 0.0
    %4087 = vmatprep.subr.mxu0 0.0
    %4088 = vmatpush1.msra.mxu0 0.0
    %4089 = vmatprep.subr.mxu0 0.0
    %4090 = vmatpush1.msra.mxu0 0.0
    %4091 = vmatprep.subr.mxu0 0.0
    %4092 = vmatpush1.msra.mxu0 0.0
    %4093 = vmatprep.subr.mxu0 0.0
    %4094 = vmatpush1.msra.mxu0 0.0
    %4095 = vmatprep.subr.mxu0 0.0
    %4096 = vmatpush1.msra.mxu0 0.0
    %4097 = vmatprep.subr.mxu0 0.0
    %4098 = vmatpush1.msra.mxu0 0.0
    %4099 = vmatprep.subr.mxu0 0.0
    %4100 = vmatpush1.msra.mxu0 0.0
    %4101 = vmatprep.subr.mxu0 0.0
    %4102 = vmatpush1.msra.mxu0 0.0
    %4103 = vmatprep.subr.mxu0 0.0
    %4104 = vmatpush1.msra.mxu0 0.0
    %4105 = vmatprep.subr.mxu0 0.0
    %4106 = vmatpush1.msra.mxu0 0.0
    %4107 = vmatprep.subr.mxu0 0.0
    %4108 = vmatpush1.msra.mxu0 0.0
    %4109 = vmatprep.subr.mxu0 0.0
    %4110 = vmatpush1.msra.mxu0 0.0
    %4111 = vmatprep.subr.mxu0 0.0
    %4112 = vmatpush1.msra.mxu0 0.0
    %4113 = vmatprep.subr.mxu0 0.0
    %4114 = vmatpush1.msra.mxu0 0.0
    %4115 = vmatprep.mubr.f32.mxu0 0.0
    %v4116 = vand.u32 %v3950, 4294901760
    %4117 = vmatmul.mubr.f32.gmra.mrb[0].mxu0 %v4116
    %v4118 = vpop.f32.mrb[0].mxu0
    %v4119 = vadd.f32 %v4028, %v4118
    %v4120 = vpop.f32.mrb[0].mxu0
    %4121 = vdwg.mxu0
    %4122 = vmatprep.subr.mxu0 0.0
    %v4123 = vand.u32 %v1218, 4294901760
    %v4124 = vsub.f32 %v1218, %v4123
    %4125 = vmatpush1.msra.mxu0 %v4124
    %4126 = vmatprep.subr.mxu0 0.0
    %v4127 = vand.u32 %v1219, 4294901760
    %v4128 = vsub.f32 %v1219, %v4127
    %4129 = vmatpush1.msra.mxu0 %v4128
    %4130 = vmatprep.subr.mxu0 0.0
    %v4131 = vand.u32 %v1220, 4294901760
    %v4132 = vsub.f32 %v1220, %v4131
    %4133 = vmatpush1.msra.mxu0 %v4132
    %4134 = vmatprep.subr.mxu0 0.0
    %v4135 = vand.u32 %v1221, 4294901760
    %v4136 = vsub.f32 %v1221, %v4135
    %4137 = vmatpush1.msra.mxu0 %v4136
    %4138 = vmatprep.subr.mxu0 0.0
    %4139 = vmatpush1.msra.mxu0 0.0
    %4140 = vmatprep.subr.mxu0 0.0
    %4141 = vmatpush1.msra.mxu0 0.0
    %4142 = vmatprep.subr.mxu0 0.0
    %4143 = vmatpush1.msra.mxu0 0.0
    %4144 = vmatprep.subr.mxu0 0.0
    %4145 = vmatpush1.msra.mxu0 0.0
    %4146 = vmatprep.subr.mxu0 0.0
    %4147 = vmatpush1.msra.mxu0 0.0
    %4148 = vmatprep.subr.mxu0 0.0
    %4149 = vmatpush1.msra.mxu0 0.0
    %4150 = vmatprep.subr.mxu0 0.0
    %4151 = vmatpush1.msra.mxu0 0.0
    %4152 = vmatprep.subr.mxu0 0.0
    %4153 = vmatpush1.msra.mxu0 0.0
    %4154 = vmatprep.subr.mxu0 0.0
    %4155 = vmatpush1.msra.mxu0 0.0
    %4156 = vmatprep.subr.mxu0 0.0
    %4157 = vmatpush1.msra.mxu0 0.0
    %4158 = vmatprep.subr.mxu0 0.0
    %4159 = vmatpush1.msra.mxu0 0.0
    %4160 = vmatprep.subr.mxu0 0.0
    %4161 = vmatpush1.msra.mxu0 0.0
    %4162 = vmatprep.subr.mxu0 0.0
    %4163 = vmatpush1.msra.mxu0 0.0
    %4164 = vmatprep.subr.mxu0 0.0
    %4165 = vmatpush1.msra.mxu0 0.0
    %4166 = vmatprep.subr.mxu0 0.0
    %4167 = vmatpush1.msra.mxu0 0.0
    %4168 = vmatprep.subr.mxu0 0.0
    %4169 = vmatpush1.msra.mxu0 0.0
    %4170 = vmatprep.subr.mxu0 0.0
    %4171 = vmatpush1.msra.mxu0 0.0
    %4172 = vmatprep.subr.mxu0 0.0
    %4173 = vmatpush1.msra.mxu0 0.0
    %4174 = vmatprep.subr.mxu0 0.0
    %4175 = vmatpush1.msra.mxu0 0.0
    %4176 = vmatprep.subr.mxu0 0.0
    %4177 = vmatpush1.msra.mxu0 0.0
    %4178 = vmatprep.subr.mxu0 0.0
    %4179 = vmatpush1.msra.mxu0 0.0
    %4180 = vmatprep.subr.mxu0 0.0
    %4181 = vmatpush1.msra.mxu0 0.0
    %4182 = vmatprep.subr.mxu0 0.0
    %4183 = vmatpush1.msra.mxu0 0.0
    %4184 = vmatprep.subr.mxu0 0.0
    %4185 = vmatpush1.msra.mxu0 0.0
    %4186 = vmatprep.subr.mxu0 0.0
    %4187 = vmatpush1.msra.mxu0 0.0
    %4188 = vmatprep.subr.mxu0 0.0
    %4189 = vmatpush1.msra.mxu0 0.0
    %4190 = vmatprep.subr.mxu0 0.0
    %4191 = vmatpush1.msra.mxu0 0.0
    %4192 = vmatprep.subr.mxu0 0.0
    %4193 = vmatpush1.msra.mxu0 0.0
    %4194 = vmatprep.mubr.f32.mxu0 0.0
    %v4195 = vand.u32 %v3950, 4294901760
    %v4196 = vsub.f32 %v3950, %v4195
    %4197 = vmatmul.mubr.f32.gmra.mrb[0].mxu0 %v4196
    %v4198 = vpop.f32.mrb[0].mxu0
    %v4199 = vadd.f32 %v4119, %v4198
    %v4200 = vpop.f32.mrb[0].mxu0
    %4201 = vdwg.mxu0
    %4202 = vmatprep.subr.mxu0 0.0
    %v4203 = vand.u32 %v1218, 4294901760
    %4204 = vmatpush1.msra.mxu0 %v4203
    %4205 = vmatprep.subr.mxu0 0.0
    %v4206 = vand.u32 %v1219, 4294901760
    %4207 = vmatpush1.msra.mxu0 %v4206
    %4208 = vmatprep.subr.mxu0 0.0
    %v4209 = vand.u32 %v1220, 4294901760
    %4210 = vmatpush1.msra.mxu0 %v4209
    %4211 = vmatprep.subr.mxu0 0.0
    %v4212 = vand.u32 %v1221, 4294901760
    %4213 = vmatpush1.msra.mxu0 %v4212
    %4214 = vmatprep.subr.mxu0 0.0
    %4215 = vmatpush1.msra.mxu0 0.0
    %4216 = vmatprep.subr.mxu0 0.0
    %4217 = vmatpush1.msra.mxu0 0.0
    %4218 = vmatprep.subr.mxu0 0.0
    %4219 = vmatpush1.msra.mxu0 0.0
    %4220 = vmatprep.subr.mxu0 0.0
    %4221 = vmatpush1.msra.mxu0 0.0
    %4222 = vmatprep.subr.mxu0 0.0
    %4223 = vmatpush1.msra.mxu0 0.0
    %4224 = vmatprep.subr.mxu0 0.0
    %4225 = vmatpush1.msra.mxu0 0.0
    %4226 = vmatprep.subr.mxu0 0.0
    %4227 = vmatpush1.msra.mxu0 0.0
    %4228 = vmatprep.subr.mxu0 0.0
    %4229 = vmatpush1.msra.mxu0 0.0
    %4230 = vmatprep.subr.mxu0 0.0
    %4231 = vmatpush1.msra.mxu0 0.0
    %4232 = vmatprep.subr.mxu0 0.0
    %4233 = vmatpush1.msra.mxu0 0.0
    %4234 = vmatprep.subr.mxu0 0.0
    %4235 = vmatpush1.msra.mxu0 0.0
    %4236 = vmatprep.subr.mxu0 0.0
    %4237 = vmatpush1.msra.mxu0 0.0
    %4238 = vmatprep.subr.mxu0 0.0
    %4239 = vmatpush1.msra.mxu0 0.0
    %4240 = vmatprep.subr.mxu0 0.0
    %4241 = vmatpush1.msra.mxu0 0.0
    %4242 = vmatprep.subr.mxu0 0.0
    %4243 = vmatpush1.msra.mxu0 0.0
    %4244 = vmatprep.subr.mxu0 0.0
    %4245 = vmatpush1.msra.mxu0 0.0
    %4246 = vmatprep.subr.mxu0 0.0
    %4247 = vmatpush1.msra.mxu0 0.0
    %4248 = vmatprep.subr.mxu0 0.0
    %4249 = vmatpush1.msra.mxu0 0.0
    %4250 = vmatprep.subr.mxu0 0.0
    %4251 = vmatpush1.msra.mxu0 0.0
    %4252 = vmatprep.subr.mxu0 0.0
    %4253 = vmatpush1.msra.mxu0 0.0
    %4254 = vmatprep.subr.mxu0 0.0
    %4255 = vmatpush1.msra.mxu0 0.0
    %4256 = vmatprep.subr.mxu0 0.0
    %4257 = vmatpush1.msra.mxu0 0.0
    %4258 = vmatprep.subr.mxu0 0.0
    %4259 = vmatpush1.msra.mxu0 0.0
    %4260 = vmatprep.subr.mxu0 0.0
    %4261 = vmatpush1.msra.mxu0 0.0
    %4262 = vmatprep.subr.mxu0 0.0
    %4263 = vmatpush1.msra.mxu0 0.0
    %4264 = vmatprep.subr.mxu0 0.0
    %4265 = vmatpush1.msra.mxu0 0.0
    %4266 = vmatprep.subr.mxu0 0.0
    %4267 = vmatpush1.msra.mxu0 0.0
    %4268 = vmatprep.subr.mxu0 0.0
    %4269 = vmatpush1.msra.mxu0 0.0
    %4270 = vmatprep.mubr.f32.mxu0 0.0
    %v4271 = vand.u32 %v3950, 4294901760
    %v4272 = vsub.f32 %v3950, %v4271
    %v4273 = vand.u32 %v4272, 4294901760
    %4274 = vmatmul.mubr.f32.gmra.mrb[0].mxu0 %v4273
    %v4275 = vpop.f32.mrb[0].mxu0
    %v4276 = vadd.f32 %v4199, %v4275
    %v4277 = vpop.f32.mrb[0].mxu0
    %4278 = vdwg.mxu0
    %4279 = vmatprep.subr.mxu0 0.0
    %v4280 = vand.u32 %v1218, 4294901760
    %v4281 = vsub.f32 %v1218, %v4280
    %v4282 = vand.u32 %v4281, 4294901760
    %4283 = vmatpush1.msra.mxu0 %v4282
    %4284 = vmatprep.subr.mxu0 0.0
    %v4285 = vand.u32 %v1219, 4294901760
    %v4286 = vsub.f32 %v1219, %v4285
    %v4287 = vand.u32 %v4286, 4294901760
    %4288 = vmatpush1.msra.mxu0 %v4287
    %4289 = vmatprep.subr.mxu0 0.0
    %v4290 = vand.u32 %v1220, 4294901760
    %v4291 = vsub.f32 %v1220, %v4290
    %v4292 = vand.u32 %v4291, 4294901760
    %4293 = vmatpush1.msra.mxu0 %v4292
    %4294 = vmatprep.subr.mxu0 0.0
    %v4295 = vand.u32 %v1221, 4294901760
    %v4296 = vsub.f32 %v1221, %v4295
    %v4297 = vand.u32 %v4296, 4294901760
    %4298 = vmatpush1.msra.mxu0 %v4297
    %4299 = vmatprep.subr.mxu0 0.0
    %4300 = vmatpush1.msra.mxu0 0.0
    %4301 = vmatprep.subr.mxu0 0.0
    %4302 = vmatpush1.msra.mxu0 0.0
    %4303 = vmatprep.subr.mxu0 0.0
    %4304 = vmatpush1.msra.mxu0 0.0
    %4305 = vmatprep.subr.mxu0 0.0
    %4306 = vmatpush1.msra.mxu0 0.0
    %4307 = vmatprep.subr.mxu0 0.0
    %4308 = vmatpush1.msra.mxu0 0.0
    %4309 = vmatprep.subr.mxu0 0.0
    %4310 = vmatpush1.msra.mxu0 0.0
    %4311 = vmatprep.subr.mxu0 0.0
    %4312 = vmatpush1.msra.mxu0 0.0
    %4313 = vmatprep.subr.mxu0 0.0
    %4314 = vmatpush1.msra.mxu0 0.0
    %4315 = vmatprep.subr.mxu0 0.0
    %4316 = vmatpush1.msra.mxu0 0.0
    %4317 = vmatprep.subr.mxu0 0.0
    %4318 = vmatpush1.msra.mxu0 0.0
    %4319 = vmatprep.subr.mxu0 0.0
    %4320 = vmatpush1.msra.mxu0 0.0
    %4321 = vmatprep.subr.mxu0 0.0
    %4322 = vmatpush1.msra.mxu0 0.0
    %4323 = vmatprep.subr.mxu0 0.0
    %4324 = vmatpush1.msra.mxu0 0.0
    %4325 = vmatprep.subr.mxu0 0.0
    %4326 = vmatpush1.msra.mxu0 0.0
    %4327 = vmatprep.subr.mxu0 0.0
    %4328 = vmatpush1.msra.mxu0 0.0
    %4329 = vmatprep.subr.mxu0 0.0
    %4330 = vmatpush1.msra.mxu0 0.0
    %4331 = vmatprep.subr.mxu0 0.0
    %4332 = vmatpush1.msra.mxu0 0.0
    %4333 = vmatprep.subr.mxu0 0.0
    %4334 = vmatpush1.msra.mxu0 0.0
    %4335 = vmatprep.subr.mxu0 0.0
    %4336 = vmatpush1.msra.mxu0 0.0
    %4337 = vmatprep.subr.mxu0 0.0
    %4338 = vmatpush1.msra.mxu0 0.0
    %4339 = vmatprep.subr.mxu0 0.0
    %4340 = vmatpush1.msra.mxu0 0.0
    %4341 = vmatprep.subr.mxu0 0.0
    %4342 = vmatpush1.msra.mxu0 0.0
    %4343 = vmatprep.subr.mxu0 0.0
    %4344 = vmatpush1.msra.mxu0 0.0
    %4345 = vmatprep.subr.mxu0 0.0
    %4346 = vmatpush1.msra.mxu0 0.0
    %4347 = vmatprep.subr.mxu0 0.0
    %4348 = vmatpush1.msra.mxu0 0.0
    %4349 = vmatprep.subr.mxu0 0.0
    %4350 = vmatpush1.msra.mxu0 0.0
    %4351 = vmatprep.subr.mxu0 0.0
    %4352 = vmatpush1.msra.mxu0 0.0
    %4353 = vmatprep.subr.mxu0 0.0
    %4354 = vmatpush1.msra.mxu0 0.0
    %4355 = vmatprep.mubr.f32.mxu0 0.0
    %v4356 = vand.u32 %v3950, 4294901760
    %4357 = vmatmul.mubr.f32.gmra.mrb[0].mxu0 %v4356
    %v4358 = vpop.f32.mrb[0].mxu0
    %v4359 = vadd.f32 %v4276, %v4358
    %v4360 = vpop.f32.mrb[0].mxu0
    %4361 = vdwg.mxu0
    %4362 = vmatprep.subr.mxu0 0.0
    %v4363 = vand.u32 %v1218, 4294901760
    %4364 = vmatpush1.msra.mxu0 %v4363
    %4365 = vmatprep.subr.mxu0 0.0
    %v4366 = vand.u32 %v1219, 4294901760
    %4367 = vmatpush1.msra.mxu0 %v4366
    %4368 = vmatprep.subr.mxu0 0.0
    %v4369 = vand.u32 %v1220, 4294901760
    %4370 = vmatpush1.msra.mxu0 %v4369
    %4371 = vmatprep.subr.mxu0 0.0
    %v4372 = vand.u32 %v1221, 4294901760
    %4373 = vmatpush1.msra.mxu0 %v4372
    %4374 = vmatprep.subr.mxu0 0.0
    %4375 = vmatpush1.msra.mxu0 0.0
    %4376 = vmatprep.subr.mxu0 0.0
    %4377 = vmatpush1.msra.mxu0 0.0
    %4378 = vmatprep.subr.mxu0 0.0
    %4379 = vmatpush1.msra.mxu0 0.0
    %4380 = vmatprep.subr.mxu0 0.0
    %4381 = vmatpush1.msra.mxu0 0.0
    %4382 = vmatprep.subr.mxu0 0.0
    %4383 = vmatpush1.msra.mxu0 0.0
    %4384 = vmatprep.subr.mxu0 0.0
    %4385 = vmatpush1.msra.mxu0 0.0
    %4386 = vmatprep.subr.mxu0 0.0
    %4387 = vmatpush1.msra.mxu0 0.0
    %4388 = vmatprep.subr.mxu0 0.0
    %4389 = vmatpush1.msra.mxu0 0.0
    %4390 = vmatprep.subr.mxu0 0.0
    %4391 = vmatpush1.msra.mxu0 0.0
    %4392 = vmatprep.subr.mxu0 0.0
    %4393 = vmatpush1.msra.mxu0 0.0
    %4394 = vmatprep.subr.mxu0 0.0
    %4395 = vmatpush1.msra.mxu0 0.0
    %4396 = vmatprep.subr.mxu0 0.0
    %4397 = vmatpush1.msra.mxu0 0.0
    %4398 = vmatprep.subr.mxu0 0.0
    %4399 = vmatpush1.msra.mxu0 0.0
    %4400 = vmatprep.subr.mxu0 0.0
    %4401 = vmatpush1.msra.mxu0 0.0
    %4402 = vmatprep.subr.mxu0 0.0
    %4403 = vmatpush1.msra.mxu0 0.0
    %4404 = vmatprep.subr.mxu0 0.0
    %4405 = vmatpush1.msra.mxu0 0.0
    %4406 = vmatprep.subr.mxu0 0.0
    %4407 = vmatpush1.msra.mxu0 0.0
    %4408 = vmatprep.subr.mxu0 0.0
    %4409 = vmatpush1.msra.mxu0 0.0
    %4410 = vmatprep.subr.mxu0 0.0
    %4411 = vmatpush1.msra.mxu0 0.0
    %4412 = vmatprep.subr.mxu0 0.0
    %4413 = vmatpush1.msra.mxu0 0.0
    %4414 = vmatprep.subr.mxu0 0.0
    %4415 = vmatpush1.msra.mxu0 0.0
    %4416 = vmatprep.subr.mxu0 0.0
    %4417 = vmatpush1.msra.mxu0 0.0
    %4418 = vmatprep.subr.mxu0 0.0
    %4419 = vmatpush1.msra.mxu0 0.0
    %4420 = vmatprep.subr.mxu0 0.0
    %4421 = vmatpush1.msra.mxu0 0.0
    %4422 = vmatprep.subr.mxu0 0.0
    %4423 = vmatpush1.msra.mxu0 0.0
    %4424 = vmatprep.subr.mxu0 0.0
    %4425 = vmatpush1.msra.mxu0 0.0
    %4426 = vmatprep.subr.mxu0 0.0
    %4427 = vmatpush1.msra.mxu0 0.0
    %4428 = vmatprep.subr.mxu0 0.0
    %4429 = vmatpush1.msra.mxu0 0.0
    %4430 = vmatprep.mubr.f32.mxu0 0.0
    %v4431 = vand.u32 %v3950, 4294901760
    %4432 = vmatmul.mubr.f32.gmra.mrb[0].mxu0 %v4431
    %v4433 = vpop.f32.mrb[0].mxu0
    %v4434 = vadd.f32 %v4359, %v4433
    %v4435 = vpop.f32.mrb[0].mxu0
    %4436 = vdwg.mxu0
    %v4437 = vadd.f32 %v3948, %v4434
    %v4438 = vxor.u32 %v4437, 2147483648
    %v4439 = vmul.f32 %v4438, 1.442695
    %v4440 = vpow.pop %v4439
    %v4441 = vadd.f32 %v4440, 1.0
    %v4442 = vrcp.pop %v4441
    %v4443 = vmul.f32 1.0, %v4442
    %v4444 = vtanh.pop %v4437
    %4446 = vrot.lane.b32.xlu0 %v3946, 32
    %v4447 = vpop.permute.xlu0 %4446
    %v4449 = vmul.f32 %v4443, %v4447
    %4451 = vrot.lane.b32.xlu0 %v4444, 32
    %v4452 = vpop.permute.xlu0 %4451
    %v4454 = vmul.f32 %v4443, %v4452
    %4456 = vrot.lane.b32.xlu0 %v4454, 32
    %v4457 = vpop.permute.xlu0 %4456
    %v4459 = vadd.f32 %v4449, %v4457
    %v4460 = vtanh.pop %v4459
    %4462 = vrot.lane.b32.xlu0 %v4460, 32
    %v4463 = vpop.permute.xlu0 %4462
    %v4465 = vmul.f32 %v4443, %v4463
    %4467 = vrot.lane.b32.xlu0 %v4465, 64
    %v4468 = vpop.permute.xlu0 %4467
    %4470 = vst.msk [vmem:[#allocation2] sm:$0xff] %vm1209, %v4468
    %4472 = vrot.lane.b32.xlu0 %v4459, 96
    %v4473 = vpop.permute.xlu0 %4472
    %4475 = vst.msk [vmem:[#allocation3] sm:$0xff] %vm1209, %v4473
    %v4476 = vld [vmem:[#allocation6] sm:$0xff]
    %s4477 = scalar_lea.vmem [#allocation5], 40
    %v4478 = vld [vmem:[%s4477] sm:$0xff]
    %4480 = vrot.lane.b32.xlu0 %v4478, 64
    %v4481 = vpop.permute.xlu0 %4480
    %v4483 = vsub.f32 %v4465, %v4481
    %4485 = vrot.lane.b32.xlu0 %v4483, 64
    %v4486 = vpop.permute.xlu0 %4485
    %v4488 = vmax.f32 %v4476, %v4486
    %4489 = vst.msk [vmem:[#allocation6] sm:$0xff] %vm1209, %v4488
    %v4490 = vld [vmem:[#allocation2] sm:$0xff]
    %v4491 = vld [vmem:[#allocation3] sm:$0xff]
    %s4492 = scalar_lea.vmem [#allocation4], 48
    %v4493 = vld [vmem:[%s4492] sm:$0xff]
    %v4495 = vsel %vm1209, %v4490, 0
    %4497 = vmatprep.subr.mxu0 0.0
    %v4498 = vand.u32 %v1218, 4294901760
    %4499 = vmatpush1.msra.mxu0 %v4498
    %4500 = vmatprep.subr.mxu0 0.0
    %v4501 = vand.u32 %v1219, 4294901760
    %4502 = vmatpush1.msra.mxu0 %v4501
    %4503 = vmatprep.subr.mxu0 0.0
    %v4504 = vand.u32 %v1220, 4294901760
    %4505 = vmatpush1.msra.mxu0 %v4504
    %4506 = vmatprep.subr.mxu0 0.0
    %v4507 = vand.u32 %v1221, 4294901760
    %4508 = vmatpush1.msra.mxu0 %v4507
    %4509 = vmatprep.subr.mxu0 0.0
    %4510 = vmatpush1.msra.mxu0 0.0
    %4511 = vmatprep.subr.mxu0 0.0
    %4512 = vmatpush1.msra.mxu0 0.0
    %4513 = vmatprep.subr.mxu0 0.0
    %4514 = vmatpush1.msra.mxu0 0.0
    %4515 = vmatprep.subr.mxu0 0.0
    %4516 = vmatpush1.msra.mxu0 0.0
    %4517 = vmatprep.subr.mxu0 0.0
    %4518 = vmatpush1.msra.mxu0 0.0
    %4519 = vmatprep.subr.mxu0 0.0
    %4520 = vmatpush1.msra.mxu0 0.0
    %4521 = vmatprep.subr.mxu0 0.0
    %4522 = vmatpush1.msra.mxu0 0.0
    %4523 = vmatprep.subr.mxu0 0.0
    %4524 = vmatpush1.msra.mxu0 0.0
    %4525 = vmatprep.subr.mxu0 0.0
    %4526 = vmatpush1.msra.mxu0 0.0
    %4527 = vmatprep.subr.mxu0 0.0
    %4528 = vmatpush1.msra.mxu0 0.0
    %4529 = vmatprep.subr.mxu0 0.0
    %4530 = vmatpush1.msra.mxu0 0.0
    %4531 = vmatprep.subr.mxu0 0.0
    %4532 = vmatpush1.msra.mxu0 0.0
    %4533 = vmatprep.subr.mxu0 0.0
    %4534 = vmatpush1.msra.mxu0 0.0
    %4535 = vmatprep.subr.mxu0 0.0
    %4536 = vmatpush1.msra.mxu0 0.0
    %4537 = vmatprep.subr.mxu0 0.0
    %4538 = vmatpush1.msra.mxu0 0.0
    %4539 = vmatprep.subr.mxu0 0.0
    %4540 = vmatpush1.msra.mxu0 0.0
    %4541 = vmatprep.subr.mxu0 0.0
    %4542 = vmatpush1.msra.mxu0 0.0
    %4543 = vmatprep.subr.mxu0 0.0
    %4544 = vmatpush1.msra.mxu0 0.0
    %4545 = vmatprep.subr.mxu0 0.0
    %4546 = vmatpush1.msra.mxu0 0.0
    %4547 = vmatprep.subr.mxu0 0.0
    %4548 = vmatpush1.msra.mxu0 0.0
    %4549 = vmatprep.subr.mxu0 0.0
    %4550 = vmatpush1.msra.mxu0 0.0
    %4551 = vmatprep.subr.mxu0 0.0
    %4552 = vmatpush1.msra.mxu0 0.0
    %4553 = vmatprep.subr.mxu0 0.0
    %4554 = vmatpush1.msra.mxu0 0.0
    %4555 = vmatprep.subr.mxu0 0.0
    %4556 = vmatpush1.msra.mxu0 0.0
    %4557 = vmatprep.subr.mxu0 0.0
    %4558 = vmatpush1.msra.mxu0 0.0
    %4559 = vmatprep.subr.mxu0 0.0
    %4560 = vmatpush1.msra.mxu0 0.0
    %4561 = vmatprep.subr.mxu0 0.0
    %4562 = vmatpush1.msra.mxu0 0.0
    %4563 = vmatprep.subr.mxu0 0.0
    %4564 = vmatpush1.msra.mxu0 0.0
    %4565 = vmatprep.mubr.f32.mxu0 0.0
    %v4566 = vand.u32 %v4495, 4294901760
    %v4567 = vsub.f32 %v4495, %v4566
    %v4568 = vand.u32 %v4567, 4294901760
    %v4569 = vsub.f32 %v4567, %v4568
    %v4570 = vand.u32 %v4569, 4294901760
    %4571 = vmatmul.mubr.f32.gmra.mrb[0].mxu0 %v4570
    %v4572 = vpop.f32.mrb[0].mxu0
    %v4573 = vadd.f32 0.0, %v4572
    %v4574 = vpop.f32.mrb[0].mxu0
    %4575 = vdwg.mxu0
    %4576 = vmatprep.subr.mxu0 0.0
    %v4577 = vand.u32 %v1218, 4294901760
    %v4578 = vsub.f32 %v1218, %v4577
    %v4579 = vand.u32 %v4578, 4294901760
    %v4580 = vsub.f32 %v4578, %v4579
    %v4581 = vand.u32 %v4580, 4294901760
    %4582 = vmatpush1.msra.mxu0 %v4581
    %4583 = vmatprep.subr.mxu0 0.0
    %v4584 = vand.u32 %v1219, 4294901760
    %v4585 = vsub.f32 %v1219, %v4584
    %v4586 = vand.u32 %v4585, 4294901760
    %v4587 = vsub.f32 %v4585, %v4586
    %v4588 = vand.u32 %v4587, 4294901760
    %4589 = vmatpush1.msra.mxu0 %v4588
    %4590 = vmatprep.subr.mxu0 0.0
    %v4591 = vand.u32 %v1220, 4294901760
    %v4592 = vsub.f32 %v1220, %v4591
    %v4593 = vand.u32 %v4592, 4294901760
    %v4594 = vsub.f32 %v4592, %v4593
    %v4595 = vand.u32 %v4594, 4294901760
    %4596 = vmatpush1.msra.mxu0 %v4595
    %4597 = vmatprep.subr.mxu0 0.0
    %v4598 = vand.u32 %v1221, 4294901760
    %v4599 = vsub.f32 %v1221, %v4598
    %v4600 = vand.u32 %v4599, 4294901760
    %v4601 = vsub.f32 %v4599, %v4600
    %v4602 = vand.u32 %v4601, 4294901760
    %4603 = vmatpush1.msra.mxu0 %v4602
    %4604 = vmatprep.subr.mxu0 0.0
    %4605 = vmatpush1.msra.mxu0 0.0
    %4606 = vmatprep.subr.mxu0 0.0
    %4607 = vmatpush1.msra.mxu0 0.0
    %4608 = vmatprep.subr.mxu0 0.0
    %4609 = vmatpush1.msra.mxu0 0.0
    %4610 = vmatprep.subr.mxu0 0.0
    %4611 = vmatpush1.msra.mxu0 0.0
    %4612 = vmatprep.subr.mxu0 0.0
    %4613 = vmatpush1.msra.mxu0 0.0
    %4614 = vmatprep.subr.mxu0 0.0
    %4615 = vmatpush1.msra.mxu0 0.0
    %4616 = vmatprep.subr.mxu0 0.0
    %4617 = vmatpush1.msra.mxu0 0.0
    %4618 = vmatprep.subr.mxu0 0.0
    %4619 = vmatpush1.msra.mxu0 0.0
    %4620 = vmatprep.subr.mxu0 0.0
    %4621 = vmatpush1.msra.mxu0 0.0
    %4622 = vmatprep.subr.mxu0 0.0
    %4623 = vmatpush1.msra.mxu0 0.0
    %4624 = vmatprep.subr.mxu0 0.0
    %4625 = vmatpush1.msra.mxu0 0.0
    %4626 = vmatprep.subr.mxu0 0.0
    %4627 = vmatpush1.msra.mxu0 0.0
    %4628 = vmatprep.subr.mxu0 0.0
    %4629 = vmatpush1.msra.mxu0 0.0
    %4630 = vmatprep.subr.mxu0 0.0
    %4631 = vmatpush1.msra.mxu0 0.0
    %4632 = vmatprep.subr.mxu0 0.0
    %4633 = vmatpush1.msra.mxu0 0.0
    %4634 = vmatprep.subr.mxu0 0.0
    %4635 = vmatpush1.msra.mxu0 0.0
    %4636 = vmatprep.subr.mxu0 0.0
    %4637 = vmatpush1.msra.mxu0 0.0
    %4638 = vmatprep.subr.mxu0 0.0
    %4639 = vmatpush1.msra.mxu0 0.0
    %4640 = vmatprep.subr.mxu0 0.0
    %4641 = vmatpush1.msra.mxu0 0.0
    %4642 = vmatprep.subr.mxu0 0.0
    %4643 = vmatpush1.msra.mxu0 0.0
    %4644 = vmatprep.subr.mxu0 0.0
    %4645 = vmatpush1.msra.mxu0 0.0
    %4646 = vmatprep.subr.mxu0 0.0
    %4647 = vmatpush1.msra.mxu0 0.0
    %4648 = vmatprep.subr.mxu0 0.0
    %4649 = vmatpush1.msra.mxu0 0.0
    %4650 = vmatprep.subr.mxu0 0.0
    %4651 = vmatpush1.msra.mxu0 0.0
    %4652 = vmatprep.subr.mxu0 0.0
    %4653 = vmatpush1.msra.mxu0 0.0
    %4654 = vmatprep.subr.mxu0 0.0
    %4655 = vmatpush1.msra.mxu0 0.0
    %4656 = vmatprep.subr.mxu0 0.0
    %4657 = vmatpush1.msra.mxu0 0.0
    %4658 = vmatprep.subr.mxu0 0.0
    %4659 = vmatpush1.msra.mxu0 0.0
    %4660 = vmatprep.mubr.f32.mxu0 0.0
    %v4661 = vand.u32 %v4495, 4294901760
    %4662 = vmatmul.mubr.f32.gmra.mrb[0].mxu0 %v4661
    %v4663 = vpop.f32.mrb[0].mxu0
    %v4664 = vadd.f32 %v4573, %v4663
    %v4665 = vpop.f32.mrb[0].mxu0
    %4666 = vdwg.mxu0
    %4667 = vmatprep.subr.mxu0 0.0
    %v4668 = vand.u32 %v1218, 4294901760
    %v4669 = vsub.f32 %v1218, %v4668
    %4670 = vmatpush1.msra.mxu0 %v4669
    %4671 = vmatprep.subr.mxu0 0.0
    %v4672 = vand.u32 %v1219, 4294901760
    %v4673 = vsub.f32 %v1219, %v4672
    %4674 = vmatpush1.msra.mxu0 %v4673
    %4675 = vmatprep.subr.mxu0 0.0
    %v4676 = vand.u32 %v1220, 4294901760
    %v4677 = vsub.f32 %v1220, %v4676
    %4678 = vmatpush1.msra.mxu0 %v4677
    %4679 = vmatprep.subr.mxu0 0.0
    %v4680 = vand.u32 %v1221, 4294901760
    %v4681 = vsub.f32 %v1221, %v4680
    %4682 = vmatpush1.msra.mxu0 %v4681
    %4683 = vmatprep.subr.mxu0 0.0
    %4684 = vmatpush1.msra.mxu0 0.0
    %4685 = vmatprep.subr.mxu0 0.0
    %4686 = vmatpush1.msra.mxu0 0.0
    %4687 = vmatprep.subr.mxu0 0.0
    %4688 = vmatpush1.msra.mxu0 0.0
    %4689 = vmatprep.subr.mxu0 0.0
    %4690 = vmatpush1.msra.mxu0 0.0
    %4691 = vmatprep.subr.mxu0 0.0
    %4692 = vmatpush1.msra.mxu0 0.0
    %4693 = vmatprep.subr.mxu0 0.0
    %4694 = vmatpush1.msra.mxu0 0.0
    %4695 = vmatprep.subr.mxu0 0.0
    %4696 = vmatpush1.msra.mxu0 0.0
    %4697 = vmatprep.subr.mxu0 0.0
    %4698 = vmatpush1.msra.mxu0 0.0
    %4699 = vmatprep.subr.mxu0 0.0
    %4700 = vmatpush1.msra.mxu0 0.0
    %4701 = vmatprep.subr.mxu0 0.0
    %4702 = vmatpush1.msra.mxu0 0.0
    %4703 = vmatprep.subr.mxu0 0.0
    %4704 = vmatpush1.msra.mxu0 0.0
    %4705 = vmatprep.subr.mxu0 0.0
    %4706 = vmatpush1.msra.mxu0 0.0
    %4707 = vmatprep.subr.mxu0 0.0
    %4708 = vmatpush1.msra.mxu0 0.0
    %4709 = vmatprep.subr.mxu0 0.0
    %4710 = vmatpush1.msra.mxu0 0.0
    %4711 = vmatprep.subr.mxu0 0.0
    %4712 = vmatpush1.msra.mxu0 0.0
    %4713 = vmatprep.subr.mxu0 0.0
    %4714 = vmatpush1.msra.mxu0 0.0
    %4715 = vmatprep.subr.mxu0 0.0
    %4716 = vmatpush1.msra.mxu0 0.0
    %4717 = vmatprep.subr.mxu0 0.0
    %4718 = vmatpush1.msra.mxu0 0.0
    %4719 = vmatprep.subr.mxu0 0.0
    %4720 = vmatpush1.msra.mxu0 0.0
    %4721 = vmatprep.subr.mxu0 0.0
    %4722 = vmatpush1.msra.mxu0 0.0
    %4723 = vmatprep.subr.mxu0 0.0
    %4724 = vmatpush1.msra.mxu0 0.0
    %4725 = vmatprep.subr.mxu0 0.0
    %4726 = vmatpush1.msra.mxu0 0.0
    %4727 = vmatprep.subr.mxu0 0.0
    %4728 = vmatpush1.msra.mxu0 0.0
    %4729 = vmatprep.subr.mxu0 0.0
    %4730 = vmatpush1.msra.mxu0 0.0
    %4731 = vmatprep.subr.mxu0 0.0
    %4732 = vmatpush1.msra.mxu0 0.0
    %4733 = vmatprep.subr.mxu0 0.0
    %4734 = vmatpush1.msra.mxu0 0.0
    %4735 = vmatprep.subr.mxu0 0.0
    %4736 = vmatpush1.msra.mxu0 0.0
    %4737 = vmatprep.subr.mxu0 0.0
    %4738 = vmatpush1.msra.mxu0 0.0
    %4739 = vmatprep.mubr.f32.mxu0 0.0
    %v4740 = vand.u32 %v4495, 4294901760
    %v4741 = vsub.f32 %v4495, %v4740
    %4742 = vmatmul.mubr.f32.gmra.mrb[0].mxu0 %v4741
    %v4743 = vpop.f32.mrb[0].mxu0
    %v4744 = vadd.f32 %v4664, %v4743
    %v4745 = vpop.f32.mrb[0].mxu0
    %4746 = vdwg.mxu0
    %4747 = vmatprep.subr.mxu0 0.0
    %v4748 = vand.u32 %v1218, 4294901760
    %4749 = vmatpush1.msra.mxu0 %v4748
    %4750 = vmatprep.subr.mxu0 0.0
    %v4751 = vand.u32 %v1219, 4294901760
    %4752 = vmatpush1.msra.mxu0 %v4751
    %4753 = vmatprep.subr.mxu0 0.0
    %v4754 = vand.u32 %v1220, 4294901760
    %4755 = vmatpush1.msra.mxu0 %v4754
    %4756 = vmatprep.subr.mxu0 0.0
    %v4757 = vand.u32 %v1221, 4294901760
    %4758 = vmatpush1.msra.mxu0 %v4757
    %4759 = vmatprep.subr.mxu0 0.0
    %4760 = vmatpush1.msra.mxu0 0.0
    %4761 = vmatprep.subr.mxu0 0.0
    %4762 = vmatpush1.msra.mxu0 0.0
    %4763 = vmatprep.subr.mxu0 0.0
    %4764 = vmatpush1.msra.mxu0 0.0
    %4765 = vmatprep.subr.mxu0 0.0
    %4766 = vmatpush1.msra.mxu0 0.0
    %4767 = vmatprep.subr.mxu0 0.0
    %4768 = vmatpush1.msra.mxu0 0.0
    %4769 = vmatprep.subr.mxu0 0.0
    %4770 = vmatpush1.msra.mxu0 0.0
    %4771 = vmatprep.subr.mxu0 0.0
    %4772 = vmatpush1.msra.mxu0 0.0
    %4773 = vmatprep.subr.mxu0 0.0
    %4774 = vmatpush1.msra.mxu0 0.0
    %4775 = vmatprep.subr.mxu0 0.0
    %4776 = vmatpush1.msra.mxu0 0.0
    %4777 = vmatprep.subr.mxu0 0.0
    %4778 = vmatpush1.msra.mxu0 0.0
    %4779 = vmatprep.subr.mxu0 0.0
    %4780 = vmatpush1.msra.mxu0 0.0
    %4781 = vmatprep.subr.mxu0 0.0
    %4782 = vmatpush1.msra.mxu0 0.0
    %4783 = vmatprep.subr.mxu0 0.0
    %4784 = vmatpush1.msra.mxu0 0.0
    %4785 = vmatprep.subr.mxu0 0.0
    %4786 = vmatpush1.msra.mxu0 0.0
    %4787 = vmatprep.subr.mxu0 0.0
    %4788 = vmatpush1.msra.mxu0 0.0
    %4789 = vmatprep.subr.mxu0 0.0
    %4790 = vmatpush1.msra.mxu0 0.0
    %4791 = vmatprep.subr.mxu0 0.0
    %4792 = vmatpush1.msra.mxu0 0.0
    %4793 = vmatprep.subr.mxu0 0.0
    %4794 = vmatpush1.msra.mxu0 0.0
    %4795 = vmatprep.subr.mxu0 0.0
    %4796 = vmatpush1.msra.mxu0 0.0
    %4797 = vmatprep.subr.mxu0 0.0
    %4798 = vmatpush1.msra.mxu0 0.0
    %4799 = vmatprep.subr.mxu0 0.0
    %4800 = vmatpush1.msra.mxu0 0.0
    %4801 = vmatprep.subr.mxu0 0.0
    %4802 = vmatpush1.msra.mxu0 0.0
    %4803 = vmatprep.subr.mxu0 0.0
    %4804 = vmatpush1.msra.mxu0 0.0
    %4805 = vmatprep.subr.mxu0 0.0
    %4806 = vmatpush1.msra.mxu0 0.0
    %4807 = vmatprep.subr.mxu0 0.0
    %4808 = vmatpush1.msra.mxu0 0.0
    %4809 = vmatprep.subr.mxu0 0.0
    %4810 = vmatpush1.msra.mxu0 0.0
    %4811 = vmatprep.subr.mxu0 0.0
    %4812 = vmatpush1.msra.mxu0 0.0
    %4813 = vmatprep.subr.mxu0 0.0
    %4814 = vmatpush1.msra.mxu0 0.0
    %4815 = vmatprep.mubr.f32.mxu0 0.0
    %v4816 = vand.u32 %v4495, 4294901760
    %v4817 = vsub.f32 %v4495, %v4816
    %v4818 = vand.u32 %v4817, 4294901760
    %4819 = vmatmul.mubr.f32.gmra.mrb[0].mxu0 %v4818
    %v4820 = vpop.f32.mrb[0].mxu0
    %v4821 = vadd.f32 %v4744, %v4820
    %v4822 = vpop.f32.mrb[0].mxu0
    %4823 = vdwg.mxu0
    %4824 = vmatprep.subr.mxu0 0.0
    %v4825 = vand.u32 %v1218, 4294901760
    %v4826 = vsub.f32 %v1218, %v4825
    %v4827 = vand.u32 %v4826, 4294901760
    %4828 = vmatpush1.msra.mxu0 %v4827
    %4829 = vmatprep.subr.mxu0 0.0
    %v4830 = vand.u32 %v1219, 4294901760
    %v4831 = vsub.f32 %v1219, %v4830
    %v4832 = vand.u32 %v4831, 4294901760
    %4833 = vmatpush1.msra.mxu0 %v4832
    %4834 = vmatprep.subr.mxu0 0.0
    %v4835 = vand.u32 %v1220, 4294901760
    %v4836 = vsub.f32 %v1220, %v4835
    %v4837 = vand.u32 %v4836, 4294901760
    %4838 = vmatpush1.msra.mxu0 %v4837
    %4839 = vmatprep.subr.mxu0 0.0
    %v4840 = vand.u32 %v1221, 4294901760
    %v4841 = vsub.f32 %v1221, %v4840
    %v4842 = vand.u32 %v4841, 4294901760
    %4843 = vmatpush1.msra.mxu0 %v4842
    %4844 = vmatprep.subr.mxu0 0.0
    %4845 = vmatpush1.msra.mxu0 0.0
    %4846 = vmatprep.subr.mxu0 0.0
    %4847 = vmatpush1.msra.mxu0 0.0
    %4848 = vmatprep.subr.mxu0 0.0
    %4849 = vmatpush1.msra.mxu0 0.0
    %4850 = vmatprep.subr.mxu0 0.0
    %4851 = vmatpush1.msra.mxu0 0.0
    %4852 = vmatprep.subr.mxu0 0.0
    %4853 = vmatpush1.msra.mxu0 0.0
    %4854 = vmatprep.subr.mxu0 0.0
    %4855 = vmatpush1.msra.mxu0 0.0
    %4856 = vmatprep.subr.mxu0 0.0
    %4857 = vmatpush1.msra.mxu0 0.0
    %4858 = vmatprep.subr.mxu0 0.0
    %4859 = vmatpush1.msra.mxu0 0.0
    %4860 = vmatprep.subr.mxu0 0.0
    %4861 = vmatpush1.msra.mxu0 0.0
    %4862 = vmatprep.subr.mxu0 0.0
    %4863 = vmatpush1.msra.mxu0 0.0
    %4864 = vmatprep.subr.mxu0 0.0
    %4865 = vmatpush1.msra.mxu0 0.0
    %4866 = vmatprep.subr.mxu0 0.0
    %4867 = vmatpush1.msra.mxu0 0.0
    %4868 = vmatprep.subr.mxu0 0.0
    %4869 = vmatpush1.msra.mxu0 0.0
    %4870 = vmatprep.subr.mxu0 0.0
    %4871 = vmatpush1.msra.mxu0 0.0
    %4872 = vmatprep.subr.mxu0 0.0
    %4873 = vmatpush1.msra.mxu0 0.0
    %4874 = vmatprep.subr.mxu0 0.0
    %4875 = vmatpush1.msra.mxu0 0.0
    %4876 = vmatprep.subr.mxu0 0.0
    %4877 = vmatpush1.msra.mxu0 0.0
    %4878 = vmatprep.subr.mxu0 0.0
    %4879 = vmatpush1.msra.mxu0 0.0
    %4880 = vmatprep.subr.mxu0 0.0
    %4881 = vmatpush1.msra.mxu0 0.0
    %4882 = vmatprep.subr.mxu0 0.0
    %4883 = vmatpush1.msra.mxu0 0.0
    %4884 = vmatprep.subr.mxu0 0.0
    %4885 = vmatpush1.msra.mxu0 0.0
    %4886 = vmatprep.subr.mxu0 0.0
    %4887 = vmatpush1.msra.mxu0 0.0
    %4888 = vmatprep.subr.mxu0 0.0
    %4889 = vmatpush1.msra.mxu0 0.0
    %4890 = vmatprep.subr.mxu0 0.0
    %4891 = vmatpush1.msra.mxu0 0.0
    %4892 = vmatprep.subr.mxu0 0.0
    %4893 = vmatpush1.msra.mxu0 0.0
    %4894 = vmatprep.subr.mxu0 0.0
    %4895 = vmatpush1.msra.mxu0 0.0
    %4896 = vmatprep.subr.mxu0 0.0
    %4897 = vmatpush1.msra.mxu0 0.0
    %4898 = vmatprep.subr.mxu0 0.0
    %4899 = vmatpush1.msra.mxu0 0.0
    %4900 = vmatprep.mubr.f32.mxu0 0.0
    %v4901 = vand.u32 %v4495, 4294901760
    %4902 = vmatmul.mubr.f32.gmra.mrb[0].mxu0 %v4901
    %v4903 = vpop.f32.mrb[0].mxu0
    %v4904 = vadd.f32 %v4821, %v4903
    %v4905 = vpop.f32.mrb[0].mxu0
    %4906 = vdwg.mxu0
    %4907 = vmatprep.subr.mxu0 0.0
    %v4908 = vand.u32 %v1218, 4294901760
    %4909 = vmatpush1.msra.mxu0 %v4908
    %4910 = vmatprep.subr.mxu0 0.0
    %v4911 = vand.u32 %v1219, 4294901760
    %4912 = vmatpush1.msra.mxu0 %v4911
    %4913 = vmatprep.subr.mxu0 0.0
    %v4914 = vand.u32 %v1220, 4294901760
    %4915 = vmatpush1.msra.mxu0 %v4914
    %4916 = vmatprep.subr.mxu0 0.0
    %v4917 = vand.u32 %v1221, 4294901760
    %4918 = vmatpush1.msra.mxu0 %v4917
    %4919 = vmatprep.subr.mxu0 0.0
    %4920 = vmatpush1.msra.mxu0 0.0
    %4921 = vmatprep.subr.mxu0 0.0
    %4922 = vmatpush1.msra.mxu0 0.0
    %4923 = vmatprep.subr.mxu0 0.0
    %4924 = vmatpush1.msra.mxu0 0.0
    %4925 = vmatprep.subr.mxu0 0.0
    %4926 = vmatpush1.msra.mxu0 0.0
    %4927 = vmatprep.subr.mxu0 0.0
    %4928 = vmatpush1.msra.mxu0 0.0
    %4929 = vmatprep.subr.mxu0 0.0
    %4930 = vmatpush1.msra.mxu0 0.0
    %4931 = vmatprep.subr.mxu0 0.0
    %4932 = vmatpush1.msra.mxu0 0.0
    %4933 = vmatprep.subr.mxu0 0.0
    %4934 = vmatpush1.msra.mxu0 0.0
    %4935 = vmatprep.subr.mxu0 0.0
    %4936 = vmatpush1.msra.mxu0 0.0
    %4937 = vmatprep.subr.mxu0 0.0
    %4938 = vmatpush1.msra.mxu0 0.0
    %4939 = vmatprep.subr.mxu0 0.0
    %4940 = vmatpush1.msra.mxu0 0.0
    %4941 = vmatprep.subr.mxu0 0.0
    %4942 = vmatpush1.msra.mxu0 0.0
    %4943 = vmatprep.subr.mxu0 0.0
    %4944 = vmatpush1.msra.mxu0 0.0
    %4945 = vmatprep.subr.mxu0 0.0
    %4946 = vmatpush1.msra.mxu0 0.0
    %4947 = vmatprep.subr.mxu0 0.0
    %4948 = vmatpush1.msra.mxu0 0.0
    %4949 = vmatprep.subr.mxu0 0.0
    %4950 = vmatpush1.msra.mxu0 0.0
    %4951 = vmatprep.subr.mxu0 0.0
    %4952 = vmatpush1.msra.mxu0 0.0
    %4953 = vmatprep.subr.mxu0 0.0
    %4954 = vmatpush1.msra.mxu0 0.0
    %4955 = vmatprep.subr.mxu0 0.0
    %4956 = vmatpush1.msra.mxu0 0.0
    %4957 = vmatprep.subr.mxu0 0.0
    %4958 = vmatpush1.msra.mxu0 0.0
    %4959 = vmatprep.subr.mxu0 0.0
    %4960 = vmatpush1.msra.mxu0 0.0
    %4961 = vmatprep.subr.mxu0 0.0
    %4962 = vmatpush1.msra.mxu0 0.0
    %4963 = vmatprep.subr.mxu0 0.0
    %4964 = vmatpush1.msra.mxu0 0.0
    %4965 = vmatprep.subr.mxu0 0.0
    %4966 = vmatpush1.msra.mxu0 0.0
    %4967 = vmatprep.subr.mxu0 0.0
    %4968 = vmatpush1.msra.mxu0 0.0
    %4969 = vmatprep.subr.mxu0 0.0
    %4970 = vmatpush1.msra.mxu0 0.0
    %4971 = vmatprep.subr.mxu0 0.0
    %4972 = vmatpush1.msra.mxu0 0.0
    %4973 = vmatprep.subr.mxu0 0.0
    %4974 = vmatpush1.msra.mxu0 0.0
    %4975 = vmatprep.mubr.f32.mxu0 0.0
    %v4976 = vand.u32 %v4495, 4294901760
    %4977 = vmatmul.mubr.f32.gmra.mrb[0].mxu0 %v4976
    %v4978 = vpop.f32.mrb[0].mxu0
    %v4979 = vadd.f32 %v4904, %v4978
    %v4980 = vpop.f32.mrb[0].mxu0
    %4981 = vdwg.mxu0
    %v4982 = vadd.f32 %v4493, %v4979
    %v4983 = vxor.u32 %v4982, 2147483648
    %v4984 = vmul.f32 %v4983, 1.442695
    %v4985 = vpow.pop %v4984
    %v4986 = vadd.f32 %v4985, 1.0
    %v4987 = vrcp.pop %v4986
    %v4988 = vmul.f32 1.0, %v4987
    %v4989 = vtanh.pop %v4982
    %4991 = vrot.lane.b32.xlu0 %v4491, 32
    %v4992 = vpop.permute.xlu0 %4991
    %v4994 = vmul.f32 %v4988, %v4992
    %4996 = vrot.lane.b32.xlu0 %v4989, 32
    %v4997 = vpop.permute.xlu0 %4996
    %v4999 = vmul.f32 %v4988, %v4997
    %5001 = vrot.lane.b32.xlu0 %v4999, 32
    %v5002 = vpop.permute.xlu0 %5001
    %v5004 = vadd.f32 %v4994, %v5002
    %v5005 = vtanh.pop %v5004
    %5007 = vrot.lane.b32.xlu0 %v5005, 32
    %v5008 = vpop.permute.xlu0 %5007
    %v5010 = vmul.f32 %v4988, %v5008
    %5012 = vrot.lane.b32.xlu0 %v5010, 64
    %v5013 = vpop.permute.xlu0 %5012
    %5015 = vst.msk [vmem:[#allocation2] sm:$0xff] %vm1209, %v5013
    %5017 = vrot.lane.b32.xlu0 %v5004, 96
    %v5018 = vpop.permute.xlu0 %5017
    %5020 = vst.msk [vmem:[#allocation3] sm:$0xff] %vm1209, %v5018
    %v5021 = vld [vmem:[#allocation6] sm:$0xff]
    %s5022 = scalar_lea.vmem [#allocation5], 48
    %v5023 = vld [vmem:[%s5022] sm:$0xff]
    %5025 = vrot.lane.b32.xlu0 %v5023, 64
    %v5026 = vpop.permute.xlu0 %5025
    %v5028 = vsub.f32 %v5010, %v5026
    %5030 = vrot.lane.b32.xlu0 %v5028, 64
    %v5031 = vpop.permute.xlu0 %5030
    %v5033 = vmax.f32 %v5021, %v5031
    %5034 = vst.msk [vmem:[#allocation6] sm:$0xff] %vm1209, %v5033
    %v5035 = vld [vmem:[#allocation2] sm:$0xff]
    %v5036 = vld [vmem:[#allocation3] sm:$0xff]
    %s5037 = scalar_lea.vmem [#allocation4], 56
    %v5038 = vld [vmem:[%s5037] sm:$0xff]
    %v5040 = vsel %vm1209, %v5035, 0
    %5042 = vmatprep.subr.mxu0 0.0
    %v5043 = vand.u32 %v1218, 4294901760
    %5044 = vmatpush1.msra.mxu0 %v5043
    %5045 = vmatprep.subr.mxu0 0.0
    %v5046 = vand.u32 %v1219, 4294901760
    %5047 = vmatpush1.msra.mxu0 %v5046
    %5048 = vmatprep.subr.mxu0 0.0
    %v5049 = vand.u32 %v1220, 4294901760
    %5050 = vmatpush1.msra.mxu0 %v5049
    %5051 = vmatprep.subr.mxu0 0.0
    %v5052 = vand.u32 %v1221, 4294901760
    %5053 = vmatpush1.msra.mxu0 %v5052
    %5054 = vmatprep.subr.mxu0 0.0
    %5055 = vmatpush1.msra.mxu0 0.0
    %5056 = vmatprep.subr.mxu0 0.0
    %5057 = vmatpush1.msra.mxu0 0.0
    %5058 = vmatprep.subr.mxu0 0.0
    %5059 = vmatpush1.msra.mxu0 0.0
    %5060 = vmatprep.subr.mxu0 0.0
    %5061 = vmatpush1.msra.mxu0 0.0
    %5062 = vmatprep.subr.mxu0 0.0
    %5063 = vmatpush1.msra.mxu0 0.0
    %5064 = vmatprep.subr.mxu0 0.0
    %5065 = vmatpush1.msra.mxu0 0.0
    %5066 = vmatprep.subr.mxu0 0.0
    %5067 = vmatpush1.msra.mxu0 0.0
    %5068 = vmatprep.subr.mxu0 0.0
    %5069 = vmatpush1.msra.mxu0 0.0
    %5070 = vmatprep.subr.mxu0 0.0
    %5071 = vmatpush1.msra.mxu0 0.0
    %5072 = vmatprep.subr.mxu0 0.0
    %5073 = vmatpush1.msra.mxu0 0.0
    %5074 = vmatprep.subr.mxu0 0.0
    %5075 = vmatpush1.msra.mxu0 0.0
    %5076 = vmatprep.subr.mxu0 0.0
    %5077 = vmatpush1.msra.mxu0 0.0
    %5078 = vmatprep.subr.mxu0 0.0
    %5079 = vmatpush1.msra.mxu0 0.0
    %5080 = vmatprep.subr.mxu0 0.0
    %5081 = vmatpush1.msra.mxu0 0.0
    %5082 = vmatprep.subr.mxu0 0.0
    %5083 = vmatpush1.msra.mxu0 0.0
    %5084 = vmatprep.subr.mxu0 0.0
    %5085 = vmatpush1.msra.mxu0 0.0
    %5086 = vmatprep.subr.mxu0 0.0
    %5087 = vmatpush1.msra.mxu0 0.0
    %5088 = vmatprep.subr.mxu0 0.0
    %5089 = vmatpush1.msra.mxu0 0.0
    %5090 = vmatprep.subr.mxu0 0.0
    %5091 = vmatpush1.msra.mxu0 0.0
    %5092 = vmatprep.subr.mxu0 0.0
    %5093 = vmatpush1.msra.mxu0 0.0
    %5094 = vmatprep.subr.mxu0 0.0
    %5095 = vmatpush1.msra.mxu0 0.0
    %5096 = vmatprep.subr.mxu0 0.0
    %5097 = vmatpush1.msra.mxu0 0.0
    %5098 = vmatprep.subr.mxu0 0.0
    %5099 = vmatpush1.msra.mxu0 0.0
    %5100 = vmatprep.subr.mxu0 0.0
    %5101 = vmatpush1.msra.mxu0 0.0
    %5102 = vmatprep.subr.mxu0 0.0
    %5103 = vmatpush1.msra.mxu0 0.0
    %5104 = vmatprep.subr.mxu0 0.0
    %5105 = vmatpush1.msra.mxu0 0.0
    %5106 = vmatprep.subr.mxu0 0.0
    %5107 = vmatpush1.msra.mxu0 0.0
    %5108 = vmatprep.subr.mxu0 0.0
    %5109 = vmatpush1.msra.mxu0 0.0
    %5110 = vmatprep.mubr.f32.mxu0 0.0
    %v5111 = vand.u32 %v5040, 4294901760
    %v5112 = vsub.f32 %v5040, %v5111
    %v5113 = vand.u32 %v5112, 4294901760
    %v5114 = vsub.f32 %v5112, %v5113
    %v5115 = vand.u32 %v5114, 4294901760
    %5116 = vmatmul.mubr.f32.gmra.mrb[0].mxu0 %v5115
    %v5117 = vpop.f32.mrb[0].mxu0
    %v5118 = vadd.f32 0.0, %v5117
    %v5119 = vpop.f32.mrb[0].mxu0
    %5120 = vdwg.mxu0
    %5121 = vmatprep.subr.mxu0 0.0
    %v5122 = vand.u32 %v1218, 4294901760
    %v5123 = vsub.f32 %v1218, %v5122
    %v5124 = vand.u32 %v5123, 4294901760
    %v5125 = vsub.f32 %v5123, %v5124
    %v5126 = vand.u32 %v5125, 4294901760
    %5127 = vmatpush1.msra.mxu0 %v5126
    %5128 = vmatprep.subr.mxu0 0.0
    %v5129 = vand.u32 %v1219, 4294901760
    %v5130 = vsub.f32 %v1219, %v5129
    %v5131 = vand.u32 %v5130, 4294901760
    %v5132 = vsub.f32 %v5130, %v5131
    %v5133 = vand.u32 %v5132, 4294901760
    %5134 = vmatpush1.msra.mxu0 %v5133
    %5135 = vmatprep.subr.mxu0 0.0
    %v5136 = vand.u32 %v1220, 4294901760
    %v5137 = vsub.f32 %v1220, %v5136
    %v5138 = vand.u32 %v5137, 4294901760
    %v5139 = vsub.f32 %v5137, %v5138
    %v5140 = vand.u32 %v5139, 4294901760
    %5141 = vmatpush1.msra.mxu0 %v5140
    %5142 = vmatprep.subr.mxu0 0.0
    %v5143 = vand.u32 %v1221, 4294901760
    %v5144 = vsub.f32 %v1221, %v5143
    %v5145 = vand.u32 %v5144, 4294901760
    %v5146 = vsub.f32 %v5144, %v5145
    %v5147 = vand.u32 %v5146, 4294901760
    %5148 = vmatpush1.msra.mxu0 %v5147
    %5149 = vmatprep.subr.mxu0 0.0
    %5150 = vmatpush1.msra.mxu0 0.0
    %5151 = vmatprep.subr.mxu0 0.0
    %5152 = vmatpush1.msra.mxu0 0.0
    %5153 = vmatprep.subr.mxu0 0.0
    %5154 = vmatpush1.msra.mxu0 0.0
    %5155 = vmatprep.subr.mxu0 0.0
    %5156 = vmatpush1.msra.mxu0 0.0
    %5157 = vmatprep.subr.mxu0 0.0
    %5158 = vmatpush1.msra.mxu0 0.0
    %5159 = vmatprep.subr.mxu0 0.0
    %5160 = vmatpush1.msra.mxu0 0.0
    %5161 = vmatprep.subr.mxu0 0.0
    %5162 = vmatpush1.msra.mxu0 0.0
    %5163 = vmatprep.subr.mxu0 0.0
    %5164 = vmatpush1.msra.mxu0 0.0
    %5165 = vmatprep.subr.mxu0 0.0
    %5166 = vmatpush1.msra.mxu0 0.0
    %5167 = vmatprep.subr.mxu0 0.0
    %5168 = vmatpush1.msra.mxu0 0.0
    %5169 = vmatprep.subr.mxu0 0.0
    %5170 = vmatpush1.msra.mxu0 0.0
    %5171 = vmatprep.subr.mxu0 0.0
    %5172 = vmatpush1.msra.mxu0 0.0
    %5173 = vmatprep.subr.mxu0 0.0
    %5174 = vmatpush1.msra.mxu0 0.0
    %5175 = vmatprep.subr.mxu0 0.0
    %5176 = vmatpush1.msra.mxu0 0.0
    %5177 = vmatprep.subr.mxu0 0.0
    %5178 = vmatpush1.msra.mxu0 0.0
    %5179 = vmatprep.subr.mxu0 0.0
    %5180 = vmatpush1.msra.mxu0 0.0
    %5181 = vmatprep.subr.mxu0 0.0
    %5182 = vmatpush1.msra.mxu0 0.0
    %5183 = vmatprep.subr.mxu0 0.0
    %5184 = vmatpush1.msra.mxu0 0.0
    %5185 = vmatprep.subr.mxu0 0.0
    %5186 = vmatpush1.msra.mxu0 0.0
    %5187 = vmatprep.subr.mxu0 0.0
    %5188 = vmatpush1.msra.mxu0 0.0
    %5189 = vmatprep.subr.mxu0 0.0
    %5190 = vmatpush1.msra.mxu0 0.0
    %5191 = vmatprep.subr.mxu0 0.0
    %5192 = vmatpush1.msra.mxu0 0.0
    %5193 = vmatprep.subr.mxu0 0.0
    %5194 = vmatpush1.msra.mxu0 0.0
    %5195 = vmatprep.subr.mxu0 0.0
    %5196 = vmatpush1.msra.mxu0 0.0
    %5197 = vmatprep.subr.mxu0 0.0
    %5198 = vmatpush1.msra.mxu0 0.0
    %5199 = vmatprep.subr.mxu0 0.0
    %5200 = vmatpush1.msra.mxu0 0.0
    %5201 = vmatprep.subr.mxu0 0.0
    %5202 = vmatpush1.msra.mxu0 0.0
    %5203 = vmatprep.subr.mxu0 0.0
    %5204 = vmatpush1.msra.mxu0 0.0
    %5205 = vmatprep.mubr.f32.mxu0 0.0
    %v5206 = vand.u32 %v5040, 4294901760
    %5207 = vmatmul.mubr.f32.gmra.mrb[0].mxu0 %v5206
    %v5208 = vpop.f32.mrb[0].mxu0
    %v5209 = vadd.f32 %v5118, %v5208
    %v5210 = vpop.f32.mrb[0].mxu0
    %5211 = vdwg.mxu0
    %5212 = vmatprep.subr.mxu0 0.0
    %v5213 = vand.u32 %v1218, 4294901760
    %v5214 = vsub.f32 %v1218, %v5213
    %5215 = vmatpush1.msra.mxu0 %v5214
    %5216 = vmatprep.subr.mxu0 0.0
    %v5217 = vand.u32 %v1219, 4294901760
    %v5218 = vsub.f32 %v1219, %v5217
    %5219 = vmatpush1.msra.mxu0 %v5218
    %5220 = vmatprep.subr.mxu0 0.0
    %v5221 = vand.u32 %v1220, 4294901760
    %v5222 = vsub.f32 %v1220, %v5221
    %5223 = vmatpush1.msra.mxu0 %v5222
    %5224 = vmatprep.subr.mxu0 0.0
    %v5225 = vand.u32 %v1221, 4294901760
    %v5226 = vsub.f32 %v1221, %v5225
    %5227 = vmatpush1.msra.mxu0 %v5226
    %5228 = vmatprep.subr.mxu0 0.0
    %5229 = vmatpush1.msra.mxu0 0.0
    %5230 = vmatprep.subr.mxu0 0.0
    %5231 = vmatpush1.msra.mxu0 0.0
    %5232 = vmatprep.subr.mxu0 0.0
    %5233 = vmatpush1.msra.mxu0 0.0
    %5234 = vmatprep.subr.mxu0 0.0
    %5235 = vmatpush1.msra.mxu0 0.0
    %5236 = vmatprep.subr.mxu0 0.0
    %5237 = vmatpush1.msra.mxu0 0.0
    %5238 = vmatprep.subr.mxu0 0.0
    %5239 = vmatpush1.msra.mxu0 0.0
    %5240 = vmatprep.subr.mxu0 0.0
    %5241 = vmatpush1.msra.mxu0 0.0
    %5242 = vmatprep.subr.mxu0 0.0
    %5243 = vmatpush1.msra.mxu0 0.0
    %5244 = vmatprep.subr.mxu0 0.0
    %5245 = vmatpush1.msra.mxu0 0.0
    %5246 = vmatprep.subr.mxu0 0.0
    %5247 = vmatpush1.msra.mxu0 0.0
    %5248 = vmatprep.subr.mxu0 0.0
    %5249 = vmatpush1.msra.mxu0 0.0
    %5250 = vmatprep.subr.mxu0 0.0
    %5251 = vmatpush1.msra.mxu0 0.0
    %5252 = vmatprep.subr.mxu0 0.0
    %5253 = vmatpush1.msra.mxu0 0.0
    %5254 = vmatprep.subr.mxu0 0.0
    %5255 = vmatpush1.msra.mxu0 0.0
    %5256 = vmatprep.subr.mxu0 0.0
    %5257 = vmatpush1.msra.mxu0 0.0
    %5258 = vmatprep.subr.mxu0 0.0
    %5259 = vmatpush1.msra.mxu0 0.0
    %5260 = vmatprep.subr.mxu0 0.0
    %5261 = vmatpush1.msra.mxu0 0.0
    %5262 = vmatprep.subr.mxu0 0.0
    %5263 = vmatpush1.msra.mxu0 0.0
    %5264 = vmatprep.subr.mxu0 0.0
    %5265 = vmatpush1.msra.mxu0 0.0
    %5266 = vmatprep.subr.mxu0 0.0
    %5267 = vmatpush1.msra.mxu0 0.0
    %5268 = vmatprep.subr.mxu0 0.0
    %5269 = vmatpush1.msra.mxu0 0.0
    %5270 = vmatprep.subr.mxu0 0.0
    %5271 = vmatpush1.msra.mxu0 0.0
    %5272 = vmatprep.subr.mxu0 0.0
    %5273 = vmatpush1.msra.mxu0 0.0
    %5274 = vmatprep.subr.mxu0 0.0
    %5275 = vmatpush1.msra.mxu0 0.0
    %5276 = vmatprep.subr.mxu0 0.0
    %5277 = vmatpush1.msra.mxu0 0.0
    %5278 = vmatprep.subr.mxu0 0.0
    %5279 = vmatpush1.msra.mxu0 0.0
    %5280 = vmatprep.subr.mxu0 0.0
    %5281 = vmatpush1.msra.mxu0 0.0
    %5282 = vmatprep.subr.mxu0 0.0
    %5283 = vmatpush1.msra.mxu0 0.0
    %5284 = vmatprep.mubr.f32.mxu0 0.0
    %v5285 = vand.u32 %v5040, 4294901760
    %v5286 = vsub.f32 %v5040, %v5285
    %5287 = vmatmul.mubr.f32.gmra.mrb[0].mxu0 %v5286
    %v5288 = vpop.f32.mrb[0].mxu0
    %v5289 = vadd.f32 %v5209, %v5288
    %v5290 = vpop.f32.mrb[0].mxu0
    %5291 = vdwg.mxu0
    %5292 = vmatprep.subr.mxu0 0.0
    %v5293 = vand.u32 %v1218, 4294901760
    %5294 = vmatpush1.msra.mxu0 %v5293
    %5295 = vmatprep.subr.mxu0 0.0
    %v5296 = vand.u32 %v1219, 4294901760
    %5297 = vmatpush1.msra.mxu0 %v5296
    %5298 = vmatprep.subr.mxu0 0.0
    %v5299 = vand.u32 %v1220, 4294901760
    %5300 = vmatpush1.msra.mxu0 %v5299
    %5301 = vmatprep.subr.mxu0 0.0
    %v5302 = vand.u32 %v1221, 4294901760
    %5303 = vmatpush1.msra.mxu0 %v5302
    %5304 = vmatprep.subr.mxu0 0.0
    %5305 = vmatpush1.msra.mxu0 0.0
    %5306 = vmatprep.subr.mxu0 0.0
    %5307 = vmatpush1.msra.mxu0 0.0
    %5308 = vmatprep.subr.mxu0 0.0
    %5309 = vmatpush1.msra.mxu0 0.0
    %5310 = vmatprep.subr.mxu0 0.0
    %5311 = vmatpush1.msra.mxu0 0.0
    %5312 = vmatprep.subr.mxu0 0.0
    %5313 = vmatpush1.msra.mxu0 0.0
    %5314 = vmatprep.subr.mxu0 0.0
    %5315 = vmatpush1.msra.mxu0 0.0
    %5316 = vmatprep.subr.mxu0 0.0
    %5317 = vmatpush1.msra.mxu0 0.0
    %5318 = vmatprep.subr.mxu0 0.0
    %5319 = vmatpush1.msra.mxu0 0.0
    %5320 = vmatprep.subr.mxu0 0.0
    %5321 = vmatpush1.msra.mxu0 0.0
    %5322 = vmatprep.subr.mxu0 0.0
    %5323 = vmatpush1.msra.mxu0 0.0
    %5324 = vmatprep.subr.mxu0 0.0
    %5325 = vmatpush1.msra.mxu0 0.0
    %5326 = vmatprep.subr.mxu0 0.0
    %5327 = vmatpush1.msra.mxu0 0.0
    %5328 = vmatprep.subr.mxu0 0.0
    %5329 = vmatpush1.msra.mxu0 0.0
    %5330 = vmatprep.subr.mxu0 0.0
    %5331 = vmatpush1.msra.mxu0 0.0
    %5332 = vmatprep.subr.mxu0 0.0
    %5333 = vmatpush1.msra.mxu0 0.0
    %5334 = vmatprep.subr.mxu0 0.0
    %5335 = vmatpush1.msra.mxu0 0.0
    %5336 = vmatprep.subr.mxu0 0.0
    %5337 = vmatpush1.msra.mxu0 0.0
    %5338 = vmatprep.subr.mxu0 0.0
    %5339 = vmatpush1.msra.mxu0 0.0
    %5340 = vmatprep.subr.mxu0 0.0
    %5341 = vmatpush1.msra.mxu0 0.0
    %5342 = vmatprep.subr.mxu0 0.0
    %5343 = vmatpush1.msra.mxu0 0.0
    %5344 = vmatprep.subr.mxu0 0.0
    %5345 = vmatpush1.msra.mxu0 0.0
    %5346 = vmatprep.subr.mxu0 0.0
    %5347 = vmatpush1.msra.mxu0 0.0
    %5348 = vmatprep.subr.mxu0 0.0
    %5349 = vmatpush1.msra.mxu0 0.0
    %5350 = vmatprep.subr.mxu0 0.0
    %5351 = vmatpush1.msra.mxu0 0.0
    %5352 = vmatprep.subr.mxu0 0.0
    %5353 = vmatpush1.msra.mxu0 0.0
    %5354 = vmatprep.subr.mxu0 0.0
    %5355 = vmatpush1.msra.mxu0 0.0
    %5356 = vmatprep.subr.mxu0 0.0
    %5357 = vmatpush1.msra.mxu0 0.0
    %5358 = vmatprep.subr.mxu0 0.0
    %5359 = vmatpush1.msra.mxu0 0.0
    %5360 = vmatprep.mubr.f32.mxu0 0.0
    %v5361 = vand.u32 %v5040, 4294901760
    %v5362 = vsub.f32 %v5040, %v5361
    %v5363 = vand.u32 %v5362, 4294901760
    %5364 = vmatmul.mubr.f32.gmra.mrb[0].mxu0 %v5363
    %v5365 = vpop.f32.mrb[0].mxu0
    %v5366 = vadd.f32 %v5289, %v5365
    %v5367 = vpop.f32.mrb[0].mxu0
    %5368 = vdwg.mxu0
    %5369 = vmatprep.subr.mxu0 0.0
    %v5370 = vand.u32 %v1218, 4294901760
    %v5371 = vsub.f32 %v1218, %v5370
    %v5372 = vand.u32 %v5371, 4294901760
    %5373 = vmatpush1.msra.mxu0 %v5372
    %5374 = vmatprep.subr.mxu0 0.0
    %v5375 = vand.u32 %v1219, 4294901760
    %v5376 = vsub.f32 %v1219, %v5375
    %v5377 = vand.u32 %v5376, 4294901760
    %5378 = vmatpush1.msra.mxu0 %v5377
    %5379 = vmatprep.subr.mxu0 0.0
    %v5380 = vand.u32 %v1220, 4294901760
    %v5381 = vsub.f32 %v1220, %v5380
    %v5382 = vand.u32 %v5381, 4294901760
    %5383 = vmatpush1.msra.mxu0 %v5382
    %5384 = vmatprep.subr.mxu0 0.0
    %v5385 = vand.u32 %v1221, 4294901760
    %v5386 = vsub.f32 %v1221, %v5385
    %v5387 = vand.u32 %v5386, 4294901760
    %5388 = vmatpush1.msra.mxu0 %v5387
    %5389 = vmatprep.subr.mxu0 0.0
    %5390 = vmatpush1.msra.mxu0 0.0
    %5391 = vmatprep.subr.mxu0 0.0
    %5392 = vmatpush1.msra.mxu0 0.0
    %5393 = vmatprep.subr.mxu0 0.0
    %5394 = vmatpush1.msra.mxu0 0.0
    %5395 = vmatprep.subr.mxu0 0.0
    %5396 = vmatpush1.msra.mxu0 0.0
    %5397 = vmatprep.subr.mxu0 0.0
    %5398 = vmatpush1.msra.mxu0 0.0
    %5399 = vmatprep.subr.mxu0 0.0
    %5400 = vmatpush1.msra.mxu0 0.0
    %5401 = vmatprep.subr.mxu0 0.0
    %5402 = vmatpush1.msra.mxu0 0.0
    %5403 = vmatprep.subr.mxu0 0.0
    %5404 = vmatpush1.msra.mxu0 0.0
    %5405 = vmatprep.subr.mxu0 0.0
    %5406 = vmatpush1.msra.mxu0 0.0
    %5407 = vmatprep.subr.mxu0 0.0
    %5408 = vmatpush1.msra.mxu0 0.0
    %5409 = vmatprep.subr.mxu0 0.0
    %5410 = vmatpush1.msra.mxu0 0.0
    %5411 = vmatprep.subr.mxu0 0.0
    %5412 = vmatpush1.msra.mxu0 0.0
    %5413 = vmatprep.subr.mxu0 0.0
    %5414 = vmatpush1.msra.mxu0 0.0
    %5415 = vmatprep.subr.mxu0 0.0
    %5416 = vmatpush1.msra.mxu0 0.0
    %5417 = vmatprep.subr.mxu0 0.0
    %5418 = vmatpush1.msra.mxu0 0.0
    %5419 = vmatprep.subr.mxu0 0.0
    %5420 = vmatpush1.msra.mxu0 0.0
    %5421 = vmatprep.subr.mxu0 0.0
    %5422 = vmatpush1.msra.mxu0 0.0
    %5423 = vmatprep.subr.mxu0 0.0
    %5424 = vmatpush1.msra.mxu0 0.0
    %5425 = vmatprep.subr.mxu0 0.0
    %5426 = vmatpush1.msra.mxu0 0.0
    %5427 = vmatprep.subr.mxu0 0.0
    %5428 = vmatpush1.msra.mxu0 0.0
    %5429 = vmatprep.subr.mxu0 0.0
    %5430 = vmatpush1.msra.mxu0 0.0
    %5431 = vmatprep.subr.mxu0 0.0
    %5432 = vmatpush1.msra.mxu0 0.0
    %5433 = vmatprep.subr.mxu0 0.0
    %5434 = vmatpush1.msra.mxu0 0.0
    %5435 = vmatprep.subr.mxu0 0.0
    %5436 = vmatpush1.msra.mxu0 0.0
    %5437 = vmatprep.subr.mxu0 0.0
    %5438 = vmatpush1.msra.mxu0 0.0
    %5439 = vmatprep.subr.mxu0 0.0
    %5440 = vmatpush1.msra.mxu0 0.0
    %5441 = vmatprep.subr.mxu0 0.0
    %5442 = vmatpush1.msra.mxu0 0.0
    %5443 = vmatprep.subr.mxu0 0.0
    %5444 = vmatpush1.msra.mxu0 0.0
    %5445 = vmatprep.mubr.f32.mxu0 0.0
    %v5446 = vand.u32 %v5040, 4294901760
    %5447 = vmatmul.mubr.f32.gmra.mrb[0].mxu0 %v5446
    %v5448 = vpop.f32.mrb[0].mxu0
    %v5449 = vadd.f32 %v5366, %v5448
    %v5450 = vpop.f32.mrb[0].mxu0
    %5451 = vdwg.mxu0
    %5452 = vmatprep.subr.mxu0 0.0
    %v5453 = vand.u32 %v1218, 4294901760
    %5454 = vmatpush1.msra.mxu0 %v5453
    %5455 = vmatprep.subr.mxu0 0.0
    %v5456 = vand.u32 %v1219, 4294901760
    %5457 = vmatpush1.msra.mxu0 %v5456
    %5458 = vmatprep.subr.mxu0 0.0
    %v5459 = vand.u32 %v1220, 4294901760
    %5460 = vmatpush1.msra.mxu0 %v5459
    %5461 = vmatprep.subr.mxu0 0.0
    %v5462 = vand.u32 %v1221, 4294901760
    %5463 = vmatpush1.msra.mxu0 %v5462
    %5464 = vmatprep.subr.mxu0 0.0
    %5465 = vmatpush1.msra.mxu0 0.0
    %5466 = vmatprep.subr.mxu0 0.0
    %5467 = vmatpush1.msra.mxu0 0.0
    %5468 = vmatprep.subr.mxu0 0.0
    %5469 = vmatpush1.msra.mxu0 0.0
    %5470 = vmatprep.subr.mxu0 0.0
    %5471 = vmatpush1.msra.mxu0 0.0
    %5472 = vmatprep.subr.mxu0 0.0
    %5473 = vmatpush1.msra.mxu0 0.0
    %5474 = vmatprep.subr.mxu0 0.0
    %5475 = vmatpush1.msra.mxu0 0.0
    %5476 = vmatprep.subr.mxu0 0.0
    %5477 = vmatpush1.msra.mxu0 0.0
    %5478 = vmatprep.subr.mxu0 0.0
    %5479 = vmatpush1.msra.mxu0 0.0
    %5480 = vmatprep.subr.mxu0 0.0
    %5481 = vmatpush1.msra.mxu0 0.0
    %5482 = vmatprep.subr.mxu0 0.0
    %5483 = vmatpush1.msra.mxu0 0.0
    %5484 = vmatprep.subr.mxu0 0.0
    %5485 = vmatpush1.msra.mxu0 0.0
    %5486 = vmatprep.subr.mxu0 0.0
    %5487 = vmatpush1.msra.mxu0 0.0
    %5488 = vmatprep.subr.mxu0 0.0
    %5489 = vmatpush1.msra.mxu0 0.0
    %5490 = vmatprep.subr.mxu0 0.0
    %5491 = vmatpush1.msra.mxu0 0.0
    %5492 = vmatprep.subr.mxu0 0.0
    %5493 = vmatpush1.msra.mxu0 0.0
    %5494 = vmatprep.subr.mxu0 0.0
    %5495 = vmatpush1.msra.mxu0 0.0
    %5496 = vmatprep.subr.mxu0 0.0
    %5497 = vmatpush1.msra.mxu0 0.0
    %5498 = vmatprep.subr.mxu0 0.0
    %5499 = vmatpush1.msra.mxu0 0.0
    %5500 = vmatprep.subr.mxu0 0.0
    %5501 = vmatpush1.msra.mxu0 0.0
    %5502 = vmatprep.subr.mxu0 0.0
    %5503 = vmatpush1.msra.mxu0 0.0
    %5504 = vmatprep.subr.mxu0 0.0
    %5505 = vmatpush1.msra.mxu0 0.0
    %5506 = vmatprep.subr.mxu0 0.0
    %5507 = vmatpush1.msra.mxu0 0.0
    %5508 = vmatprep.subr.mxu0 0.0
    %5509 = vmatpush1.msra.mxu0 0.0
    %5510 = vmatprep.subr.mxu0 0.0
    %5511 = vmatpush1.msra.mxu0 0.0
    %5512 = vmatprep.subr.mxu0 0.0
    %5513 = vmatpush1.msra.mxu0 0.0
    %5514 = vmatprep.subr.mxu0 0.0
    %5515 = vmatpush1.msra.mxu0 0.0
    %5516 = vmatprep.subr.mxu0 0.0
    %5517 = vmatpush1.msra.mxu0 0.0
    %5518 = vmatprep.subr.mxu0 0.0
    %5519 = vmatpush1.msra.mxu0 0.0
    %5520 = vmatprep.mubr.f32.mxu0 0.0
    %v5521 = vand.u32 %v5040, 4294901760
    %5522 = vmatmul.mubr.f32.gmra.mrb[0].mxu0 %v5521
    %v5523 = vpop.f32.mrb[0].mxu0
    %v5524 = vadd.f32 %v5449, %v5523
    %v5525 = vpop.f32.mrb[0].mxu0
    %5526 = vdwg.mxu0
    %v5527 = vadd.f32 %v5038, %v5524
    %v5528 = vxor.u32 %v5527, 2147483648
    %v5529 = vmul.f32 %v5528, 1.442695
    %v5530 = vpow.pop %v5529
    %v5531 = vadd.f32 %v5530, 1.0
    %v5532 = vrcp.pop %v5531
    %v5533 = vmul.f32 1.0, %v5532
    %v5534 = vtanh.pop %v5527
    %5536 = vrot.lane.b32.xlu0 %v5036, 32
    %v5537 = vpop.permute.xlu0 %5536
    %v5539 = vmul.f32 %v5533, %v5537
    %5541 = vrot.lane.b32.xlu0 %v5534, 32
    %v5542 = vpop.permute.xlu0 %5541
    %v5544 = vmul.f32 %v5533, %v5542
    %5546 = vrot.lane.b32.xlu0 %v5544, 32
    %v5547 = vpop.permute.xlu0 %5546
    %v5549 = vadd.f32 %v5539, %v5547
    %v5550 = vtanh.pop %v5549
    %5552 = vrot.lane.b32.xlu0 %v5550, 32
    %v5553 = vpop.permute.xlu0 %5552
    %v5555 = vmul.f32 %v5533, %v5553
    %5557 = vrot.lane.b32.xlu0 %v5555, 64
    %v5558 = vpop.permute.xlu0 %5557
    %5560 = vst.msk [vmem:[#allocation2] sm:$0xff] %vm1209, %v5558
    %5562 = vrot.lane.b32.xlu0 %v5549, 96
    %v5563 = vpop.permute.xlu0 %5562
    %5565 = vst.msk [vmem:[#allocation3] sm:$0xff] %vm1209, %v5563
    %v5566 = vld [vmem:[#allocation6] sm:$0xff]
    %s5567 = scalar_lea.vmem [#allocation5], 56
    %v5568 = vld [vmem:[%s5567] sm:$0xff]
    %5570 = vrot.lane.b32.xlu0 %v5568, 64
    %v5571 = vpop.permute.xlu0 %5570
    %v5573 = vsub.f32 %v5555, %v5571
    %5575 = vrot.lane.b32.xlu0 %v5573, 64
    %v5576 = vpop.permute.xlu0 %5575
    %v5578 = vmax.f32 %v5566, %v5576
    %5579 = vst.msk [vmem:[#allocation6] sm:$0xff] %vm1209, %v5578
    // Predicated region
    $region30: #{tpu_custom_call.1} parent=1 // pred_check
      _
    $region31: #{tpu_custom_call.1} parent=1 // pred_check_branch
      %5581 = sbr.rel (0) target = $region33
    $region32: #{tpu_custom_call.1} parent=1 // pred_region
      %s5583 = ssub.s32 128, 128
      %5584 = vsyncadd [#allocation7], %s5583
      %s5586 = sshll.u32 [#allocation6], 4
      %s5587 = int_to_ptr.vmem [resolvable:$true] %s5586
      %5589 = dma.vmem_to_hbm [thread:$0]  %s5587, 128, %s6, [#allocation7]
    $region33: #{tpu_custom_call.1} parent=1 // pred_fallthru
      _
    // Predicated region
    $region34: #{tpu_custom_call.1} parent=1 // pred_check
      _
    $region35: #{tpu_custom_call.1} parent=1 // pred_check_branch
      %5591 = sbr.rel (0) target = $region37
    $region36: #{tpu_custom_call.1} parent=1 // pred_region
      %5592 = dma.done [#allocation7], 128
    $region37: #{tpu_custom_call.1} parent=1 // pred_fallthru
      _
    %5593 = vsyncpa [#allocation7], 1

</llo_original>
